<compile_context>
chip_gen: v6e
topology: v6e:2x2x1
jax: 0.10.0
libtpu: 0.0.40
codegen_flags: <defaults>
</compile_context>

<pallas_src>
import functools

import jax
import jax.numpy as jnp
from jax.experimental import pallas as pl
from jax.experimental.pallas import tpu as pltpu


# ----------------------------------------------------------------------------
# Fused kernel: all LSTM layers + relu + FC head in one invocation.
# ----------------------------------------------------------------------------
def _fused_lstm_kernel(n_layers, T, B_pad, H, unroll, xs_ref, *args):
    # args layout (order handed over by pallas_call):
    #   [wih_0, whh_0, b_0, ..., wih_{L-1}, whh_{L-1}, b_{L-1},   # per-layer weights
    #    h0, c0, fc_w, fc_b,                                      # remaining inputs
    #    out, hN, cN,                                             # outputs
    #    gx_sc]                                                   # VMEM scratch
    layer_refs = [tuple(args[3 * l: 3 * l + 3]) for l in range(n_layers)]
    h0_ref, c0_ref, fcw_ref, fcb_ref = args[3 * n_layers: 3 * n_layers + 4]
    out_ref, hN_ref, cN_ref = args[3 * n_layers + 4: 3 * n_layers + 7]
    gx_sc = args[3 * n_layers + 7]

    # Layer-0 input projection hoisted out of the recurrence: one (T*B_pad, 4H) MXU
    # matmul.  Later layers' projections are produced inside the previous layer's
    # time loop (fused), so this is the only standalone projection.
    wih0_ref, _, b0_ref = layer_refs[0]
    gx_sc[...] = (jnp.dot(xs_ref[...], wih0_ref[...],
                          preferred_element_type=jnp.float32) + b0_ref[...])

    h_last = None
    for l in range(n_layers):
        whh = layer_refs[l][1][...]
        fuse_next = l + 1 < n_layers
        if fuse_next:
            wih_next = layer_refs[l + 1][0][...]
            b_next = layer_refs[l + 1][2][...]
        else:
            wih_next = None
            b_next = None

        def step(t, carry, whh=whh, fuse_next=fuse_next,
                 wih_next=wih_next, b_next=b_next):
            h, c = carry
            row = pl.multiple_of(t * B_pad, B_pad)
            gates = gx_sc[pl.ds(row, B_pad), :] + jnp.dot(
                h, whh, preferred_element_type=jnp.float32)        # (B_pad, 4H)
            # Two full-width (128-lane) EUP passes, then static lane selects.
            sig = jax.nn.sigmoid(gates)
            tnh = jnp.tanh(gates)
            i_g = sig[:, 0 * H:1 * H]
            f_g = sig[:, 1 * H:2 * H]
            g_g = tnh[:, 2 * H:3 * H]
            o_g = sig[:, 3 * H:4 * H]
            c_new = f_g * c + i_g * g_g
            h_new = o_g * jnp.tanh(c_new)
            if fuse_next:
                # Fused next-layer input projection: lane-dense (B_pad, 4H) store back
                # into the same gx row (already consumed above).
                gx_sc[pl.ds(row, B_pad), :] = (
                    jnp.dot(h_new, wih_next,
                            preferred_element_type=jnp.float32) + b_next)
            return (h_new, c_new)

        h_fin, c_fin = jax.lax.fori_loop(0, T, step, (h0_ref[l], c0_ref[l]),
                                         unroll=unroll)
        hN_ref[l] = h_fin
        cN_ref[l] = c_fin
        h_last = h_fin

    # Head: out = relu(h_{T-1} of top layer) @ W_fc^T + b_fc  (lane-dense, 128-wide).
    out_ref[...] = (jnp.dot(jnp.maximum(h_last, 0.0), fcw_ref[...],
                            preferred_element_type=jnp.float32) + fcb_ref[...])


# ----------------------------------------------------------------------------
# Wrapper
# ----------------------------------------------------------------------------
def _round_up(n, m):
    return ((n + m - 1) // m) * m


@functools.partial(jax.jit, static_argnames=("out_dim",))
def lstm_net_forward(x, h, params, *, out_dim):
    """x: (B, T, Din) batch_first; h = (h0, c0), each (n_layers, B, H).
    Returns (out (B, out_dim), (h_n, c_n)) like the PyTorch module (eval mode)."""
    h0_all, c0_all = h
    B, T, Din = x.shape
    n_layers, _, H = h0_all.shape
    out_pad = params["fc_b"].shape[-1]      # lane-padded (multiple of 128) at init
    B_pad = _round_up(B, 8)                 # one full sublane tile

    # (B, T, Din) -> time-major, batch-padded, flattened rows (T*B_pad, Din)
    xs = jnp.transpose(x, (1, 0, 2)).astype(jnp.float32)
    xs = jnp.pad(xs, ((0, 0), (0, B_pad - B), (0, 0))).reshape(T * B_pad, Din)
    h0 = jnp.pad(h0_all.astype(jnp.float32), ((0, 0), (0, B_pad - B), (0, 0)))
    c0 = jnp.pad(c0_all.astype(jnp.float32), ((0, 0), (0, B_pad - B), (0, 0)))

    layer_args = []
    for (wih_t, whh_t, b) in params["lstm"]:
        layer_args += [wih_t, whh_t, b]

    # --- static cost / VMEM accounting -------------------------------------
    f32 = 4
    flops = 2 * B_pad * H * out_pad
    weight_bytes = (H * out_pad + out_pad) * f32
    for l in range(n_layers):
        d_in = Din if l == 0 else H
        flops += 2 * T * B_pad * (d_in + H) * 4 * H
        weight_bytes += (d_in * 4 * H + H * 4 * H + 4 * H) * f32
    in_bytes = (T * B_pad * Din + 2 * n_layers * B_pad * H) * f32 + weight_bytes
    out_bytes = (B_pad * out_pad + 2 * n_layers * B_pad * H) * f32
    scratch_bytes = T * B_pad * 4 * H * f32
    vmem_limit = int(min(100 * 1024 * 1024,
                         2 * (in_bytes + out_bytes + scratch_bytes) + (2 << 20)))

    # Full unroll only for small T; bounded unroll keeps LLO visibility without
    # blowing the 64-vreg budget on the recurrence critical path.
    unroll = T if T <= 16 else 8

    kernel = functools.partial(_fused_lstm_kernel, n_layers, T, B_pad, H, unroll)

    out_p, hN_p, cN_p = pl.pallas_call(
        kernel,
        out_shape=(jax.ShapeDtypeStruct((B_pad, out_pad), jnp.float32),
                   jax.ShapeDtypeStruct((n_layers, B_pad, H), jnp.float32),
                   jax.ShapeDtypeStruct((n_layers, B_pad, H), jnp.float32)),
        scratch_shapes=[
            pltpu.VMEM((T * B_pad, 4 * H), jnp.float32),   # hoisted / fused gate buffer
        ],
        compiler_params=pltpu.CompilerParams(vmem_limit_bytes=vmem_limit),
        cost_estimate=pl.CostEstimate(
            flops=flops,
            transcendentals=n_layers * T * B_pad * 9 * H,
            bytes_accessed=in_bytes + out_bytes),
    )(xs, *layer_args, h0, c0, params["fc_w_t"], params["fc_b"])

    return out_p[:B, :out_dim], (hN_p[:, :B], cN_p[:, :B])


def init_lstm_net_params(key, input_dim, hidden_dim, output_dim, n_layers):
    """PyTorch-style uniform(-1/sqrt(H), 1/sqrt(H)) init.  Weights are stored already
    transposed ((Din,4H)/(H,4H)/(H,out_pad)), the two LSTM biases pre-combined, and the
    FC head zero-padded to a lane-dense (multiple-of-128) output width."""
    k = 1.0 / (hidden_dim ** 0.5)
    out_pad = _round_up(output_dim, 128)
    params = {"lstm": []}
    for layer in range(n_layers):
        d_in = input_dim if layer == 0 else hidden_dim
        key, k1, k2, k3, k4 = jax.random.split(key, 5)
        w_ih = jax.random.uniform(k1, (4 * hidden_dim, d_in), jnp.float32, -k, k)
        w_hh = jax.random.uniform(k2, (4 * hidden_dim, hidden_dim), jnp.float32, -k, k)
        b_ih = jax.random.uniform(k3, (4 * hidden_dim,), jnp.float32, -k, k)
        b_hh = jax.random.uniform(k4, (4 * hidden_dim,), jnp.float32, -k, k)
        params["lstm"].append((jnp.transpose(w_ih),           # (d_in, 4H)
                               jnp.transpose(w_hh),           # (H, 4H)
                               (b_ih + b_hh)[None, :]))       # (1, 4H)
    key, k1, k2 = jax.random.split(key, 3)
    fc_w = jax.random.uniform(k1, (output_dim, hidden_dim), jnp.float32, -k, k)
    fc_b = jax.random.uniform(k2, (output_dim,), jnp.float32, -k, k)
    params["fc_w_t"] = (jnp.zeros((hidden_dim, out_pad), jnp.float32)
                        .at[:, :output_dim].set(jnp.transpose(fc_w)))   # (H, out_pad)
    params["fc_b"] = (jnp.zeros((1, out_pad), jnp.float32)
                      .at[:, :output_dim].set(fc_b))                    # (1, out_pad)
    return params


# ----------------------------------------------------------------------------
if __name__ == "__main__":
    B, T = 2, 8
    INPUT_DIM, HIDDEN_DIM, OUTPUT_DIM, N_LAYERS = 16, 32, 4, 2

    key = jax.random.PRNGKey(0)
    key, kx = jax.random.split(key)
    x = jax.random.normal(kx, (B, T, INPUT_DIM), jnp.float32)

    params = init_lstm_net_params(key, INPUT_DIM, HIDDEN_DIM, OUTPUT_DIM, N_LAYERS)

    # init_hidden: zeros of shape (n_layers, batch, hidden)
    h0 = jnp.zeros((N_LAYERS, B, HIDDEN_DIM), jnp.float32)
    c0 = jnp.zeros((N_LAYERS, B, HIDDEN_DIM), jnp.float32)

    out, (h_n, c_n) = lstm_net_forward(x, (h0, c0), params, out_dim=OUTPUT_DIM)
    jax.block_until_ready((out, h_n, c_n))

    assert out.shape == (B, OUTPUT_DIM)
    assert h_n.shape == (N_LAYERS, B, HIDDEN_DIM)
    assert c_n.shape == (N_LAYERS, B, HIDDEN_DIM)
    assert bool(jnp.all(jnp.isfinite(out)))
    print("KERNEL_OK")
</pallas_src>

<mosaic_0001>
module attributes {stable_mosaic.version = 11 : i64} {
  func.func @_fused_lstm_kernel(%arg0: memref<64x16xf32, #tpu.memory_space<vmem>>, %arg1: memref<16x128xf32, #tpu.memory_space<vmem>>, %arg2: memref<32x128xf32, #tpu.memory_space<vmem>>, %arg3: memref<1x128xf32, #tpu.memory_space<vmem>>, %arg4: memref<32x128xf32, #tpu.memory_space<vmem>>, %arg5: memref<32x128xf32, #tpu.memory_space<vmem>>, %arg6: memref<1x128xf32, #tpu.memory_space<vmem>>, %arg7: memref<2x8x32xf32, #tpu.memory_space<vmem>>, %arg8: memref<2x8x32xf32, #tpu.memory_space<vmem>>, %arg9: memref<32x128xf32, #tpu.memory_space<vmem>>, %arg10: memref<1x128xf32, #tpu.memory_space<vmem>>, %arg11: memref<8x128xf32, #tpu.memory_space<vmem>>, %arg12: memref<2x8x32xf32, #tpu.memory_space<vmem>>, %arg13: memref<2x8x32xf32, #tpu.memory_space<vmem>>, %arg14: memref<64x128xf32, #tpu.memory_space<vmem>>) attributes {dimension_semantics = [], scalar_prefetch = 0 : i64, scratch_operands = 1 : i64, tpu.core_type = #tpu.core_type<tc>} {
    %c0 = arith.constant 0 : index
    %c0_0 = arith.constant 0 : index
    %0 = vector.load %arg0[%c0, %c0_0] : memref<64x16xf32, #tpu.memory_space<vmem>>, vector<64x16xf32>
    %c0_1 = arith.constant 0 : index
    %c0_2 = arith.constant 0 : index
    %1 = vector.load %arg1[%c0_1, %c0_2] : memref<16x128xf32, #tpu.memory_space<vmem>>, vector<16x128xf32>
    %cst = arith.constant dense<0.000000e+00> : vector<64x128xf32>
    %2 = tpu.matmul %0, %1, %cst {dimension_numbers = #tpu.dot_dimension_numbers<[1], [0], [0], [1], [0, 0, 1, 1], [], []>} : vector<64x16xf32>, vector<16x128xf32>, vector<64x128xf32> -> vector<64x128xf32>
    %c0_3 = arith.constant 0 : index
    %c0_4 = arith.constant 0 : index
    %3 = vector.load %arg3[%c0_3, %c0_4] : memref<1x128xf32, #tpu.memory_space<vmem>>, vector<1x128xf32>
    %4 = vector.broadcast %3 : vector<1x128xf32> to vector<64x128xf32>
    %5 = arith.addf %2, %4 : vector<64x128xf32>
    %c0_5 = arith.constant 0 : index
    %c0_6 = arith.constant 0 : index
    %6 = vector.load %arg14[%c0_5, %c0_6] : memref<64x128xf32, #tpu.memory_space<vmem>>, vector<64x128xf32>
    tpu.vector_store %arg14[%c0_5, %c0_6], %5 {strides = array<i32>} : memref<64x128xf32, #tpu.memory_space<vmem>>, vector<64x128xf32>,
    %c0_7 = arith.constant 0 : index
    %c0_8 = arith.constant 0 : index
    %7 = vector.load %arg2[%c0_7, %c0_8] : memref<32x128xf32, #tpu.memory_space<vmem>>, vector<32x128xf32>
    %c0_9 = arith.constant 0 : index
    %c0_10 = arith.constant 0 : index
    %8 = vector.load %arg4[%c0_9, %c0_10] : memref<32x128xf32, #tpu.memory_space<vmem>>, vector<32x128xf32>
    %c0_11 = arith.constant 0 : index
    %c0_12 = arith.constant 0 : index
    %9 = vector.load %arg6[%c0_11, %c0_12] : memref<1x128xf32, #tpu.memory_space<vmem>>, vector<1x128xf32>
    %c0_13 = arith.constant 0 : index
    %c0_14 = arith.constant 0 : index
    %c0_15 = arith.constant 0 : index
    %10 = vector.load %arg7[%c0_13, %c0_14, %c0_15] : memref<2x8x32xf32, #tpu.memory_space<vmem>>, vector<1x8x32xf32>
    %11 = vector.shape_cast %10 : vector<1x8x32xf32> to vector<8x32xf32>
    %c0_16 = arith.constant 0 : index
    %c0_17 = arith.constant 0 : index
    %c0_18 = arith.constant 0 : index
    %12 = vector.load %arg8[%c0_16, %c0_17, %c0_18] : memref<2x8x32xf32, #tpu.memory_space<vmem>>, vector<1x8x32xf32>
    %13 = vector.shape_cast %12 : vector<1x8x32xf32> to vector<8x32xf32>
    %c0_i32 = arith.constant 0 : i32
    %c8_i32 = arith.constant 8 : i32
    %14 = arith.muli %c0_i32, %c8_i32 : i32
    %15 = tpu.assume_multiple %14, 8 : i32
    %16 = arith.index_cast %15 : i32 to index
    %c0_19 = arith.constant 0 : index
    %17 = vector.load %arg14[%16, %c0_19] : memref<64x128xf32, #tpu.memory_space<vmem>>, vector<8x128xf32>
    %cst_20 = arith.constant dense<0.000000e+00> : vector<8x128xf32>
    %18 = tpu.matmul %11, %7, %cst_20 {dimension_numbers = #tpu.dot_dimension_numbers<[1], [0], [0], [1], [0, 0, 1, 1], [], []>} : vector<8x32xf32>, vector<32x128xf32>, vector<8x128xf32> -> vector<8x128xf32>
    %19 = arith.addf %17, %18 : vector<8x128xf32>
    %20 = arith.negf %19 : vector<8x128xf32>
    %21 = math.exp %20 : vector<8x128xf32>
    %cst_21 = arith.constant 1.000000e+00 : f32
    %22 = vector.broadcast %cst_21 : f32 to vector<8x128xf32>
    %23 = arith.addf %22, %21 : vector<8x128xf32>
    %24 = arith.divf %22, %23 : vector<8x128xf32>
    %25 = math.tanh %19 : vector<8x128xf32>
    %26 = vector.extract_strided_slice %24 {offsets = [0, 0], sizes = [8, 32], strides = [1, 1]} : vector<8x128xf32> to vector<8x32xf32>
    %27 = vector.extract_strided_slice %24 {offsets = [0, 32], sizes = [8, 32], strides = [1, 1]} : vector<8x128xf32> to vector<8x32xf32>
    %28 = vector.extract_strided_slice %25 {offsets = [0, 64], sizes = [8, 32], strides = [1, 1]} : vector<8x128xf32> to vector<8x32xf32>
    %29 = vector.extract_strided_slice %24 {offsets = [0, 96], sizes = [8, 32], strides = [1, 1]} : vector<8x128xf32> to vector<8x32xf32>
    %30 = arith.mulf %27, %13 : vector<8x32xf32>
    %31 = arith.mulf %26, %28 : vector<8x32xf32>
    %32 = arith.addf %30, %31 : vector<8x32xf32>
    %33 = math.tanh %32 : vector<8x32xf32>
    %34 = arith.mulf %29, %33 : vector<8x32xf32>
    %cst_22 = arith.constant dense<0.000000e+00> : vector<8x128xf32>
    %35 = tpu.matmul %34, %8, %cst_22 {dimension_numbers = #tpu.dot_dimension_numbers<[1], [0], [0], [1], [0, 0, 1, 1], [], []>} : vector<8x32xf32>, vector<32x128xf32>, vector<8x128xf32> -> vector<8x128xf32>
    %36 = vector.broadcast %9 : vector<1x128xf32> to vector<8x128xf32>
    %37 = arith.addf %35, %36 : vector<8x128xf32>
    %38 = arith.index_cast %15 : i32 to index
    %c0_23 = arith.constant 0 : index
    %39 = vector.load %arg14[%38, %c0_23] : memref<64x128xf32, #tpu.memory_space<vmem>>, vector<8x128xf32>
    tpu.vector_store %arg14[%38, %c0_23], %37 {strides = array<i32>} : memref<64x128xf32, #tpu.memory_space<vmem>>, vector<8x128xf32>,
    %c1_i32 = arith.constant 1 : i32
    %c8_i32_24 = arith.constant 8 : i32
    %40 = arith.muli %c1_i32, %c8_i32_24 : i32
    %41 = tpu.assume_multiple %40, 8 : i32
    %42 = arith.index_cast %41 : i32 to index
    %c0_25 = arith.constant 0 : index
    %43 = vector.load %arg14[%42, %c0_25] : memref<64x128xf32, #tpu.memory_space<vmem>>, vector<8x128xf32>
    %cst_26 = arith.constant dense<0.000000e+00> : vector<8x128xf32>
    %44 = tpu.matmul %34, %7, %cst_26 {dimension_numbers = #tpu.dot_dimension_numbers<[1], [0], [0], [1], [0, 0, 1, 1], [], []>} : vector<8x32xf32>, vector<32x128xf32>, vector<8x128xf32> -> vector<8x128xf32>
    %45 = arith.addf %43, %44 : vector<8x128xf32>
    %46 = arith.negf %45 : vector<8x128xf32>
    %47 = math.exp %46 : vector<8x128xf32>
    %cst_27 = arith.constant 1.000000e+00 : f32
    %48 = vector.broadcast %cst_27 : f32 to vector<8x128xf32>
    %49 = arith.addf %48, %47 : vector<8x128xf32>
    %50 = arith.divf %48, %49 : vector<8x128xf32>
    %51 = math.tanh %45 : vector<8x128xf32>
    %52 = vector.extract_strided_slice %50 {offsets = [0, 0], sizes = [8, 32], strides = [1, 1]} : vector<8x128xf32> to vector<8x32xf32>
    %53 = vector.extract_strided_slice %50 {offsets = [0, 32], sizes = [8, 32], strides = [1, 1]} : vector<8x128xf32> to vector<8x32xf32>
    %54 = vector.extract_strided_slice %51 {offsets = [0, 64], sizes = [8, 32], strides = [1, 1]} : vector<8x128xf32> to vector<8x32xf32>
    %55 = vector.extract_strided_slice %50 {offsets = [0, 96], sizes = [8, 32], strides = [1, 1]} : vector<8x128xf32> to vector<8x32xf32>
    %56 = arith.mulf %53, %32 : vector<8x32xf32>
    %57 = arith.mulf %52, %54 : vector<8x32xf32>
    %58 = arith.addf %56, %57 : vector<8x32xf32>
    %59 = math.tanh %58 : vector<8x32xf32>
    %60 = arith.mulf %55, %59 : vector<8x32xf32>
    %cst_28 = arith.constant dense<0.000000e+00> : vector<8x128xf32>
    %61 = tpu.matmul %60, %8, %cst_28 {dimension_numbers = #tpu.dot_dimension_numbers<[1], [0], [0], [1], [0, 0, 1, 1], [], []>} : vector<8x32xf32>, vector<32x128xf32>, vector<8x128xf32> -> vector<8x128xf32>
    %62 = vector.broadcast %9 : vector<1x128xf32> to vector<8x128xf32>
    %63 = arith.addf %61, %62 : vector<8x128xf32>
    %64 = arith.index_cast %41 : i32 to index
    %c0_29 = arith.constant 0 : index
    %65 = vector.load %arg14[%64, %c0_29] : memref<64x128xf32, #tpu.memory_space<vmem>>, vector<8x128xf32>
    tpu.vector_store %arg14[%64, %c0_29], %63 {strides = array<i32>} : memref<64x128xf32, #tpu.memory_space<vmem>>, vector<8x128xf32>,
    %c2_i32 = arith.constant 2 : i32
    %c8_i32_30 = arith.constant 8 : i32
    %66 = arith.muli %c2_i32, %c8_i32_30 : i32
    %67 = tpu.assume_multiple %66, 8 : i32
    %68 = arith.index_cast %67 : i32 to index
    %c0_31 = arith.constant 0 : index
    %69 = vector.load %arg14[%68, %c0_31] : memref<64x128xf32, #tpu.memory_space<vmem>>, vector<8x128xf32>
    %cst_32 = arith.constant dense<0.000000e+00> : vector<8x128xf32>
    %70 = tpu.matmul %60, %7, %cst_32 {dimension_numbers = #tpu.dot_dimension_numbers<[1], [0], [0], [1], [0, 0, 1, 1], [], []>} : vector<8x32xf32>, vector<32x128xf32>, vector<8x128xf32> -> vector<8x128xf32>
    %71 = arith.addf %69, %70 : vector<8x128xf32>
    %72 = arith.negf %71 : vector<8x128xf32>
    %73 = math.exp %72 : vector<8x128xf32>
    %cst_33 = arith.constant 1.000000e+00 : f32
    %74 = vector.broadcast %cst_33 : f32 to vector<8x128xf32>
    %75 = arith.addf %74, %73 : vector<8x128xf32>
    %76 = arith.divf %74, %75 : vector<8x128xf32>
    %77 = math.tanh %71 : vector<8x128xf32>
    %78 = vector.extract_strided_slice %76 {offsets = [0, 0], sizes = [8, 32], strides = [1, 1]} : vector<8x128xf32> to vector<8x32xf32>
    %79 = vector.extract_strided_slice %76 {offsets = [0, 32], sizes = [8, 32], strides = [1, 1]} : vector<8x128xf32> to vector<8x32xf32>
    %80 = vector.extract_strided_slice %77 {offsets = [0, 64], sizes = [8, 32], strides = [1, 1]} : vector<8x128xf32> to vector<8x32xf32>
    %81 = vector.extract_strided_slice %76 {offsets = [0, 96], sizes = [8, 32], strides = [1, 1]} : vector<8x128xf32> to vector<8x32xf32>
    %82 = arith.mulf %79, %58 : vector<8x32xf32>
    %83 = arith.mulf %78, %80 : vector<8x32xf32>
    %84 = arith.addf %82, %83 : vector<8x32xf32>
    %85 = math.tanh %84 : vector<8x32xf32>
    %86 = arith.mulf %81, %85 : vector<8x32xf32>
    %cst_34 = arith.constant dense<0.000000e+00> : vector<8x128xf32>
    %87 = tpu.matmul %86, %8, %cst_34 {dimension_numbers = #tpu.dot_dimension_numbers<[1], [0], [0], [1], [0, 0, 1, 1], [], []>} : vector<8x32xf32>, vector<32x128xf32>, vector<8x128xf32> -> vector<8x128xf32>
    %88 = vector.broadcast %9 : vector<1x128xf32> to vector<8x128xf32>
    %89 = arith.addf %87, %88 : vector<8x128xf32>
    %90 = arith.index_cast %67 : i32 to index
    %c0_35 = arith.constant 0 : index
    %91 = vector.load %arg14[%90, %c0_35] : memref<64x128xf32, #tpu.memory_space<vmem>>, vector<8x128xf32>
    tpu.vector_store %arg14[%90, %c0_35], %89 {strides = array<i32>} : memref<64x128xf32, #tpu.memory_space<vmem>>, vector<8x128xf32>,
    %c3_i32 = arith.constant 3 : i32
    %c8_i32_36 = arith.constant 8 : i32
    %92 = arith.muli %c3_i32, %c8_i32_36 : i32
    %93 = tpu.assume_multiple %92, 8 : i32
    %94 = arith.index_cast %93 : i32 to index
    %c0_37 = arith.constant 0 : index
    %95 = vector.load %arg14[%94, %c0_37] : memref<64x128xf32, #tpu.memory_space<vmem>>, vector<8x128xf32>
    %cst_38 = arith.constant dense<0.000000e+00> : vector<8x128xf32>
    %96 = tpu.matmul %86, %7, %cst_38 {dimension_numbers = #tpu.dot_dimension_numbers<[1], [0], [0], [1], [0, 0, 1, 1], [], []>} : vector<8x32xf32>, vector<32x128xf32>, vector<8x128xf32> -> vector<8x128xf32>
    %97 = arith.addf %95, %96 : vector<8x128xf32>
    %98 = arith.negf %97 : vector<8x128xf32>
    %99 = math.exp %98 : vector<8x128xf32>
    %cst_39 = arith.constant 1.000000e+00 : f32
    %100 = vector.broadcast %cst_39 : f32 to vector<8x128xf32>
    %101 = arith.addf %100, %99 : vector<8x128xf32>
    %102 = arith.divf %100, %101 : vector<8x128xf32>
    %103 = math.tanh %97 : vector<8x128xf32>
    %104 = vector.extract_strided_slice %102 {offsets = [0, 0], sizes = [8, 32], strides = [1, 1]} : vector<8x128xf32> to vector<8x32xf32>
    %105 = vector.extract_strided_slice %102 {offsets = [0, 32], sizes = [8, 32], strides = [1, 1]} : vector<8x128xf32> to vector<8x32xf32>
    %106 = vector.extract_strided_slice %103 {offsets = [0, 64], sizes = [8, 32], strides = [1, 1]} : vector<8x128xf32> to vector<8x32xf32>
    %107 = vector.extract_strided_slice %102 {offsets = [0, 96], sizes = [8, 32], strides = [1, 1]} : vector<8x128xf32> to vector<8x32xf32>
    %108 = arith.mulf %105, %84 : vector<8x32xf32>
    %109 = arith.mulf %104, %106 : vector<8x32xf32>
    %110 = arith.addf %108, %109 : vector<8x32xf32>
    %111 = math.tanh %110 : vector<8x32xf32>
    %112 = arith.mulf %107, %111 : vector<8x32xf32>
    %cst_40 = arith.constant dense<0.000000e+00> : vector<8x128xf32>
    %113 = tpu.matmul %112, %8, %cst_40 {dimension_numbers = #tpu.dot_dimension_numbers<[1], [0], [0], [1], [0, 0, 1, 1], [], []>} : vector<8x32xf32>, vector<32x128xf32>, vector<8x128xf32> -> vector<8x128xf32>
    %114 = vector.broadcast %9 : vector<1x128xf32> to vector<8x128xf32>
    %115 = arith.addf %113, %114 : vector<8x128xf32>
    %116 = arith.index_cast %93 : i32 to index
    %c0_41 = arith.constant 0 : index
    %117 = vector.load %arg14[%116, %c0_41] : memref<64x128xf32, #tpu.memory_space<vmem>>, vector<8x128xf32>
    tpu.vector_store %arg14[%116, %c0_41], %115 {strides = array<i32>} : memref<64x128xf32, #tpu.memory_space<vmem>>, vector<8x128xf32>,
    %c4_i32 = arith.constant 4 : i32
    %c8_i32_42 = arith.constant 8 : i32
    %118 = arith.muli %c4_i32, %c8_i32_42 : i32
    %119 = tpu.assume_multiple %118, 8 : i32
    %120 = arith.index_cast %119 : i32 to index
    %c0_43 = arith.constant 0 : index
    %121 = vector.load %arg14[%120, %c0_43] : memref<64x128xf32, #tpu.memory_space<vmem>>, vector<8x128xf32>
    %cst_44 = arith.constant dense<0.000000e+00> : vector<8x128xf32>
    %122 = tpu.matmul %112, %7, %cst_44 {dimension_numbers = #tpu.dot_dimension_numbers<[1], [0], [0], [1], [0, 0, 1, 1], [], []>} : vector<8x32xf32>, vector<32x128xf32>, vector<8x128xf32> -> vector<8x128xf32>
    %123 = arith.addf %121, %122 : vector<8x128xf32>
    %124 = arith.negf %123 : vector<8x128xf32>
    %125 = math.exp %124 : vector<8x128xf32>
    %cst_45 = arith.constant 1.000000e+00 : f32
    %126 = vector.broadcast %cst_45 : f32 to vector<8x128xf32>
    %127 = arith.addf %126, %125 : vector<8x128xf32>
    %128 = arith.divf %126, %127 : vector<8x128xf32>
    %129 = math.tanh %123 : vector<8x128xf32>
    %130 = vector.extract_strided_slice %128 {offsets = [0, 0], sizes = [8, 32], strides = [1, 1]} : vector<8x128xf32> to vector<8x32xf32>
    %131 = vector.extract_strided_slice %128 {offsets = [0, 32], sizes = [8, 32], strides = [1, 1]} : vector<8x128xf32> to vector<8x32xf32>
    %132 = vector.extract_strided_slice %129 {offsets = [0, 64], sizes = [8, 32], strides = [1, 1]} : vector<8x128xf32> to vector<8x32xf32>
    %133 = vector.extract_strided_slice %128 {offsets = [0, 96], sizes = [8, 32], strides = [1, 1]} : vector<8x128xf32> to vector<8x32xf32>
    %134 = arith.mulf %131, %110 : vector<8x32xf32>
    %135 = arith.mulf %130, %132 : vector<8x32xf32>
    %136 = arith.addf %134, %135 : vector<8x32xf32>
    %137 = math.tanh %136 : vector<8x32xf32>
    %138 = arith.mulf %133, %137 : vector<8x32xf32>
    %cst_46 = arith.constant dense<0.000000e+00> : vector<8x128xf32>
    %139 = tpu.matmul %138, %8, %cst_46 {dimension_numbers = #tpu.dot_dimension_numbers<[1], [0], [0], [1], [0, 0, 1, 1], [], []>} : vector<8x32xf32>, vector<32x128xf32>, vector<8x128xf32> -> vector<8x128xf32>
    %140 = vector.broadcast %9 : vector<1x128xf32> to vector<8x128xf32>
    %141 = arith.addf %139, %140 : vector<8x128xf32>
    %142 = arith.index_cast %119 : i32 to index
    %c0_47 = arith.constant 0 : index
    %143 = vector.load %arg14[%142, %c0_47] : memref<64x128xf32, #tpu.memory_space<vmem>>, vector<8x128xf32>
    tpu.vector_store %arg14[%142, %c0_47], %141 {strides = array<i32>} : memref<64x128xf32, #tpu.memory_space<vmem>>, vector<8x128xf32>,
    %c5_i32 = arith.constant 5 : i32
    %c8_i32_48 = arith.constant 8 : i32
    %144 = arith.muli %c5_i32, %c8_i32_48 : i32
    %145 = tpu.assume_multiple %144, 8 : i32
    %146 = arith.index_cast %145 : i32 to index
    %c0_49 = arith.constant 0 : index
    %147 = vector.load %arg14[%146, %c0_49] : memref<64x128xf32, #tpu.memory_space<vmem>>, vector<8x128xf32>
    %cst_50 = arith.constant dense<0.000000e+00> : vector<8x128xf32>
    %148 = tpu.matmul %138, %7, %cst_50 {dimension_numbers = #tpu.dot_dimension_numbers<[1], [0], [0], [1], [0, 0, 1, 1], [], []>} : vector<8x32xf32>, vector<32x128xf32>, vector<8x128xf32> -> vector<8x128xf32>
    %149 = arith.addf %147, %148 : vector<8x128xf32>
    %150 = arith.negf %149 : vector<8x128xf32>
    %151 = math.exp %150 : vector<8x128xf32>
    %cst_51 = arith.constant 1.000000e+00 : f32
    %152 = vector.broadcast %cst_51 : f32 to vector<8x128xf32>
    %153 = arith.addf %152, %151 : vector<8x128xf32>
    %154 = arith.divf %152, %153 : vector<8x128xf32>
    %155 = math.tanh %149 : vector<8x128xf32>
    %156 = vector.extract_strided_slice %154 {offsets = [0, 0], sizes = [8, 32], strides = [1, 1]} : vector<8x128xf32> to vector<8x32xf32>
    %157 = vector.extract_strided_slice %154 {offsets = [0, 32], sizes = [8, 32], strides = [1, 1]} : vector<8x128xf32> to vector<8x32xf32>
    %158 = vector.extract_strided_slice %155 {offsets = [0, 64], sizes = [8, 32], strides = [1, 1]} : vector<8x128xf32> to vector<8x32xf32>
    %159 = vector.extract_strided_slice %154 {offsets = [0, 96], sizes = [8, 32], strides = [1, 1]} : vector<8x128xf32> to vector<8x32xf32>
    %160 = arith.mulf %157, %136 : vector<8x32xf32>
    %161 = arith.mulf %156, %158 : vector<8x32xf32>
    %162 = arith.addf %160, %161 : vector<8x32xf32>
    %163 = math.tanh %162 : vector<8x32xf32>
    %164 = arith.mulf %159, %163 : vector<8x32xf32>
    %cst_52 = arith.constant dense<0.000000e+00> : vector<8x128xf32>
    %165 = tpu.matmul %164, %8, %cst_52 {dimension_numbers = #tpu.dot_dimension_numbers<[1], [0], [0], [1], [0, 0, 1, 1], [], []>} : vector<8x32xf32>, vector<32x128xf32>, vector<8x128xf32> -> vector<8x128xf32>
    %166 = vector.broadcast %9 : vector<1x128xf32> to vector<8x128xf32>
    %167 = arith.addf %165, %166 : vector<8x128xf32>
    %168 = arith.index_cast %145 : i32 to index
    %c0_53 = arith.constant 0 : index
    %169 = vector.load %arg14[%168, %c0_53] : memref<64x128xf32, #tpu.memory_space<vmem>>, vector<8x128xf32>
    tpu.vector_store %arg14[%168, %c0_53], %167 {strides = array<i32>} : memref<64x128xf32, #tpu.memory_space<vmem>>, vector<8x128xf32>,
    %c6_i32 = arith.constant 6 : i32
    %c8_i32_54 = arith.constant 8 : i32
    %170 = arith.muli %c6_i32, %c8_i32_54 : i32
    %171 = tpu.assume_multiple %170, 8 : i32
    %172 = arith.index_cast %171 : i32 to index
    %c0_55 = arith.constant 0 : index
    %173 = vector.load %arg14[%172, %c0_55] : memref<64x128xf32, #tpu.memory_space<vmem>>, vector<8x128xf32>
    %cst_56 = arith.constant dense<0.000000e+00> : vector<8x128xf32>
    %174 = tpu.matmul %164, %7, %cst_56 {dimension_numbers = #tpu.dot_dimension_numbers<[1], [0], [0], [1], [0, 0, 1, 1], [], []>} : vector<8x32xf32>, vector<32x128xf32>, vector<8x128xf32> -> vector<8x128xf32>
    %175 = arith.addf %173, %174 : vector<8x128xf32>
    %176 = arith.negf %175 : vector<8x128xf32>
    %177 = math.exp %176 : vector<8x128xf32>
    %cst_57 = arith.constant 1.000000e+00 : f32
    %178 = vector.broadcast %cst_57 : f32 to vector<8x128xf32>
    %179 = arith.addf %178, %177 : vector<8x128xf32>
    %180 = arith.divf %178, %179 : vector<8x128xf32>
    %181 = math.tanh %175 : vector<8x128xf32>
    %182 = vector.extract_strided_slice %180 {offsets = [0, 0], sizes = [8, 32], strides = [1, 1]} : vector<8x128xf32> to vector<8x32xf32>
    %183 = vector.extract_strided_slice %180 {offsets = [0, 32], sizes = [8, 32], strides = [1, 1]} : vector<8x128xf32> to vector<8x32xf32>
    %184 = vector.extract_strided_slice %181 {offsets = [0, 64], sizes = [8, 32], strides = [1, 1]} : vector<8x128xf32> to vector<8x32xf32>
    %185 = vector.extract_strided_slice %180 {offsets = [0, 96], sizes = [8, 32], strides = [1, 1]} : vector<8x128xf32> to vector<8x32xf32>
    %186 = arith.mulf %183, %162 : vector<8x32xf32>
    %187 = arith.mulf %182, %184 : vector<8x32xf32>
    %188 = arith.addf %186, %187 : vector<8x32xf32>
    %189 = math.tanh %188 : vector<8x32xf32>
    %190 = arith.mulf %185, %189 : vector<8x32xf32>
    %cst_58 = arith.constant dense<0.000000e+00> : vector<8x128xf32>
    %191 = tpu.matmul %190, %8, %cst_58 {dimension_numbers = #tpu.dot_dimension_numbers<[1], [0], [0], [1], [0, 0, 1, 1], [], []>} : vector<8x32xf32>, vector<32x128xf32>, vector<8x128xf32> -> vector<8x128xf32>
    %192 = vector.broadcast %9 : vector<1x128xf32> to vector<8x128xf32>
    %193 = arith.addf %191, %192 : vector<8x128xf32>
    %194 = arith.index_cast %171 : i32 to index
    %c0_59 = arith.constant 0 : index
    %195 = vector.load %arg14[%194, %c0_59] : memref<64x128xf32, #tpu.memory_space<vmem>>, vector<8x128xf32>
    tpu.vector_store %arg14[%194, %c0_59], %193 {strides = array<i32>} : memref<64x128xf32, #tpu.memory_space<vmem>>, vector<8x128xf32>,
    %c7_i32 = arith.constant 7 : i32
    %c8_i32_60 = arith.constant 8 : i32
    %196 = arith.muli %c7_i32, %c8_i32_60 : i32
    %197 = tpu.assume_multiple %196, 8 : i32
    %198 = arith.index_cast %197 : i32 to index
    %c0_61 = arith.constant 0 : index
    %199 = vector.load %arg14[%198, %c0_61] : memref<64x128xf32, #tpu.memory_space<vmem>>, vector<8x128xf32>
    %cst_62 = arith.constant dense<0.000000e+00> : vector<8x128xf32>
    %200 = tpu.matmul %190, %7, %cst_62 {dimension_numbers = #tpu.dot_dimension_numbers<[1], [0], [0], [1], [0, 0, 1, 1], [], []>} : vector<8x32xf32>, vector<32x128xf32>, vector<8x128xf32> -> vector<8x128xf32>
    %201 = arith.addf %199, %200 : vector<8x128xf32>
    %202 = arith.negf %201 : vector<8x128xf32>
    %203 = math.exp %202 : vector<8x128xf32>
    %cst_63 = arith.constant 1.000000e+00 : f32
    %204 = vector.broadcast %cst_63 : f32 to vector<8x128xf32>
    %205 = arith.addf %204, %203 : vector<8x128xf32>
    %206 = arith.divf %204, %205 : vector<8x128xf32>
    %207 = math.tanh %201 : vector<8x128xf32>
    %208 = vector.extract_strided_slice %206 {offsets = [0, 0], sizes = [8, 32], strides = [1, 1]} : vector<8x128xf32> to vector<8x32xf32>
    %209 = vector.extract_strided_slice %206 {offsets = [0, 32], sizes = [8, 32], strides = [1, 1]} : vector<8x128xf32> to vector<8x32xf32>
    %210 = vector.extract_strided_slice %207 {offsets = [0, 64], sizes = [8, 32], strides = [1, 1]} : vector<8x128xf32> to vector<8x32xf32>
    %211 = vector.extract_strided_slice %206 {offsets = [0, 96], sizes = [8, 32], strides = [1, 1]} : vector<8x128xf32> to vector<8x32xf32>
    %212 = arith.mulf %209, %188 : vector<8x32xf32>
    %213 = arith.mulf %208, %210 : vector<8x32xf32>
    %214 = arith.addf %212, %213 : vector<8x32xf32>
    %215 = math.tanh %214 : vector<8x32xf32>
    %216 = arith.mulf %211, %215 : vector<8x32xf32>
    %cst_64 = arith.constant dense<0.000000e+00> : vector<8x128xf32>
    %217 = tpu.matmul %216, %8, %cst_64 {dimension_numbers = #tpu.dot_dimension_numbers<[1], [0], [0], [1], [0, 0, 1, 1], [], []>} : vector<8x32xf32>, vector<32x128xf32>, vector<8x128xf32> -> vector<8x128xf32>
    %218 = vector.broadcast %9 : vector<1x128xf32> to vector<8x128xf32>
    %219 = arith.addf %217, %218 : vector<8x128xf32>
    %220 = arith.index_cast %197 : i32 to index
    %c0_65 = arith.constant 0 : index
    %221 = vector.load %arg14[%220, %c0_65] : memref<64x128xf32, #tpu.memory_space<vmem>>, vector<8x128xf32>
    tpu.vector_store %arg14[%220, %c0_65], %219 {strides = array<i32>} : memref<64x128xf32, #tpu.memory_space<vmem>>, vector<8x128xf32>,
    %c8_i32_66 = arith.constant 8 : i32
    %c0_67 = arith.constant 0 : index
    %c0_68 = arith.constant 0 : index
    %c0_69 = arith.constant 0 : index
    %222 = vector.load %arg12[%c0_67, %c0_68, %c0_69] : memref<2x8x32xf32, #tpu.memory_space<vmem>>, vector<1x8x32xf32>
    %223 = vector.shape_cast %222 : vector<1x8x32xf32> to vector<8x32xf32>
    %224 = vector.shape_cast %216 : vector<8x32xf32> to vector<1x8x32xf32>
    tpu.vector_store %arg12[%c0_67, %c0_68, %c0_69], %224 {strides = array<i32>} : memref<2x8x32xf32, #tpu.memory_space<vmem>>, vector<1x8x32xf32>,
    %c0_70 = arith.constant 0 : index
    %c0_71 = arith.constant 0 : index
    %c0_72 = arith.constant 0 : index
    %225 = vector.load %arg13[%c0_70, %c0_71, %c0_72] : memref<2x8x32xf32, #tpu.memory_space<vmem>>, vector<1x8x32xf32>
    %226 = vector.shape_cast %225 : vector<1x8x32xf32> to vector<8x32xf32>
    %227 = vector.shape_cast %214 : vector<8x32xf32> to vector<1x8x32xf32>
    tpu.vector_store %arg13[%c0_70, %c0_71, %c0_72], %227 {strides = array<i32>} : memref<2x8x32xf32, #tpu.memory_space<vmem>>, vector<1x8x32xf32>,
    %c0_73 = arith.constant 0 : index
    %c0_74 = arith.constant 0 : index
    %228 = vector.load %arg5[%c0_73, %c0_74] : memref<32x128xf32, #tpu.memory_space<vmem>>, vector<32x128xf32>
    %c1 = arith.constant 1 : index
    %c0_75 = arith.constant 0 : index
    %c0_76 = arith.constant 0 : index
    %229 = vector.load %arg7[%c1, %c0_75, %c0_76] : memref<2x8x32xf32, #tpu.memory_space<vmem>>, vector<1x8x32xf32>
    %230 = vector.shape_cast %229 : vector<1x8x32xf32> to vector<8x32xf32>
    %c1_77 = arith.constant 1 : index
    %c0_78 = arith.constant 0 : index
    %c0_79 = arith.constant 0 : index
    %231 = vector.load %arg8[%c1_77, %c0_78, %c0_79] : memref<2x8x32xf32, #tpu.memory_space<vmem>>, vector<1x8x32xf32>
    %232 = vector.shape_cast %231 : vector<1x8x32xf32> to vector<8x32xf32>
    %c0_i32_80 = arith.constant 0 : i32
    %c8_i32_81 = arith.constant 8 : i32
    %233 = arith.muli %c0_i32_80, %c8_i32_81 : i32
    %234 = tpu.assume_multiple %233, 8 : i32
    %235 = arith.index_cast %234 : i32 to index
    %c0_82 = arith.constant 0 : index
    %236 = vector.load %arg14[%235, %c0_82] : memref<64x128xf32, #tpu.memory_space<vmem>>, vector<8x128xf32>
    %cst_83 = arith.constant dense<0.000000e+00> : vector<8x128xf32>
    %237 = tpu.matmul %230, %228, %cst_83 {dimension_numbers = #tpu.dot_dimension_numbers<[1], [0], [0], [1], [0, 0, 1, 1], [], []>} : vector<8x32xf32>, vector<32x128xf32>, vector<8x128xf32> -> vector<8x128xf32>
    %238 = arith.addf %236, %237 : vector<8x128xf32>
    %239 = arith.negf %238 : vector<8x128xf32>
    %240 = math.exp %239 : vector<8x128xf32>
    %cst_84 = arith.constant 1.000000e+00 : f32
    %241 = vector.broadcast %cst_84 : f32 to vector<8x128xf32>
    %242 = arith.addf %241, %240 : vector<8x128xf32>
    %243 = arith.divf %241, %242 : vector<8x128xf32>
    %244 = math.tanh %238 : vector<8x128xf32>
    %245 = vector.extract_strided_slice %243 {offsets = [0, 0], sizes = [8, 32], strides = [1, 1]} : vector<8x128xf32> to vector<8x32xf32>
    %246 = vector.extract_strided_slice %243 {offsets = [0, 32], sizes = [8, 32], strides = [1, 1]} : vector<8x128xf32> to vector<8x32xf32>
    %247 = vector.extract_strided_slice %244 {offsets = [0, 64], sizes = [8, 32], strides = [1, 1]} : vector<8x128xf32> to vector<8x32xf32>
    %248 = vector.extract_strided_slice %243 {offsets = [0, 96], sizes = [8, 32], strides = [1, 1]} : vector<8x128xf32> to vector<8x32xf32>
    %249 = arith.mulf %246, %232 : vector<8x32xf32>
    %250 = arith.mulf %245, %247 : vector<8x32xf32>
    %251 = arith.addf %249, %250 : vector<8x32xf32>
    %252 = math.tanh %251 : vector<8x32xf32>
    %253 = arith.mulf %248, %252 : vector<8x32xf32>
    %c1_i32_85 = arith.constant 1 : i32
    %c8_i32_86 = arith.constant 8 : i32
    %254 = arith.muli %c1_i32_85, %c8_i32_86 : i32
    %255 = tpu.assume_multiple %254, 8 : i32
    %256 = arith.index_cast %255 : i32 to index
    %c0_87 = arith.constant 0 : index
    %257 = vector.load %arg14[%256, %c0_87] : memref<64x128xf32, #tpu.memory_space<vmem>>, vector<8x128xf32>
    %cst_88 = arith.constant dense<0.000000e+00> : vector<8x128xf32>
    %258 = tpu.matmul %253, %228, %cst_88 {dimension_numbers = #tpu.dot_dimension_numbers<[1], [0], [0], [1], [0, 0, 1, 1], [], []>} : vector<8x32xf32>, vector<32x128xf32>, vector<8x128xf32> -> vector<8x128xf32>
    %259 = arith.addf %257, %258 : vector<8x128xf32>
    %260 = arith.negf %259 : vector<8x128xf32>
    %261 = math.exp %260 : vector<8x128xf32>
    %cst_89 = arith.constant 1.000000e+00 : f32
    %262 = vector.broadcast %cst_89 : f32 to vector<8x128xf32>
    %263 = arith.addf %262, %261 : vector<8x128xf32>
    %264 = arith.divf %262, %263 : vector<8x128xf32>
    %265 = math.tanh %259 : vector<8x128xf32>
    %266 = vector.extract_strided_slice %264 {offsets = [0, 0], sizes = [8, 32], strides = [1, 1]} : vector<8x128xf32> to vector<8x32xf32>
    %267 = vector.extract_strided_slice %264 {offsets = [0, 32], sizes = [8, 32], strides = [1, 1]} : vector<8x128xf32> to vector<8x32xf32>
    %268 = vector.extract_strided_slice %265 {offsets = [0, 64], sizes = [8, 32], strides = [1, 1]} : vector<8x128xf32> to vector<8x32xf32>
    %269 = vector.extract_strided_slice %264 {offsets = [0, 96], sizes = [8, 32], strides = [1, 1]} : vector<8x128xf32> to vector<8x32xf32>
    %270 = arith.mulf %267, %251 : vector<8x32xf32>
    %271 = arith.mulf %266, %268 : vector<8x32xf32>
    %272 = arith.addf %270, %271 : vector<8x32xf32>
    %273 = math.tanh %272 : vector<8x32xf32>
    %274 = arith.mulf %269, %273 : vector<8x32xf32>
    %c2_i32_90 = arith.constant 2 : i32
    %c8_i32_91 = arith.constant 8 : i32
    %275 = arith.muli %c2_i32_90, %c8_i32_91 : i32
    %276 = tpu.assume_multiple %275, 8 : i32
    %277 = arith.index_cast %276 : i32 to index
    %c0_92 = arith.constant 0 : index
    %278 = vector.load %arg14[%277, %c0_92] : memref<64x128xf32, #tpu.memory_space<vmem>>, vector<8x128xf32>
    %cst_93 = arith.constant dense<0.000000e+00> : vector<8x128xf32>
    %279 = tpu.matmul %274, %228, %cst_93 {dimension_numbers = #tpu.dot_dimension_numbers<[1], [0], [0], [1], [0, 0, 1, 1], [], []>} : vector<8x32xf32>, vector<32x128xf32>, vector<8x128xf32> -> vector<8x128xf32>
    %280 = arith.addf %278, %279 : vector<8x128xf32>
    %281 = arith.negf %280 : vector<8x128xf32>
    %282 = math.exp %281 : vector<8x128xf32>
    %cst_94 = arith.constant 1.000000e+00 : f32
    %283 = vector.broadcast %cst_94 : f32 to vector<8x128xf32>
    %284 = arith.addf %283, %282 : vector<8x128xf32>
    %285 = arith.divf %283, %284 : vector<8x128xf32>
    %286 = math.tanh %280 : vector<8x128xf32>
    %287 = vector.extract_strided_slice %285 {offsets = [0, 0], sizes = [8, 32], strides = [1, 1]} : vector<8x128xf32> to vector<8x32xf32>
    %288 = vector.extract_strided_slice %285 {offsets = [0, 32], sizes = [8, 32], strides = [1, 1]} : vector<8x128xf32> to vector<8x32xf32>
    %289 = vector.extract_strided_slice %286 {offsets = [0, 64], sizes = [8, 32], strides = [1, 1]} : vector<8x128xf32> to vector<8x32xf32>
    %290 = vector.extract_strided_slice %285 {offsets = [0, 96], sizes = [8, 32], strides = [1, 1]} : vector<8x128xf32> to vector<8x32xf32>
    %291 = arith.mulf %288, %272 : vector<8x32xf32>
    %292 = arith.mulf %287, %289 : vector<8x32xf32>
    %293 = arith.addf %291, %292 : vector<8x32xf32>
    %294 = math.tanh %293 : vector<8x32xf32>
    %295 = arith.mulf %290, %294 : vector<8x32xf32>
    %c3_i32_95 = arith.constant 3 : i32
    %c8_i32_96 = arith.constant 8 : i32
    %296 = arith.muli %c3_i32_95, %c8_i32_96 : i32
    %297 = tpu.assume_multiple %296, 8 : i32
    %298 = arith.index_cast %297 : i32 to index
    %c0_97 = arith.constant 0 : index
    %299 = vector.load %arg14[%298, %c0_97] : memref<64x128xf32, #tpu.memory_space<vmem>>, vector<8x128xf32>
    %cst_98 = arith.constant dense<0.000000e+00> : vector<8x128xf32>
    %300 = tpu.matmul %295, %228, %cst_98 {dimension_numbers = #tpu.dot_dimension_numbers<[1], [0], [0], [1], [0, 0, 1, 1], [], []>} : vector<8x32xf32>, vector<32x128xf32>, vector<8x128xf32> -> vector<8x128xf32>
    %301 = arith.addf %299, %300 : vector<8x128xf32>
    %302 = arith.negf %301 : vector<8x128xf32>
    %303 = math.exp %302 : vector<8x128xf32>
    %cst_99 = arith.constant 1.000000e+00 : f32
    %304 = vector.broadcast %cst_99 : f32 to vector<8x128xf32>
    %305 = arith.addf %304, %303 : vector<8x128xf32>
    %306 = arith.divf %304, %305 : vector<8x128xf32>
    %307 = math.tanh %301 : vector<8x128xf32>
    %308 = vector.extract_strided_slice %306 {offsets = [0, 0], sizes = [8, 32], strides = [1, 1]} : vector<8x128xf32> to vector<8x32xf32>
    %309 = vector.extract_strided_slice %306 {offsets = [0, 32], sizes = [8, 32], strides = [1, 1]} : vector<8x128xf32> to vector<8x32xf32>
    %310 = vector.extract_strided_slice %307 {offsets = [0, 64], sizes = [8, 32], strides = [1, 1]} : vector<8x128xf32> to vector<8x32xf32>
    %311 = vector.extract_strided_slice %306 {offsets = [0, 96], sizes = [8, 32], strides = [1, 1]} : vector<8x128xf32> to vector<8x32xf32>
    %312 = arith.mulf %309, %293 : vector<8x32xf32>
    %313 = arith.mulf %308, %310 : vector<8x32xf32>
    %314 = arith.addf %312, %313 : vector<8x32xf32>
    %315 = math.tanh %314 : vector<8x32xf32>
    %316 = arith.mulf %311, %315 : vector<8x32xf32>
    %c4_i32_100 = arith.constant 4 : i32
    %c8_i32_101 = arith.constant 8 : i32
    %317 = arith.muli %c4_i32_100, %c8_i32_101 : i32
    %318 = tpu.assume_multiple %317, 8 : i32
    %319 = arith.index_cast %318 : i32 to index
    %c0_102 = arith.constant 0 : index
    %320 = vector.load %arg14[%319, %c0_102] : memref<64x128xf32, #tpu.memory_space<vmem>>, vector<8x128xf32>
    %cst_103 = arith.constant dense<0.000000e+00> : vector<8x128xf32>
    %321 = tpu.matmul %316, %228, %cst_103 {dimension_numbers = #tpu.dot_dimension_numbers<[1], [0], [0], [1], [0, 0, 1, 1], [], []>} : vector<8x32xf32>, vector<32x128xf32>, vector<8x128xf32> -> vector<8x128xf32>
    %322 = arith.addf %320, %321 : vector<8x128xf32>
    %323 = arith.negf %322 : vector<8x128xf32>
    %324 = math.exp %323 : vector<8x128xf32>
    %cst_104 = arith.constant 1.000000e+00 : f32
    %325 = vector.broadcast %cst_104 : f32 to vector<8x128xf32>
    %326 = arith.addf %325, %324 : vector<8x128xf32>
    %327 = arith.divf %325, %326 : vector<8x128xf32>
    %328 = math.tanh %322 : vector<8x128xf32>
    %329 = vector.extract_strided_slice %327 {offsets = [0, 0], sizes = [8, 32], strides = [1, 1]} : vector<8x128xf32> to vector<8x32xf32>
    %330 = vector.extract_strided_slice %327 {offsets = [0, 32], sizes = [8, 32], strides = [1, 1]} : vector<8x128xf32> to vector<8x32xf32>
    %331 = vector.extract_strided_slice %328 {offsets = [0, 64], sizes = [8, 32], strides = [1, 1]} : vector<8x128xf32> to vector<8x32xf32>
    %332 = vector.extract_strided_slice %327 {offsets = [0, 96], sizes = [8, 32], strides = [1, 1]} : vector<8x128xf32> to vector<8x32xf32>
    %333 = arith.mulf %330, %314 : vector<8x32xf32>
    %334 = arith.mulf %329, %331 : vector<8x32xf32>
    %335 = arith.addf %333, %334 : vector<8x32xf32>
    %336 = math.tanh %335 : vector<8x32xf32>
    %337 = arith.mulf %332, %336 : vector<8x32xf32>
    %c5_i32_105 = arith.constant 5 : i32
    %c8_i32_106 = arith.constant 8 : i32
    %338 = arith.muli %c5_i32_105, %c8_i32_106 : i32
    %339 = tpu.assume_multiple %338, 8 : i32
    %340 = arith.index_cast %339 : i32 to index
    %c0_107 = arith.constant 0 : index
    %341 = vector.load %arg14[%340, %c0_107] : memref<64x128xf32, #tpu.memory_space<vmem>>, vector<8x128xf32>
    %cst_108 = arith.constant dense<0.000000e+00> : vector<8x128xf32>
    %342 = tpu.matmul %337, %228, %cst_108 {dimension_numbers = #tpu.dot_dimension_numbers<[1], [0], [0], [1], [0, 0, 1, 1], [], []>} : vector<8x32xf32>, vector<32x128xf32>, vector<8x128xf32> -> vector<8x128xf32>
    %343 = arith.addf %341, %342 : vector<8x128xf32>
    %344 = arith.negf %343 : vector<8x128xf32>
    %345 = math.exp %344 : vector<8x128xf32>
    %cst_109 = arith.constant 1.000000e+00 : f32
    %346 = vector.broadcast %cst_109 : f32 to vector<8x128xf32>
    %347 = arith.addf %346, %345 : vector<8x128xf32>
    %348 = arith.divf %346, %347 : vector<8x128xf32>
    %349 = math.tanh %343 : vector<8x128xf32>
    %350 = vector.extract_strided_slice %348 {offsets = [0, 0], sizes = [8, 32], strides = [1, 1]} : vector<8x128xf32> to vector<8x32xf32>
    %351 = vector.extract_strided_slice %348 {offsets = [0, 32], sizes = [8, 32], strides = [1, 1]} : vector<8x128xf32> to vector<8x32xf32>
    %352 = vector.extract_strided_slice %349 {offsets = [0, 64], sizes = [8, 32], strides = [1, 1]} : vector<8x128xf32> to vector<8x32xf32>
    %353 = vector.extract_strided_slice %348 {offsets = [0, 96], sizes = [8, 32], strides = [1, 1]} : vector<8x128xf32> to vector<8x32xf32>
    %354 = arith.mulf %351, %335 : vector<8x32xf32>
    %355 = arith.mulf %350, %352 : vector<8x32xf32>
    %356 = arith.addf %354, %355 : vector<8x32xf32>
    %357 = math.tanh %356 : vector<8x32xf32>
    %358 = arith.mulf %353, %357 : vector<8x32xf32>
    %c6_i32_110 = arith.constant 6 : i32
    %c8_i32_111 = arith.constant 8 : i32
    %359 = arith.muli %c6_i32_110, %c8_i32_111 : i32
    %360 = tpu.assume_multiple %359, 8 : i32
    %361 = arith.index_cast %360 : i32 to index
    %c0_112 = arith.constant 0 : index
    %362 = vector.load %arg14[%361, %c0_112] : memref<64x128xf32, #tpu.memory_space<vmem>>, vector<8x128xf32>
    %cst_113 = arith.constant dense<0.000000e+00> : vector<8x128xf32>
    %363 = tpu.matmul %358, %228, %cst_113 {dimension_numbers = #tpu.dot_dimension_numbers<[1], [0], [0], [1], [0, 0, 1, 1], [], []>} : vector<8x32xf32>, vector<32x128xf32>, vector<8x128xf32> -> vector<8x128xf32>
    %364 = arith.addf %362, %363 : vector<8x128xf32>
    %365 = arith.negf %364 : vector<8x128xf32>
    %366 = math.exp %365 : vector<8x128xf32>
    %cst_114 = arith.constant 1.000000e+00 : f32
    %367 = vector.broadcast %cst_114 : f32 to vector<8x128xf32>
    %368 = arith.addf %367, %366 : vector<8x128xf32>
    %369 = arith.divf %367, %368 : vector<8x128xf32>
    %370 = math.tanh %364 : vector<8x128xf32>
    %371 = vector.extract_strided_slice %369 {offsets = [0, 0], sizes = [8, 32], strides = [1, 1]} : vector<8x128xf32> to vector<8x32xf32>
    %372 = vector.extract_strided_slice %369 {offsets = [0, 32], sizes = [8, 32], strides = [1, 1]} : vector<8x128xf32> to vector<8x32xf32>
    %373 = vector.extract_strided_slice %370 {offsets = [0, 64], sizes = [8, 32], strides = [1, 1]} : vector<8x128xf32> to vector<8x32xf32>
    %374 = vector.extract_strided_slice %369 {offsets = [0, 96], sizes = [8, 32], strides = [1, 1]} : vector<8x128xf32> to vector<8x32xf32>
    %375 = arith.mulf %372, %356 : vector<8x32xf32>
    %376 = arith.mulf %371, %373 : vector<8x32xf32>
    %377 = arith.addf %375, %376 : vector<8x32xf32>
    %378 = math.tanh %377 : vector<8x32xf32>
    %379 = arith.mulf %374, %378 : vector<8x32xf32>
    %c7_i32_115 = arith.constant 7 : i32
    %c8_i32_116 = arith.constant 8 : i32
    %380 = arith.muli %c7_i32_115, %c8_i32_116 : i32
    %381 = tpu.assume_multiple %380, 8 : i32
    %382 = arith.index_cast %381 : i32 to index
    %c0_117 = arith.constant 0 : index
    %383 = vector.load %arg14[%382, %c0_117] : memref<64x128xf32, #tpu.memory_space<vmem>>, vector<8x128xf32>
    %cst_118 = arith.constant dense<0.000000e+00> : vector<8x128xf32>
    %384 = tpu.matmul %379, %228, %cst_118 {dimension_numbers = #tpu.dot_dimension_numbers<[1], [0], [0], [1], [0, 0, 1, 1], [], []>} : vector<8x32xf32>, vector<32x128xf32>, vector<8x128xf32> -> vector<8x128xf32>
    %385 = arith.addf %383, %384 : vector<8x128xf32>
    %386 = arith.negf %385 : vector<8x128xf32>
    %387 = math.exp %386 : vector<8x128xf32>
    %cst_119 = arith.constant 1.000000e+00 : f32
    %388 = vector.broadcast %cst_119 : f32 to vector<8x128xf32>
    %389 = arith.addf %388, %387 : vector<8x128xf32>
    %390 = arith.divf %388, %389 : vector<8x128xf32>
    %391 = math.tanh %385 : vector<8x128xf32>
    %392 = vector.extract_strided_slice %390 {offsets = [0, 0], sizes = [8, 32], strides = [1, 1]} : vector<8x128xf32> to vector<8x32xf32>
    %393 = vector.extract_strided_slice %390 {offsets = [0, 32], sizes = [8, 32], strides = [1, 1]} : vector<8x128xf32> to vector<8x32xf32>
    %394 = vector.extract_strided_slice %391 {offsets = [0, 64], sizes = [8, 32], strides = [1, 1]} : vector<8x128xf32> to vector<8x32xf32>
    %395 = vector.extract_strided_slice %390 {offsets = [0, 96], sizes = [8, 32], strides = [1, 1]} : vector<8x128xf32> to vector<8x32xf32>
    %396 = arith.mulf %393, %377 : vector<8x32xf32>
    %397 = arith.mulf %392, %394 : vector<8x32xf32>
    %398 = arith.addf %396, %397 : vector<8x32xf32>
    %399 = math.tanh %398 : vector<8x32xf32>
    %400 = arith.mulf %395, %399 : vector<8x32xf32>
    %c8_i32_120 = arith.constant 8 : i32
    %c1_121 = arith.constant 1 : index
    %c0_122 = arith.constant 0 : index
    %c0_123 = arith.constant 0 : index
    %401 = vector.load %arg12[%c1_121, %c0_122, %c0_123] : memref<2x8x32xf32, #tpu.memory_space<vmem>>, vector<1x8x32xf32>
    %402 = vector.shape_cast %401 : vector<1x8x32xf32> to vector<8x32xf32>
    %403 = vector.shape_cast %400 : vector<8x32xf32> to vector<1x8x32xf32>
    tpu.vector_store %arg12[%c1_121, %c0_122, %c0_123], %403 {strides = array<i32>} : memref<2x8x32xf32, #tpu.memory_space<vmem>>, vector<1x8x32xf32>,
    %c1_124 = arith.constant 1 : index
    %c0_125 = arith.constant 0 : index
    %c0_126 = arith.constant 0 : index
    %404 = vector.load %arg13[%c1_124, %c0_125, %c0_126] : memref<2x8x32xf32, #tpu.memory_space<vmem>>, vector<1x8x32xf32>
    %405 = vector.shape_cast %404 : vector<1x8x32xf32> to vector<8x32xf32>
    %406 = vector.shape_cast %398 : vector<8x32xf32> to vector<1x8x32xf32>
    tpu.vector_store %arg13[%c1_124, %c0_125, %c0_126], %406 {strides = array<i32>} : memref<2x8x32xf32, #tpu.memory_space<vmem>>, vector<1x8x32xf32>,
    %cst_127 = arith.constant 0.000000e+00 : f32
    %407 = vector.broadcast %cst_127 : f32 to vector<8x32xf32>
    %408 = arith.maximumf %400, %407 : vector<8x32xf32>
    %c0_128 = arith.constant 0 : index
    %c0_129 = arith.constant 0 : index
    %409 = vector.load %arg9[%c0_128, %c0_129] : memref<32x128xf32, #tpu.memory_space<vmem>>, vector<32x128xf32>
    %cst_130 = arith.constant dense<0.000000e+00> : vector<8x128xf32>
    %410 = tpu.matmul %408, %409, %cst_130 {dimension_numbers = #tpu.dot_dimension_numbers<[1], [0], [0], [1], [0, 0, 1, 1], [], []>} : vector<8x32xf32>, vector<32x128xf32>, vector<8x128xf32> -> vector<8x128xf32>
    %c0_131 = arith.constant 0 : index
    %c0_132 = arith.constant 0 : index
    %411 = vector.load %arg10[%c0_131, %c0_132] : memref<1x128xf32, #tpu.memory_space<vmem>>, vector<1x128xf32>
    %412 = vector.broadcast %411 : vector<1x128xf32> to vector<8x128xf32>
    %413 = arith.addf %410, %412 : vector<8x128xf32>
    %c0_133 = arith.constant 0 : index
    %c0_134 = arith.constant 0 : index
    %414 = vector.load %arg11[%c0_133, %c0_134] : memref<8x128xf32, #tpu.memory_space<vmem>>, vector<8x128xf32>
    tpu.vector_store %arg11[%c0_133, %c0_134], %413 {strides = array<i32>} : memref<8x128xf32, #tpu.memory_space<vmem>>, vector<8x128xf32>,
    return
  }
}

</mosaic_0001>

<llo_original>
// kernel: lstm_net_forward.1
$region0: #{lstm_net_forward.1}
  #allocation0 [shape = 'u32[]', space=smem, size = 0x4, offset = 0x4, fixed_abs, tag = 'smem constant byte address 0x4 - core index']
  #allocation1 [shape = 'u32[144,128]{1,0:T(1,128)}', space=vmem, size = 0x12000, scoped, tag = 'internal scratch']
  #allocation2 [shape = 'f32[64,128]{1,0:T(8,128)}', space=vmem, size = 0x8000, scoped, tag = 'scratch operand']
  %s0 = inlined_call_operand.vmem [shape: f32[64,16], index: 0, kind: input, shape index: {}]
  %s1 = inlined_call_operand.vmem [shape: f32[16,128], index: 1, kind: input, shape index: {}]
  %s2 = inlined_call_operand.vmem [shape: f32[32,128], index: 2, kind: input, shape index: {}]
  %s3 = inlined_call_operand.vmem [shape: f32[1,128], index: 3, kind: input, shape index: {}]
  %s4 = inlined_call_operand.vmem [shape: f32[32,128], index: 4, kind: input, shape index: {}]
  %s5 = inlined_call_operand.vmem [shape: f32[32,128], index: 5, kind: input, shape index: {}]
  %s6 = inlined_call_operand.vmem [shape: f32[1,128], index: 6, kind: input, shape index: {}]
  %s7 = inlined_call_operand.vmem [shape: f32[2,8,32], index: 7, kind: input, shape index: {}]
  %s8 = inlined_call_operand.vmem [shape: f32[2,8,32], index: 8, kind: input, shape index: {}]
  %s9 = inlined_call_operand.vmem [shape: f32[32,128], index: 9, kind: input, shape index: {}]
  %s10 = inlined_call_operand.vmem [shape: f32[1,128], index: 10, kind: input, shape index: {}]
  %s11 = inlined_call_operand.vmem [shape: f32[8,128], index: 11, kind: output, shape index: {0}]
  %s12 = inlined_call_operand.vmem [shape: f32[2,8,32], index: 12, kind: output, shape index: {1}]
  %s13 = inlined_call_operand.vmem [shape: f32[2,8,32], index: 13, kind: output, shape index: {2}]
  %14 = xla_tuple %s11, %s12, %s13
  %s15 = sld [smem:[#allocation0]]
  $region70: #{lstm_net_forward.1} parent=0
    _
  %s17 = ssub.s32 1, %s15
  %s18 = scalar_select 0, %s17, %s15
  // Predicated region
  $region2: #{lstm_net_forward.1} parent=0 // pred_check
    _
  $region3: #{lstm_net_forward.1} parent=0 // pred_check_branch
    %20 = sbr.rel (0) target = $region5
  $region4: #{lstm_net_forward.1} parent=0 // pred_region
    _
  $region5: #{lstm_net_forward.1} parent=0 // pred_fallthru
    _
  // Predicated region
  $region6: #{lstm_net_forward.1} parent=0 // pred_check
    _
  $region7: #{lstm_net_forward.1} parent=0 // pred_check_branch
    %22 = sbr.rel (0) target = $region9
  $region8: #{lstm_net_forward.1} parent=0 // pred_region
    _
  $region9: #{lstm_net_forward.1} parent=0 // pred_fallthru
    _
  // Predicated region
  $region10: #{lstm_net_forward.1} parent=0 // pred_check
    _
  $region11: #{lstm_net_forward.1} parent=0 // pred_check_branch
    %24 = sbr.rel (0) target = $region13
  $region12: #{lstm_net_forward.1} parent=0 // pred_region
    _
  $region13: #{lstm_net_forward.1} parent=0 // pred_fallthru
    _
  // Predicated region
  $region14: #{lstm_net_forward.1} parent=0 // pred_check
    _
  $region15: #{lstm_net_forward.1} parent=0 // pred_check_branch
    %26 = sbr.rel (0) target = $region17
  $region16: #{lstm_net_forward.1} parent=0 // pred_region
    _
  $region17: #{lstm_net_forward.1} parent=0 // pred_fallthru
    _
  // Predicated region
  $region18: #{lstm_net_forward.1} parent=0 // pred_check
    _
  $region19: #{lstm_net_forward.1} parent=0 // pred_check_branch
    %28 = sbr.rel (0) target = $region21
  $region20: #{lstm_net_forward.1} parent=0 // pred_region
    _
  $region21: #{lstm_net_forward.1} parent=0 // pred_fallthru
    _
  // Predicated region
  $region22: #{lstm_net_forward.1} parent=0 // pred_check
    _
  $region23: #{lstm_net_forward.1} parent=0 // pred_check_branch
    %30 = sbr.rel (0) target = $region25
  $region24: #{lstm_net_forward.1} parent=0 // pred_region
    _
  $region25: #{lstm_net_forward.1} parent=0 // pred_fallthru
    _
  // Predicated region
  $region26: #{lstm_net_forward.1} parent=0 // pred_check
    _
  $region27: #{lstm_net_forward.1} parent=0 // pred_check_branch
    %32 = sbr.rel (0) target = $region29
  $region28: #{lstm_net_forward.1} parent=0 // pred_region
    _
  $region29: #{lstm_net_forward.1} parent=0 // pred_fallthru
    _
  // Predicated region
  $region30: #{lstm_net_forward.1} parent=0 // pred_check
    _
  $region31: #{lstm_net_forward.1} parent=0 // pred_check_branch
    %34 = sbr.rel (0) target = $region33
  $region32: #{lstm_net_forward.1} parent=0 // pred_region
    _
  $region33: #{lstm_net_forward.1} parent=0 // pred_fallthru
    _
  // Predicated region
  $region34: #{lstm_net_forward.1} parent=0 // pred_check
    _
  $region35: #{lstm_net_forward.1} parent=0 // pred_check_branch
    %36 = sbr.rel (0) target = $region37
  $region36: #{lstm_net_forward.1} parent=0 // pred_region
    _
  $region37: #{lstm_net_forward.1} parent=0 // pred_fallthru
    _
  // Predicated region
  $region38: #{lstm_net_forward.1} parent=0 // pred_check
    _
  $region39: #{lstm_net_forward.1} parent=0 // pred_check_branch
    %38 = sbr.rel (0) target = $region41
  $region40: #{lstm_net_forward.1} parent=0 // pred_region
    _
  $region41: #{lstm_net_forward.1} parent=0 // pred_fallthru
    _
  // Predicated region
  $region42: #{lstm_net_forward.1} parent=0 // pred_check
    _
  $region43: #{lstm_net_forward.1} parent=0 // pred_check_branch
    %40 = sbr.rel (0) target = $region45
  $region44: #{lstm_net_forward.1} parent=0 // pred_region
    _
  $region45: #{lstm_net_forward.1} parent=0 // pred_fallthru
    _
  %v41 = vld [vmem:[%s0] sm:$0xff]
  %v42 = vld [vmem:[%s0 + $0x8] sm:$0xff]
  %v43 = vld [vmem:[%s0 + $0x10] sm:$0xff]
  %v44 = vld [vmem:[%s0 + $0x18] sm:$0xff]
  %v45 = vld [vmem:[%s0 + $0x20] sm:$0xff]
  %v46 = vld [vmem:[%s0 + $0x28] sm:$0xff]
  %v47 = vld [vmem:[%s0 + $0x30] sm:$0xff]
  %v48 = vld [vmem:[%s0 + $0x38] sm:$0xff]
  %v49 = vld [vmem:[%s1] sm:$0xff]
  %v50 = vld [vmem:[%s1 + $0x8] sm:$0xff]
  %v51 = vld [vmem:[%s3] sm:$0x1]
  %v53 = vlaneseq
  %v54 = vshrl.u32 %v53, 7
  %v55 = vsub.s32 0, %v54
  %v56 = vrot.slane %v51, %v55
  %vm58 = vcmask 130048
  %v60 = vsel %vm58, %v41, 0
  %v63 = vsel %vm58, %v42, 0
  %v66 = vsel %vm58, %v43, 0
  %v69 = vsel %vm58, %v44, 0
  %v72 = vsel %vm58, %v45, 0
  %v75 = vsel %vm58, %v46, 0
  %v78 = vsel %vm58, %v47, 0
  %v81 = vsel %vm58, %v48, 0
  %83 = vmatprep.subr.mxu0 0.0
  %84 = vmatpush1.msra.mxu0 0.0
  %85 = vmatprep.subr.mxu0 0.0
  %86 = vmatpush1.msra.mxu0 0.0
  %87 = vmatprep.subr.mxu0 0.0
  %88 = vmatpush1.msra.mxu0 0.0
  %89 = vmatprep.subr.mxu0 0.0
  %90 = vmatpush1.msra.mxu0 0.0
  %91 = vmatprep.subr.mxu0 0.0
  %92 = vmatpush1.msra.mxu0 0.0
  %93 = vmatprep.subr.mxu0 0.0
  %94 = vmatpush1.msra.mxu0 0.0
  %95 = vmatprep.subr.mxu0 0.0
  %96 = vmatpush1.msra.mxu0 0.0
  %97 = vmatprep.subr.mxu0 0.0
  %98 = vmatpush1.msra.mxu0 0.0
  %99 = vmatprep.subr.mxu0 0.0
  %100 = vmatpush1.msra.mxu0 0.0
  %101 = vmatprep.subr.mxu0 0.0
  %102 = vmatpush1.msra.mxu0 0.0
  %103 = vmatprep.subr.mxu0 0.0
  %104 = vmatpush1.msra.mxu0 0.0
  %105 = vmatprep.subr.mxu0 0.0
  %106 = vmatpush1.msra.mxu0 0.0
  %107 = vmatprep.subr.mxu0 0.0
  %108 = vmatpush1.msra.mxu0 0.0
  %109 = vmatprep.subr.mxu0 0.0
  %110 = vmatpush1.msra.mxu0 0.0
  %111 = vmatprep.subr.mxu0 0.0
  %112 = vmatpush1.msra.mxu0 %v50
  %113 = vmatprep.subr.mxu0 0.0
  %114 = vmatpush1.msra.mxu0 %v49
  %115 = vmatprep.subr.mxu0 0.0
  %116 = vmatpush2.msra.mxu0 0.0
  %117 = vmatprep.subr.mxu0 0.0
  %118 = vmatpush2.msra.mxu0 0.0
  %119 = vmatprep.subr.mxu0 0.0
  %120 = vmatpush2.msra.mxu0 0.0
  %121 = vmatprep.subr.mxu0 0.0
  %122 = vmatpush2.msra.mxu0 0.0
  %123 = vmatprep.subr.mxu0 0.0
  %124 = vmatpush2.msra.mxu0 0.0
  %125 = vmatprep.subr.mxu0 0.0
  %126 = vmatpush2.msra.mxu0 0.0
  %127 = vmatprep.subr.mxu0 0.0
  %128 = vmatpush2.msra.mxu0 0.0
  %129 = vmatprep.subr.mxu0 0.0
  %130 = vmatpush2.msra.mxu0 0.0
  %131 = vmatprep.subr.mxu0 0.0
  %132 = vmatpush2.msra.mxu0 0.0
  %133 = vmatprep.subr.mxu0 0.0
  %134 = vmatpush2.msra.mxu0 0.0
  %135 = vmatprep.subr.mxu0 0.0
  %136 = vmatpush2.msra.mxu0 0.0
  %137 = vmatprep.subr.mxu0 0.0
  %138 = vmatpush2.msra.mxu0 0.0
  %139 = vmatprep.subr.mxu0 0.0
  %140 = vmatpush2.msra.mxu0 0.0
  %141 = vmatprep.subr.mxu0 0.0
  %142 = vmatpush2.msra.mxu0 0.0
  %143 = vmatprep.subr.mxu0 0.0
  %144 = vmatpush2.msra.mxu0 0.0
  %145 = vmatprep.subr.mxu0 0.0
  %146 = vmatpush2.msra.mxu0 0.0
  %147 = vmatprep.mubr.f32.mxu0 0.0
  %148 = vmatmul.mubr.f32.gmra.mxu0 %v60
  %v149 = vpop.f32.mrf.mxu0
  %v150 = vadd.f32 %v56, %v149
  %v151 = vpop.f32.mrf.mxu0
  %152 = vmatprep.mubr.f32.mxu0 0.0
  %153 = vmatmul.mubr.f32.gmra.mxu0 %v63
  %v154 = vpop.f32.mrf.mxu0
  %v155 = vadd.f32 %v56, %v154
  %v156 = vpop.f32.mrf.mxu0
  %157 = vmatprep.mubr.f32.mxu0 0.0
  %158 = vmatmul.mubr.f32.gmra.mxu0 %v66
  %v159 = vpop.f32.mrf.mxu0
  %v160 = vadd.f32 %v56, %v159
  %v161 = vpop.f32.mrf.mxu0
  %162 = vmatprep.mubr.f32.mxu0 0.0
  %163 = vmatmul.mubr.f32.gmra.mxu0 %v69
  %v164 = vpop.f32.mrf.mxu0
  %v165 = vadd.f32 %v56, %v164
  %v166 = vpop.f32.mrf.mxu0
  %167 = vmatprep.mubr.f32.mxu0 0.0
  %168 = vmatmul.mubr.f32.gmra.mxu0 %v72
  %v169 = vpop.f32.mrf.mxu0
  %v170 = vadd.f32 %v56, %v169
  %v171 = vpop.f32.mrf.mxu0
  %172 = vmatprep.mubr.f32.mxu0 0.0
  %173 = vmatmul.mubr.f32.gmra.mxu0 %v75
  %v174 = vpop.f32.mrf.mxu0
  %v175 = vadd.f32 %v56, %v174
  %v176 = vpop.f32.mrf.mxu0
  %177 = vmatprep.mubr.f32.mxu0 0.0
  %178 = vmatmul.mubr.f32.gmra.mxu0 %v78
  %v179 = vpop.f32.mrf.mxu0
  %v180 = vadd.f32 %v56, %v179
  %v181 = vpop.f32.mrf.mxu0
  %182 = vmatprep.mubr.f32.mxu0 0.0
  %183 = vmatmul.mubr.f32.gmra.mxu0 %v81
  %v184 = vpop.f32.mrf.mxu0
  %v185 = vadd.f32 %v56, %v184
  %v186 = vpop.f32.mrf.mxu0
  %187 = vdwg.mxu0
  %188 = vst [vmem:[#allocation2] sm:$0xff] %v150
  %189 = vst [vmem:[#allocation2 + $0x8] sm:$0xff] %v155
  %190 = vst [vmem:[#allocation2 + $0x10] sm:$0xff] %v160
  %191 = vst [vmem:[#allocation2 + $0x18] sm:$0xff] %v165
  %192 = vst [vmem:[#allocation2 + $0x20] sm:$0xff] %v170
  %193 = vst [vmem:[#allocation2 + $0x28] sm:$0xff] %v175
  %194 = vst [vmem:[#allocation2 + $0x30] sm:$0xff] %v180
  %195 = vst [vmem:[#allocation2 + $0x38] sm:$0xff] %v185
  %v196 = vld [vmem:[%s2] sm:$0xff]
  %v197 = vld [vmem:[%s2 + $0x8] sm:$0xff]
  %v198 = vld [vmem:[%s2 + $0x10] sm:$0xff]
  %v199 = vld [vmem:[%s2 + $0x18] sm:$0xff]
  %v200 = vld [vmem:[%s4] sm:$0xff]
  %v201 = vld [vmem:[%s4 + $0x8] sm:$0xff]
  %v202 = vld [vmem:[%s4 + $0x10] sm:$0xff]
  %v203 = vld [vmem:[%s4 + $0x18] sm:$0xff]
  %v204 = vld [vmem:[%s6] sm:$0x1]
  %v205 = vld [vmem:[%s7] sm:$0xff]
  %v206 = vld [vmem:[%s8] sm:$0xff]
  %v207 = vld [vmem:[#allocation2] sm:$0xff]
  %vm208 = vcmask 261120
  %v210 = vsel %vm208, %v205, 0
  %212 = vmatprep.subr.mxu0 0.0
  %213 = vmatpush1.msra.mxu0 0.0
  %214 = vmatprep.subr.mxu0 0.0
  %215 = vmatpush1.msra.mxu0 0.0
  %216 = vmatprep.subr.mxu0 0.0
  %217 = vmatpush1.msra.mxu0 0.0
  %218 = vmatprep.subr.mxu0 0.0
  %219 = vmatpush1.msra.mxu0 0.0
  %220 = vmatprep.subr.mxu0 0.0
  %221 = vmatpush1.msra.mxu0 0.0
  %222 = vmatprep.subr.mxu0 0.0
  %223 = vmatpush1.msra.mxu0 0.0
  %224 = vmatprep.subr.mxu0 0.0
  %225 = vmatpush1.msra.mxu0 0.0
  %226 = vmatprep.subr.mxu0 0.0
  %227 = vmatpush1.msra.mxu0 0.0
  %228 = vmatprep.subr.mxu0 0.0
  %229 = vmatpush1.msra.mxu0 0.0
  %230 = vmatprep.subr.mxu0 0.0
  %231 = vmatpush1.msra.mxu0 0.0
  %232 = vmatprep.subr.mxu0 0.0
  %233 = vmatpush1.msra.mxu0 0.0
  %234 = vmatprep.subr.mxu0 0.0
  %235 = vmatpush1.msra.mxu0 0.0
  %236 = vmatprep.subr.mxu0 0.0
  %237 = vmatpush1.msra.mxu0 %v199
  %238 = vmatprep.subr.mxu0 0.0
  %239 = vmatpush1.msra.mxu0 %v198
  %240 = vmatprep.subr.mxu0 0.0
  %241 = vmatpush1.msra.mxu0 %v197
  %242 = vmatprep.subr.mxu0 0.0
  %243 = vmatpush1.msra.mxu0 %v196
  %244 = vmatprep.subr.mxu0 0.0
  %245 = vmatpush2.msra.mxu0 0.0
  %246 = vmatprep.subr.mxu0 0.0
  %247 = vmatpush2.msra.mxu0 0.0
  %248 = vmatprep.subr.mxu0 0.0
  %249 = vmatpush2.msra.mxu0 0.0
  %250 = vmatprep.subr.mxu0 0.0
  %251 = vmatpush2.msra.mxu0 0.0
  %252 = vmatprep.subr.mxu0 0.0
  %253 = vmatpush2.msra.mxu0 0.0
  %254 = vmatprep.subr.mxu0 0.0
  %255 = vmatpush2.msra.mxu0 0.0
  %256 = vmatprep.subr.mxu0 0.0
  %257 = vmatpush2.msra.mxu0 0.0
  %258 = vmatprep.subr.mxu0 0.0
  %259 = vmatpush2.msra.mxu0 0.0
  %260 = vmatprep.subr.mxu0 0.0
  %261 = vmatpush2.msra.mxu0 0.0
  %262 = vmatprep.subr.mxu0 0.0
  %263 = vmatpush2.msra.mxu0 0.0
  %264 = vmatprep.subr.mxu0 0.0
  %265 = vmatpush2.msra.mxu0 0.0
  %266 = vmatprep.subr.mxu0 0.0
  %267 = vmatpush2.msra.mxu0 0.0
  %268 = vmatprep.subr.mxu0 0.0
  %269 = vmatpush2.msra.mxu0 0.0
  %270 = vmatprep.subr.mxu0 0.0
  %271 = vmatpush2.msra.mxu0 0.0
  %272 = vmatprep.subr.mxu0 0.0
  %273 = vmatpush2.msra.mxu0 0.0
  %274 = vmatprep.subr.mxu0 0.0
  %275 = vmatpush2.msra.mxu0 0.0
  %276 = vmatprep.mubr.f32.mxu0 0.0
  %277 = vmatmul.mubr.f32.gmra.mxu0 %v210
  %v278 = vpop.f32.mrf.mxu0
  %v279 = vadd.f32 0.0, %v278
  %v280 = vpop.f32.mrf.mxu0
  %281 = vdwg.mxu0
  %v282 = vadd.f32 %v207, %v279
  %v283 = vxor.u32 %v282, 2147483648
  %v284 = vmul.f32 %v283, 1.442695
  %v285 = vpow.pop %v284
  %v286 = vadd.f32 %v285, 1.0
  %v287 = vrcp.pop %v286
  %v288 = vmul.f32 1.0, %v287
  %v289 = vtanh.pop %v282
  %291 = vrot.lane.b32.xlu0 %v206, 32
  %v292 = vpop.permute.xlu0 %291
  %v294 = vmul.f32 %v288, %v292
  %296 = vrot.lane.b32.xlu0 %v289, 64
  %v297 = vpop.permute.xlu0 %296
  %v299 = vmul.f32 %v288, %v297
  %301 = vrot.lane.b32.xlu0 %v299, 32
  %v302 = vpop.permute.xlu0 %301
  %v304 = vadd.f32 %v294, %v302
  %v305 = vtanh.pop %v304
  %307 = vrot.lane.b32.xlu0 %v305, 64
  %v308 = vpop.permute.xlu0 %307
  %v310 = vmul.f32 %v288, %v308
  %v312 = vlaneseq
  %v313 = vshrl.u32 %v312, 7
  %v314 = vsub.s32 0, %v313
  %v315 = vrot.slane %v204, %v314
  %318 = vrot.lane.b32.xlu0 %v310, 32
  %v319 = vpop.permute.xlu0 %318
  %v320 = vsel %vm208, %v319, 0
  %322 = vmatprep.subr.mxu0 0.0
  %323 = vmatpush1.msra.mxu0 0.0
  %324 = vmatprep.subr.mxu0 0.0
  %325 = vmatpush1.msra.mxu0 0.0
  %326 = vmatprep.subr.mxu0 0.0
  %327 = vmatpush1.msra.mxu0 0.0
  %328 = vmatprep.subr.mxu0 0.0
  %329 = vmatpush1.msra.mxu0 0.0
  %330 = vmatprep.subr.mxu0 0.0
  %331 = vmatpush1.msra.mxu0 0.0
  %332 = vmatprep.subr.mxu0 0.0
  %333 = vmatpush1.msra.mxu0 0.0
  %334 = vmatprep.subr.mxu0 0.0
  %335 = vmatpush1.msra.mxu0 0.0
  %336 = vmatprep.subr.mxu0 0.0
  %337 = vmatpush1.msra.mxu0 0.0
  %338 = vmatprep.subr.mxu0 0.0
  %339 = vmatpush1.msra.mxu0 0.0
  %340 = vmatprep.subr.mxu0 0.0
  %341 = vmatpush1.msra.mxu0 0.0
  %342 = vmatprep.subr.mxu0 0.0
  %343 = vmatpush1.msra.mxu0 0.0
  %344 = vmatprep.subr.mxu0 0.0
  %345 = vmatpush1.msra.mxu0 0.0
  %346 = vmatprep.subr.mxu0 0.0
  %347 = vmatpush1.msra.mxu0 %v203
  %348 = vmatprep.subr.mxu0 0.0
  %349 = vmatpush1.msra.mxu0 %v202
  %350 = vmatprep.subr.mxu0 0.0
  %351 = vmatpush1.msra.mxu0 %v201
  %352 = vmatprep.subr.mxu0 0.0
  %353 = vmatpush1.msra.mxu0 %v200
  %354 = vmatprep.subr.mxu0 0.0
  %355 = vmatpush2.msra.mxu0 0.0
  %356 = vmatprep.subr.mxu0 0.0
  %357 = vmatpush2.msra.mxu0 0.0
  %358 = vmatprep.subr.mxu0 0.0
  %359 = vmatpush2.msra.mxu0 0.0
  %360 = vmatprep.subr.mxu0 0.0
  %361 = vmatpush2.msra.mxu0 0.0
  %362 = vmatprep.subr.mxu0 0.0
  %363 = vmatpush2.msra.mxu0 0.0
  %364 = vmatprep.subr.mxu0 0.0
  %365 = vmatpush2.msra.mxu0 0.0
  %366 = vmatprep.subr.mxu0 0.0
  %367 = vmatpush2.msra.mxu0 0.0
  %368 = vmatprep.subr.mxu0 0.0
  %369 = vmatpush2.msra.mxu0 0.0
  %370 = vmatprep.subr.mxu0 0.0
  %371 = vmatpush2.msra.mxu0 0.0
  %372 = vmatprep.subr.mxu0 0.0
  %373 = vmatpush2.msra.mxu0 0.0
  %374 = vmatprep.subr.mxu0 0.0
  %375 = vmatpush2.msra.mxu0 0.0
  %376 = vmatprep.subr.mxu0 0.0
  %377 = vmatpush2.msra.mxu0 0.0
  %378 = vmatprep.subr.mxu0 0.0
  %379 = vmatpush2.msra.mxu0 0.0
  %380 = vmatprep.subr.mxu0 0.0
  %381 = vmatpush2.msra.mxu0 0.0
  %382 = vmatprep.subr.mxu0 0.0
  %383 = vmatpush2.msra.mxu0 0.0
  %384 = vmatprep.subr.mxu0 0.0
  %385 = vmatpush2.msra.mxu0 0.0
  %386 = vmatprep.mubr.f32.mxu0 0.0
  %387 = vmatmul.mubr.f32.gmra.mxu0 %v320
  %v388 = vpop.f32.mrf.mxu0
  %v389 = vadd.f32 %v315, %v388
  %v390 = vpop.f32.mrf.mxu0
  %391 = vdwg.mxu0
  %392 = vst [vmem:[#allocation2] sm:$0xff] %v389
  %s393 = scalar_lea.vmem [#allocation2], 8
  %v394 = vld [vmem:[%s393] sm:$0xff]
  %395 = vmatprep.subr.mxu0 0.0
  %396 = vmatpush1.msra.mxu0 0.0
  %397 = vmatprep.subr.mxu0 0.0
  %398 = vmatpush1.msra.mxu0 0.0
  %399 = vmatprep.subr.mxu0 0.0
  %400 = vmatpush1.msra.mxu0 0.0
  %401 = vmatprep.subr.mxu0 0.0
  %402 = vmatpush1.msra.mxu0 0.0
  %403 = vmatprep.subr.mxu0 0.0
  %404 = vmatpush1.msra.mxu0 0.0
  %405 = vmatprep.subr.mxu0 0.0
  %406 = vmatpush1.msra.mxu0 0.0
  %407 = vmatprep.subr.mxu0 0.0
  %408 = vmatpush1.msra.mxu0 0.0
  %409 = vmatprep.subr.mxu0 0.0
  %410 = vmatpush1.msra.mxu0 0.0
  %411 = vmatprep.subr.mxu0 0.0
  %412 = vmatpush1.msra.mxu0 0.0
  %413 = vmatprep.subr.mxu0 0.0
  %414 = vmatpush1.msra.mxu0 0.0
  %415 = vmatprep.subr.mxu0 0.0
  %416 = vmatpush1.msra.mxu0 0.0
  %417 = vmatprep.subr.mxu0 0.0
  %418 = vmatpush1.msra.mxu0 0.0
  %419 = vmatprep.subr.mxu0 0.0
  %420 = vmatpush1.msra.mxu0 %v199
  %421 = vmatprep.subr.mxu0 0.0
  %422 = vmatpush1.msra.mxu0 %v198
  %423 = vmatprep.subr.mxu0 0.0
  %424 = vmatpush1.msra.mxu0 %v197
  %425 = vmatprep.subr.mxu0 0.0
  %426 = vmatpush1.msra.mxu0 %v196
  %427 = vmatprep.subr.mxu0 0.0
  %428 = vmatpush2.msra.mxu0 0.0
  %429 = vmatprep.subr.mxu0 0.0
  %430 = vmatpush2.msra.mxu0 0.0
  %431 = vmatprep.subr.mxu0 0.0
  %432 = vmatpush2.msra.mxu0 0.0
  %433 = vmatprep.subr.mxu0 0.0
  %434 = vmatpush2.msra.mxu0 0.0
  %435 = vmatprep.subr.mxu0 0.0
  %436 = vmatpush2.msra.mxu0 0.0
  %437 = vmatprep.subr.mxu0 0.0
  %438 = vmatpush2.msra.mxu0 0.0
  %439 = vmatprep.subr.mxu0 0.0
  %440 = vmatpush2.msra.mxu0 0.0
  %441 = vmatprep.subr.mxu0 0.0
  %442 = vmatpush2.msra.mxu0 0.0
  %443 = vmatprep.subr.mxu0 0.0
  %444 = vmatpush2.msra.mxu0 0.0
  %445 = vmatprep.subr.mxu0 0.0
  %446 = vmatpush2.msra.mxu0 0.0
  %447 = vmatprep.subr.mxu0 0.0
  %448 = vmatpush2.msra.mxu0 0.0
  %449 = vmatprep.subr.mxu0 0.0
  %450 = vmatpush2.msra.mxu0 0.0
  %451 = vmatprep.subr.mxu0 0.0
  %452 = vmatpush2.msra.mxu0 0.0
  %453 = vmatprep.subr.mxu0 0.0
  %454 = vmatpush2.msra.mxu0 0.0
  %455 = vmatprep.subr.mxu0 0.0
  %456 = vmatpush2.msra.mxu0 0.0
  %457 = vmatprep.subr.mxu0 0.0
  %458 = vmatpush2.msra.mxu0 0.0
  %459 = vmatprep.mubr.f32.mxu0 0.0
  %460 = vmatmul.mubr.f32.gmra.mxu0 %v320
  %v461 = vpop.f32.mrf.mxu0
  %v462 = vadd.f32 0.0, %v461
  %v463 = vpop.f32.mrf.mxu0
  %464 = vdwg.mxu0
  %v465 = vadd.f32 %v394, %v462
  %v466 = vxor.u32 %v465, 2147483648
  %v467 = vmul.f32 %v466, 1.442695
  %v468 = vpow.pop %v467
  %v469 = vadd.f32 %v468, 1.0
  %v470 = vrcp.pop %v469
  %v471 = vmul.f32 1.0, %v470
  %v472 = vtanh.pop %v465
  %v473 = vmul.f32 %v471, %v304
  %475 = vrot.lane.b32.xlu0 %v472, 64
  %v476 = vpop.permute.xlu0 %475
  %v478 = vmul.f32 %v471, %v476
  %480 = vrot.lane.b32.xlu0 %v478, 32
  %v481 = vpop.permute.xlu0 %480
  %v483 = vadd.f32 %v473, %v481
  %v484 = vtanh.pop %v483
  %486 = vrot.lane.b32.xlu0 %v484, 64
  %v487 = vpop.permute.xlu0 %486
  %v489 = vmul.f32 %v471, %v487
  %491 = vrot.lane.b32.xlu0 %v489, 32
  %v492 = vpop.permute.xlu0 %491
  %v493 = vsel %vm208, %v492, 0
  %495 = vmatprep.subr.mxu0 0.0
  %496 = vmatpush1.msra.mxu0 0.0
  %497 = vmatprep.subr.mxu0 0.0
  %498 = vmatpush1.msra.mxu0 0.0
  %499 = vmatprep.subr.mxu0 0.0
  %500 = vmatpush1.msra.mxu0 0.0
  %501 = vmatprep.subr.mxu0 0.0
  %502 = vmatpush1.msra.mxu0 0.0
  %503 = vmatprep.subr.mxu0 0.0
  %504 = vmatpush1.msra.mxu0 0.0
  %505 = vmatprep.subr.mxu0 0.0
  %506 = vmatpush1.msra.mxu0 0.0
  %507 = vmatprep.subr.mxu0 0.0
  %508 = vmatpush1.msra.mxu0 0.0
  %509 = vmatprep.subr.mxu0 0.0
  %510 = vmatpush1.msra.mxu0 0.0
  %511 = vmatprep.subr.mxu0 0.0
  %512 = vmatpush1.msra.mxu0 0.0
  %513 = vmatprep.subr.mxu0 0.0
  %514 = vmatpush1.msra.mxu0 0.0
  %515 = vmatprep.subr.mxu0 0.0
  %516 = vmatpush1.msra.mxu0 0.0
  %517 = vmatprep.subr.mxu0 0.0
  %518 = vmatpush1.msra.mxu0 0.0
  %519 = vmatprep.subr.mxu0 0.0
  %520 = vmatpush1.msra.mxu0 %v203
  %521 = vmatprep.subr.mxu0 0.0
  %522 = vmatpush1.msra.mxu0 %v202
  %523 = vmatprep.subr.mxu0 0.0
  %524 = vmatpush1.msra.mxu0 %v201
  %525 = vmatprep.subr.mxu0 0.0
  %526 = vmatpush1.msra.mxu0 %v200
  %527 = vmatprep.subr.mxu0 0.0
  %528 = vmatpush2.msra.mxu0 0.0
  %529 = vmatprep.subr.mxu0 0.0
  %530 = vmatpush2.msra.mxu0 0.0
  %531 = vmatprep.subr.mxu0 0.0
  %532 = vmatpush2.msra.mxu0 0.0
  %533 = vmatprep.subr.mxu0 0.0
  %534 = vmatpush2.msra.mxu0 0.0
  %535 = vmatprep.subr.mxu0 0.0
  %536 = vmatpush2.msra.mxu0 0.0
  %537 = vmatprep.subr.mxu0 0.0
  %538 = vmatpush2.msra.mxu0 0.0
  %539 = vmatprep.subr.mxu0 0.0
  %540 = vmatpush2.msra.mxu0 0.0
  %541 = vmatprep.subr.mxu0 0.0
  %542 = vmatpush2.msra.mxu0 0.0
  %543 = vmatprep.subr.mxu0 0.0
  %544 = vmatpush2.msra.mxu0 0.0
  %545 = vmatprep.subr.mxu0 0.0
  %546 = vmatpush2.msra.mxu0 0.0
  %547 = vmatprep.subr.mxu0 0.0
  %548 = vmatpush2.msra.mxu0 0.0
  %549 = vmatprep.subr.mxu0 0.0
  %550 = vmatpush2.msra.mxu0 0.0
  %551 = vmatprep.subr.mxu0 0.0
  %552 = vmatpush2.msra.mxu0 0.0
  %553 = vmatprep.subr.mxu0 0.0
  %554 = vmatpush2.msra.mxu0 0.0
  %555 = vmatprep.subr.mxu0 0.0
  %556 = vmatpush2.msra.mxu0 0.0
  %557 = vmatprep.subr.mxu0 0.0
  %558 = vmatpush2.msra.mxu0 0.0
  %559 = vmatprep.mubr.f32.mxu0 0.0
  %560 = vmatmul.mubr.f32.gmra.mxu0 %v493
  %v561 = vpop.f32.mrf.mxu0
  %v562 = vadd.f32 %v315, %v561
  %v563 = vpop.f32.mrf.mxu0
  %564 = vdwg.mxu0
  %565 = vst [vmem:[%s393] sm:$0xff] %v562
  %s566 = scalar_lea.vmem [#allocation2], 16
  %v567 = vld [vmem:[%s566] sm:$0xff]
  %568 = vmatprep.subr.mxu0 0.0
  %569 = vmatpush1.msra.mxu0 0.0
  %570 = vmatprep.subr.mxu0 0.0
  %571 = vmatpush1.msra.mxu0 0.0
  %572 = vmatprep.subr.mxu0 0.0
  %573 = vmatpush1.msra.mxu0 0.0
  %574 = vmatprep.subr.mxu0 0.0
  %575 = vmatpush1.msra.mxu0 0.0
  %576 = vmatprep.subr.mxu0 0.0
  %577 = vmatpush1.msra.mxu0 0.0
  %578 = vmatprep.subr.mxu0 0.0
  %579 = vmatpush1.msra.mxu0 0.0
  %580 = vmatprep.subr.mxu0 0.0
  %581 = vmatpush1.msra.mxu0 0.0
  %582 = vmatprep.subr.mxu0 0.0
  %583 = vmatpush1.msra.mxu0 0.0
  %584 = vmatprep.subr.mxu0 0.0
  %585 = vmatpush1.msra.mxu0 0.0
  %586 = vmatprep.subr.mxu0 0.0
  %587 = vmatpush1.msra.mxu0 0.0
  %588 = vmatprep.subr.mxu0 0.0
  %589 = vmatpush1.msra.mxu0 0.0
  %590 = vmatprep.subr.mxu0 0.0
  %591 = vmatpush1.msra.mxu0 0.0
  %592 = vmatprep.subr.mxu0 0.0
  %593 = vmatpush1.msra.mxu0 %v199
  %594 = vmatprep.subr.mxu0 0.0
  %595 = vmatpush1.msra.mxu0 %v198
  %596 = vmatprep.subr.mxu0 0.0
  %597 = vmatpush1.msra.mxu0 %v197
  %598 = vmatprep.subr.mxu0 0.0
  %599 = vmatpush1.msra.mxu0 %v196
  %600 = vmatprep.subr.mxu0 0.0
  %601 = vmatpush2.msra.mxu0 0.0
  %602 = vmatprep.subr.mxu0 0.0
  %603 = vmatpush2.msra.mxu0 0.0
  %604 = vmatprep.subr.mxu0 0.0
  %605 = vmatpush2.msra.mxu0 0.0
  %606 = vmatprep.subr.mxu0 0.0
  %607 = vmatpush2.msra.mxu0 0.0
  %608 = vmatprep.subr.mxu0 0.0
  %609 = vmatpush2.msra.mxu0 0.0
  %610 = vmatprep.subr.mxu0 0.0
  %611 = vmatpush2.msra.mxu0 0.0
  %612 = vmatprep.subr.mxu0 0.0
  %613 = vmatpush2.msra.mxu0 0.0
  %614 = vmatprep.subr.mxu0 0.0
  %615 = vmatpush2.msra.mxu0 0.0
  %616 = vmatprep.subr.mxu0 0.0
  %617 = vmatpush2.msra.mxu0 0.0
  %618 = vmatprep.subr.mxu0 0.0
  %619 = vmatpush2.msra.mxu0 0.0
  %620 = vmatprep.subr.mxu0 0.0
  %621 = vmatpush2.msra.mxu0 0.0
  %622 = vmatprep.subr.mxu0 0.0
  %623 = vmatpush2.msra.mxu0 0.0
  %624 = vmatprep.subr.mxu0 0.0
  %625 = vmatpush2.msra.mxu0 0.0
  %626 = vmatprep.subr.mxu0 0.0
  %627 = vmatpush2.msra.mxu0 0.0
  %628 = vmatprep.subr.mxu0 0.0
  %629 = vmatpush2.msra.mxu0 0.0
  %630 = vmatprep.subr.mxu0 0.0
  %631 = vmatpush2.msra.mxu0 0.0
  %632 = vmatprep.mubr.f32.mxu0 0.0
  %633 = vmatmul.mubr.f32.gmra.mxu0 %v493
  %v634 = vpop.f32.mrf.mxu0
  %v635 = vadd.f32 0.0, %v634
  %v636 = vpop.f32.mrf.mxu0
  %637 = vdwg.mxu0
  %v638 = vadd.f32 %v567, %v635
  %v639 = vxor.u32 %v638, 2147483648
  %v640 = vmul.f32 %v639, 1.442695
  %v641 = vpow.pop %v640
  %v642 = vadd.f32 %v641, 1.0
  %v643 = vrcp.pop %v642
  %v644 = vmul.f32 1.0, %v643
  %v645 = vtanh.pop %v638
  %v646 = vmul.f32 %v644, %v483
  %648 = vrot.lane.b32.xlu0 %v645, 64
  %v649 = vpop.permute.xlu0 %648
  %v651 = vmul.f32 %v644, %v649
  %653 = vrot.lane.b32.xlu0 %v651, 32
  %v654 = vpop.permute.xlu0 %653
  %v656 = vadd.f32 %v646, %v654
  %v657 = vtanh.pop %v656
  %659 = vrot.lane.b32.xlu0 %v657, 64
  %v660 = vpop.permute.xlu0 %659
  %v662 = vmul.f32 %v644, %v660
  %664 = vrot.lane.b32.xlu0 %v662, 32
  %v665 = vpop.permute.xlu0 %664
  %v666 = vsel %vm208, %v665, 0
  %668 = vmatprep.subr.mxu0 0.0
  %669 = vmatpush1.msra.mxu0 0.0
  %670 = vmatprep.subr.mxu0 0.0
  %671 = vmatpush1.msra.mxu0 0.0
  %672 = vmatprep.subr.mxu0 0.0
  %673 = vmatpush1.msra.mxu0 0.0
  %674 = vmatprep.subr.mxu0 0.0
  %675 = vmatpush1.msra.mxu0 0.0
  %676 = vmatprep.subr.mxu0 0.0
  %677 = vmatpush1.msra.mxu0 0.0
  %678 = vmatprep.subr.mxu0 0.0
  %679 = vmatpush1.msra.mxu0 0.0
  %680 = vmatprep.subr.mxu0 0.0
  %681 = vmatpush1.msra.mxu0 0.0
  %682 = vmatprep.subr.mxu0 0.0
  %683 = vmatpush1.msra.mxu0 0.0
  %684 = vmatprep.subr.mxu0 0.0
  %685 = vmatpush1.msra.mxu0 0.0
  %686 = vmatprep.subr.mxu0 0.0
  %687 = vmatpush1.msra.mxu0 0.0
  %688 = vmatprep.subr.mxu0 0.0
  %689 = vmatpush1.msra.mxu0 0.0
  %690 = vmatprep.subr.mxu0 0.0
  %691 = vmatpush1.msra.mxu0 0.0
  %692 = vmatprep.subr.mxu0 0.0
  %693 = vmatpush1.msra.mxu0 %v203
  %694 = vmatprep.subr.mxu0 0.0
  %695 = vmatpush1.msra.mxu0 %v202
  %696 = vmatprep.subr.mxu0 0.0
  %697 = vmatpush1.msra.mxu0 %v201
  %698 = vmatprep.subr.mxu0 0.0
  %699 = vmatpush1.msra.mxu0 %v200
  %700 = vmatprep.subr.mxu0 0.0
  %701 = vmatpush2.msra.mxu0 0.0
  %702 = vmatprep.subr.mxu0 0.0
  %703 = vmatpush2.msra.mxu0 0.0
  %704 = vmatprep.subr.mxu0 0.0
  %705 = vmatpush2.msra.mxu0 0.0
  %706 = vmatprep.subr.mxu0 0.0
  %707 = vmatpush2.msra.mxu0 0.0
  %708 = vmatprep.subr.mxu0 0.0
  %709 = vmatpush2.msra.mxu0 0.0
  %710 = vmatprep.subr.mxu0 0.0
  %711 = vmatpush2.msra.mxu0 0.0
  %712 = vmatprep.subr.mxu0 0.0
  %713 = vmatpush2.msra.mxu0 0.0
  %714 = vmatprep.subr.mxu0 0.0
  %715 = vmatpush2.msra.mxu0 0.0
  %716 = vmatprep.subr.mxu0 0.0
  %717 = vmatpush2.msra.mxu0 0.0
  %718 = vmatprep.subr.mxu0 0.0
  %719 = vmatpush2.msra.mxu0 0.0
  %720 = vmatprep.subr.mxu0 0.0
  %721 = vmatpush2.msra.mxu0 0.0
  %722 = vmatprep.subr.mxu0 0.0
  %723 = vmatpush2.msra.mxu0 0.0
  %724 = vmatprep.subr.mxu0 0.0
  %725 = vmatpush2.msra.mxu0 0.0
  %726 = vmatprep.subr.mxu0 0.0
  %727 = vmatpush2.msra.mxu0 0.0
  %728 = vmatprep.subr.mxu0 0.0
  %729 = vmatpush2.msra.mxu0 0.0
  %730 = vmatprep.subr.mxu0 0.0
  %731 = vmatpush2.msra.mxu0 0.0
  %732 = vmatprep.mubr.f32.mxu0 0.0
  %733 = vmatmul.mubr.f32.gmra.mxu0 %v666
  %v734 = vpop.f32.mrf.mxu0
  %v735 = vadd.f32 %v315, %v734
  %v736 = vpop.f32.mrf.mxu0
  %737 = vdwg.mxu0
  %738 = vst [vmem:[%s566] sm:$0xff] %v735
  %s739 = scalar_lea.vmem [#allocation2], 24
  %v740 = vld [vmem:[%s739] sm:$0xff]
  %741 = vmatprep.subr.mxu0 0.0
  %742 = vmatpush1.msra.mxu0 0.0
  %743 = vmatprep.subr.mxu0 0.0
  %744 = vmatpush1.msra.mxu0 0.0
  %745 = vmatprep.subr.mxu0 0.0
  %746 = vmatpush1.msra.mxu0 0.0
  %747 = vmatprep.subr.mxu0 0.0
  %748 = vmatpush1.msra.mxu0 0.0
  %749 = vmatprep.subr.mxu0 0.0
  %750 = vmatpush1.msra.mxu0 0.0
  %751 = vmatprep.subr.mxu0 0.0
  %752 = vmatpush1.msra.mxu0 0.0
  %753 = vmatprep.subr.mxu0 0.0
  %754 = vmatpush1.msra.mxu0 0.0
  %755 = vmatprep.subr.mxu0 0.0
  %756 = vmatpush1.msra.mxu0 0.0
  %757 = vmatprep.subr.mxu0 0.0
  %758 = vmatpush1.msra.mxu0 0.0
  %759 = vmatprep.subr.mxu0 0.0
  %760 = vmatpush1.msra.mxu0 0.0
  %761 = vmatprep.subr.mxu0 0.0
  %762 = vmatpush1.msra.mxu0 0.0
  %763 = vmatprep.subr.mxu0 0.0
  %764 = vmatpush1.msra.mxu0 0.0
  %765 = vmatprep.subr.mxu0 0.0
  %766 = vmatpush1.msra.mxu0 %v199
  %767 = vmatprep.subr.mxu0 0.0
  %768 = vmatpush1.msra.mxu0 %v198
  %769 = vmatprep.subr.mxu0 0.0
  %770 = vmatpush1.msra.mxu0 %v197
  %771 = vmatprep.subr.mxu0 0.0
  %772 = vmatpush1.msra.mxu0 %v196
  %773 = vmatprep.subr.mxu0 0.0
  %774 = vmatpush2.msra.mxu0 0.0
  %775 = vmatprep.subr.mxu0 0.0
  %776 = vmatpush2.msra.mxu0 0.0
  %777 = vmatprep.subr.mxu0 0.0
  %778 = vmatpush2.msra.mxu0 0.0
  %779 = vmatprep.subr.mxu0 0.0
  %780 = vmatpush2.msra.mxu0 0.0
  %781 = vmatprep.subr.mxu0 0.0
  %782 = vmatpush2.msra.mxu0 0.0
  %783 = vmatprep.subr.mxu0 0.0
  %784 = vmatpush2.msra.mxu0 0.0
  %785 = vmatprep.subr.mxu0 0.0
  %786 = vmatpush2.msra.mxu0 0.0
  %787 = vmatprep.subr.mxu0 0.0
  %788 = vmatpush2.msra.mxu0 0.0
  %789 = vmatprep.subr.mxu0 0.0
  %790 = vmatpush2.msra.mxu0 0.0
  %791 = vmatprep.subr.mxu0 0.0
  %792 = vmatpush2.msra.mxu0 0.0
  %793 = vmatprep.subr.mxu0 0.0
  %794 = vmatpush2.msra.mxu0 0.0
  %795 = vmatprep.subr.mxu0 0.0
  %796 = vmatpush2.msra.mxu0 0.0
  %797 = vmatprep.subr.mxu0 0.0
  %798 = vmatpush2.msra.mxu0 0.0
  %799 = vmatprep.subr.mxu0 0.0
  %800 = vmatpush2.msra.mxu0 0.0
  %801 = vmatprep.subr.mxu0 0.0
  %802 = vmatpush2.msra.mxu0 0.0
  %803 = vmatprep.subr.mxu0 0.0
  %804 = vmatpush2.msra.mxu0 0.0
  %805 = vmatprep.mubr.f32.mxu0 0.0
  %806 = vmatmul.mubr.f32.gmra.mxu0 %v666
  %v807 = vpop.f32.mrf.mxu0
  %v808 = vadd.f32 0.0, %v807
  %v809 = vpop.f32.mrf.mxu0
  %810 = vdwg.mxu0
  %v811 = vadd.f32 %v740, %v808
  %v812 = vxor.u32 %v811, 2147483648
  %v813 = vmul.f32 %v812, 1.442695
  %v814 = vpow.pop %v813
  %v815 = vadd.f32 %v814, 1.0
  %v816 = vrcp.pop %v815
  %v817 = vmul.f32 1.0, %v816
  %v818 = vtanh.pop %v811
  %v819 = vmul.f32 %v817, %v656
  %821 = vrot.lane.b32.xlu0 %v818, 64
  %v822 = vpop.permute.xlu0 %821
  %v824 = vmul.f32 %v817, %v822
  %826 = vrot.lane.b32.xlu0 %v824, 32
  %v827 = vpop.permute.xlu0 %826
  %v829 = vadd.f32 %v819, %v827
  %v830 = vtanh.pop %v829
  %832 = vrot.lane.b32.xlu0 %v830, 64
  %v833 = vpop.permute.xlu0 %832
  %v835 = vmul.f32 %v817, %v833
  %837 = vrot.lane.b32.xlu0 %v835, 32
  %v838 = vpop.permute.xlu0 %837
  %v839 = vsel %vm208, %v838, 0
  %841 = vmatprep.subr.mxu0 0.0
  %842 = vmatpush1.msra.mxu0 0.0
  %843 = vmatprep.subr.mxu0 0.0
  %844 = vmatpush1.msra.mxu0 0.0
  %845 = vmatprep.subr.mxu0 0.0
  %846 = vmatpush1.msra.mxu0 0.0
  %847 = vmatprep.subr.mxu0 0.0
  %848 = vmatpush1.msra.mxu0 0.0
  %849 = vmatprep.subr.mxu0 0.0
  %850 = vmatpush1.msra.mxu0 0.0
  %851 = vmatprep.subr.mxu0 0.0
  %852 = vmatpush1.msra.mxu0 0.0
  %853 = vmatprep.subr.mxu0 0.0
  %854 = vmatpush1.msra.mxu0 0.0
  %855 = vmatprep.subr.mxu0 0.0
  %856 = vmatpush1.msra.mxu0 0.0
  %857 = vmatprep.subr.mxu0 0.0
  %858 = vmatpush1.msra.mxu0 0.0
  %859 = vmatprep.subr.mxu0 0.0
  %860 = vmatpush1.msra.mxu0 0.0
  %861 = vmatprep.subr.mxu0 0.0
  %862 = vmatpush1.msra.mxu0 0.0
  %863 = vmatprep.subr.mxu0 0.0
  %864 = vmatpush1.msra.mxu0 0.0
  %865 = vmatprep.subr.mxu0 0.0
  %866 = vmatpush1.msra.mxu0 %v203
  %867 = vmatprep.subr.mxu0 0.0
  %868 = vmatpush1.msra.mxu0 %v202
  %869 = vmatprep.subr.mxu0 0.0
  %870 = vmatpush1.msra.mxu0 %v201
  %871 = vmatprep.subr.mxu0 0.0
  %872 = vmatpush1.msra.mxu0 %v200
  %873 = vmatprep.subr.mxu0 0.0
  %874 = vmatpush2.msra.mxu0 0.0
  %875 = vmatprep.subr.mxu0 0.0
  %876 = vmatpush2.msra.mxu0 0.0
  %877 = vmatprep.subr.mxu0 0.0
  %878 = vmatpush2.msra.mxu0 0.0
  %879 = vmatprep.subr.mxu0 0.0
  %880 = vmatpush2.msra.mxu0 0.0
  %881 = vmatprep.subr.mxu0 0.0
  %882 = vmatpush2.msra.mxu0 0.0
  %883 = vmatprep.subr.mxu0 0.0
  %884 = vmatpush2.msra.mxu0 0.0
  %885 = vmatprep.subr.mxu0 0.0
  %886 = vmatpush2.msra.mxu0 0.0
  %887 = vmatprep.subr.mxu0 0.0
  %888 = vmatpush2.msra.mxu0 0.0
  %889 = vmatprep.subr.mxu0 0.0
  %890 = vmatpush2.msra.mxu0 0.0
  %891 = vmatprep.subr.mxu0 0.0
  %892 = vmatpush2.msra.mxu0 0.0
  %893 = vmatprep.subr.mxu0 0.0
  %894 = vmatpush2.msra.mxu0 0.0
  %895 = vmatprep.subr.mxu0 0.0
  %896 = vmatpush2.msra.mxu0 0.0
  %897 = vmatprep.subr.mxu0 0.0
  %898 = vmatpush2.msra.mxu0 0.0
  %899 = vmatprep.subr.mxu0 0.0
  %900 = vmatpush2.msra.mxu0 0.0
  %901 = vmatprep.subr.mxu0 0.0
  %902 = vmatpush2.msra.mxu0 0.0
  %903 = vmatprep.subr.mxu0 0.0
  %904 = vmatpush2.msra.mxu0 0.0
  %905 = vmatprep.mubr.f32.mxu0 0.0
  %906 = vmatmul.mubr.f32.gmra.mxu0 %v839
  %v907 = vpop.f32.mrf.mxu0
  %v908 = vadd.f32 %v315, %v907
  %v909 = vpop.f32.mrf.mxu0
  %910 = vdwg.mxu0
  %911 = vst [vmem:[%s739] sm:$0xff] %v908
  %s912 = scalar_lea.vmem [#allocation2], 32
  %v913 = vld [vmem:[%s912] sm:$0xff]
  %914 = vmatprep.subr.mxu0 0.0
  %915 = vmatpush1.msra.mxu0 0.0
  %916 = vmatprep.subr.mxu0 0.0
  %917 = vmatpush1.msra.mxu0 0.0
  %918 = vmatprep.subr.mxu0 0.0
  %919 = vmatpush1.msra.mxu0 0.0
  %920 = vmatprep.subr.mxu0 0.0
  %921 = vmatpush1.msra.mxu0 0.0
  %922 = vmatprep.subr.mxu0 0.0
  %923 = vmatpush1.msra.mxu0 0.0
  %924 = vmatprep.subr.mxu0 0.0
  %925 = vmatpush1.msra.mxu0 0.0
  %926 = vmatprep.subr.mxu0 0.0
  %927 = vmatpush1.msra.mxu0 0.0
  %928 = vmatprep.subr.mxu0 0.0
  %929 = vmatpush1.msra.mxu0 0.0
  %930 = vmatprep.subr.mxu0 0.0
  %931 = vmatpush1.msra.mxu0 0.0
  %932 = vmatprep.subr.mxu0 0.0
  %933 = vmatpush1.msra.mxu0 0.0
  %934 = vmatprep.subr.mxu0 0.0
  %935 = vmatpush1.msra.mxu0 0.0
  %936 = vmatprep.subr.mxu0 0.0
  %937 = vmatpush1.msra.mxu0 0.0
  %938 = vmatprep.subr.mxu0 0.0
  %939 = vmatpush1.msra.mxu0 %v199
  %940 = vmatprep.subr.mxu0 0.0
  %941 = vmatpush1.msra.mxu0 %v198
  %942 = vmatprep.subr.mxu0 0.0
  %943 = vmatpush1.msra.mxu0 %v197
  %944 = vmatprep.subr.mxu0 0.0
  %945 = vmatpush1.msra.mxu0 %v196
  %946 = vmatprep.subr.mxu0 0.0
  %947 = vmatpush2.msra.mxu0 0.0
  %948 = vmatprep.subr.mxu0 0.0
  %949 = vmatpush2.msra.mxu0 0.0
  %950 = vmatprep.subr.mxu0 0.0
  %951 = vmatpush2.msra.mxu0 0.0
  %952 = vmatprep.subr.mxu0 0.0
  %953 = vmatpush2.msra.mxu0 0.0
  %954 = vmatprep.subr.mxu0 0.0
  %955 = vmatpush2.msra.mxu0 0.0
  %956 = vmatprep.subr.mxu0 0.0
  %957 = vmatpush2.msra.mxu0 0.0
  %958 = vmatprep.subr.mxu0 0.0
  %959 = vmatpush2.msra.mxu0 0.0
  %960 = vmatprep.subr.mxu0 0.0
  %961 = vmatpush2.msra.mxu0 0.0
  %962 = vmatprep.subr.mxu0 0.0
  %963 = vmatpush2.msra.mxu0 0.0
  %964 = vmatprep.subr.mxu0 0.0
  %965 = vmatpush2.msra.mxu0 0.0
  %966 = vmatprep.subr.mxu0 0.0
  %967 = vmatpush2.msra.mxu0 0.0
  %968 = vmatprep.subr.mxu0 0.0
  %969 = vmatpush2.msra.mxu0 0.0
  %970 = vmatprep.subr.mxu0 0.0
  %971 = vmatpush2.msra.mxu0 0.0
  %972 = vmatprep.subr.mxu0 0.0
  %973 = vmatpush2.msra.mxu0 0.0
  %974 = vmatprep.subr.mxu0 0.0
  %975 = vmatpush2.msra.mxu0 0.0
  %976 = vmatprep.subr.mxu0 0.0
  %977 = vmatpush2.msra.mxu0 0.0
  %978 = vmatprep.mubr.f32.mxu0 0.0
  %979 = vmatmul.mubr.f32.gmra.mxu0 %v839
  %v980 = vpop.f32.mrf.mxu0
  %v981 = vadd.f32 0.0, %v980
  %v982 = vpop.f32.mrf.mxu0
  %983 = vdwg.mxu0
  %v984 = vadd.f32 %v913, %v981
  %v985 = vxor.u32 %v984, 2147483648
  %v986 = vmul.f32 %v985, 1.442695
  %v987 = vpow.pop %v986
  %v988 = vadd.f32 %v987, 1.0
  %v989 = vrcp.pop %v988
  %v990 = vmul.f32 1.0, %v989
  %v991 = vtanh.pop %v984
  %v992 = vmul.f32 %v990, %v829
  %994 = vrot.lane.b32.xlu0 %v991, 64
  %v995 = vpop.permute.xlu0 %994
  %v997 = vmul.f32 %v990, %v995
  %999 = vrot.lane.b32.xlu0 %v997, 32
  %v1000 = vpop.permute.xlu0 %999
  %v1002 = vadd.f32 %v992, %v1000
  %v1003 = vtanh.pop %v1002
  %1005 = vrot.lane.b32.xlu0 %v1003, 64
  %v1006 = vpop.permute.xlu0 %1005
  %v1008 = vmul.f32 %v990, %v1006
  %1010 = vrot.lane.b32.xlu0 %v1008, 32
  %v1011 = vpop.permute.xlu0 %1010
  %v1012 = vsel %vm208, %v1011, 0
  %1014 = vmatprep.subr.mxu0 0.0
  %1015 = vmatpush1.msra.mxu0 0.0
  %1016 = vmatprep.subr.mxu0 0.0
  %1017 = vmatpush1.msra.mxu0 0.0
  %1018 = vmatprep.subr.mxu0 0.0
  %1019 = vmatpush1.msra.mxu0 0.0
  %1020 = vmatprep.subr.mxu0 0.0
  %1021 = vmatpush1.msra.mxu0 0.0
  %1022 = vmatprep.subr.mxu0 0.0
  %1023 = vmatpush1.msra.mxu0 0.0
  %1024 = vmatprep.subr.mxu0 0.0
  %1025 = vmatpush1.msra.mxu0 0.0
  %1026 = vmatprep.subr.mxu0 0.0
  %1027 = vmatpush1.msra.mxu0 0.0
  %1028 = vmatprep.subr.mxu0 0.0
  %1029 = vmatpush1.msra.mxu0 0.0
  %1030 = vmatprep.subr.mxu0 0.0
  %1031 = vmatpush1.msra.mxu0 0.0
  %1032 = vmatprep.subr.mxu0 0.0
  %1033 = vmatpush1.msra.mxu0 0.0
  %1034 = vmatprep.subr.mxu0 0.0
  %1035 = vmatpush1.msra.mxu0 0.0
  %1036 = vmatprep.subr.mxu0 0.0
  %1037 = vmatpush1.msra.mxu0 0.0
  %1038 = vmatprep.subr.mxu0 0.0
  %1039 = vmatpush1.msra.mxu0 %v203
  %1040 = vmatprep.subr.mxu0 0.0
  %1041 = vmatpush1.msra.mxu0 %v202
  %1042 = vmatprep.subr.mxu0 0.0
  %1043 = vmatpush1.msra.mxu0 %v201
  %1044 = vmatprep.subr.mxu0 0.0
  %1045 = vmatpush1.msra.mxu0 %v200
  %1046 = vmatprep.subr.mxu0 0.0
  %1047 = vmatpush2.msra.mxu0 0.0
  %1048 = vmatprep.subr.mxu0 0.0
  %1049 = vmatpush2.msra.mxu0 0.0
  %1050 = vmatprep.subr.mxu0 0.0
  %1051 = vmatpush2.msra.mxu0 0.0
  %1052 = vmatprep.subr.mxu0 0.0
  %1053 = vmatpush2.msra.mxu0 0.0
  %1054 = vmatprep.subr.mxu0 0.0
  %1055 = vmatpush2.msra.mxu0 0.0
  %1056 = vmatprep.subr.mxu0 0.0
  %1057 = vmatpush2.msra.mxu0 0.0
  %1058 = vmatprep.subr.mxu0 0.0
  %1059 = vmatpush2.msra.mxu0 0.0
  %1060 = vmatprep.subr.mxu0 0.0
  %1061 = vmatpush2.msra.mxu0 0.0
  %1062 = vmatprep.subr.mxu0 0.0
  %1063 = vmatpush2.msra.mxu0 0.0
  %1064 = vmatprep.subr.mxu0 0.0
  %1065 = vmatpush2.msra.mxu0 0.0
  %1066 = vmatprep.subr.mxu0 0.0
  %1067 = vmatpush2.msra.mxu0 0.0
  %1068 = vmatprep.subr.mxu0 0.0
  %1069 = vmatpush2.msra.mxu0 0.0
  %1070 = vmatprep.subr.mxu0 0.0
  %1071 = vmatpush2.msra.mxu0 0.0
  %1072 = vmatprep.subr.mxu0 0.0
  %1073 = vmatpush2.msra.mxu0 0.0
  %1074 = vmatprep.subr.mxu0 0.0
  %1075 = vmatpush2.msra.mxu0 0.0
  %1076 = vmatprep.subr.mxu0 0.0
  %1077 = vmatpush2.msra.mxu0 0.0
  %1078 = vmatprep.mubr.f32.mxu0 0.0
  %1079 = vmatmul.mubr.f32.gmra.mxu0 %v1012
  %v1080 = vpop.f32.mrf.mxu0
  %v1081 = vadd.f32 %v315, %v1080
  %v1082 = vpop.f32.mrf.mxu0
  %1083 = vdwg.mxu0
  %1084 = vst [vmem:[%s912] sm:$0xff] %v1081
  %s1085 = scalar_lea.vmem [#allocation2], 40
  %v1086 = vld [vmem:[%s1085] sm:$0xff]
  %1087 = vmatprep.subr.mxu0 0.0
  %1088 = vmatpush1.msra.mxu0 0.0
  %1089 = vmatprep.subr.mxu0 0.0
  %1090 = vmatpush1.msra.mxu0 0.0
  %1091 = vmatprep.subr.mxu0 0.0
  %1092 = vmatpush1.msra.mxu0 0.0
  %1093 = vmatprep.subr.mxu0 0.0
  %1094 = vmatpush1.msra.mxu0 0.0
  %1095 = vmatprep.subr.mxu0 0.0
  %1096 = vmatpush1.msra.mxu0 0.0
  %1097 = vmatprep.subr.mxu0 0.0
  %1098 = vmatpush1.msra.mxu0 0.0
  %1099 = vmatprep.subr.mxu0 0.0
  %1100 = vmatpush1.msra.mxu0 0.0
  %1101 = vmatprep.subr.mxu0 0.0
  %1102 = vmatpush1.msra.mxu0 0.0
  %1103 = vmatprep.subr.mxu0 0.0
  %1104 = vmatpush1.msra.mxu0 0.0
  %1105 = vmatprep.subr.mxu0 0.0
  %1106 = vmatpush1.msra.mxu0 0.0
  %1107 = vmatprep.subr.mxu0 0.0
  %1108 = vmatpush1.msra.mxu0 0.0
  %1109 = vmatprep.subr.mxu0 0.0
  %1110 = vmatpush1.msra.mxu0 0.0
  %1111 = vmatprep.subr.mxu0 0.0
  %1112 = vmatpush1.msra.mxu0 %v199
  %1113 = vmatprep.subr.mxu0 0.0
  %1114 = vmatpush1.msra.mxu0 %v198
  %1115 = vmatprep.subr.mxu0 0.0
  %1116 = vmatpush1.msra.mxu0 %v197
  %1117 = vmatprep.subr.mxu0 0.0
  %1118 = vmatpush1.msra.mxu0 %v196
  %1119 = vmatprep.subr.mxu0 0.0
  %1120 = vmatpush2.msra.mxu0 0.0
  %1121 = vmatprep.subr.mxu0 0.0
  %1122 = vmatpush2.msra.mxu0 0.0
  %1123 = vmatprep.subr.mxu0 0.0
  %1124 = vmatpush2.msra.mxu0 0.0
  %1125 = vmatprep.subr.mxu0 0.0
  %1126 = vmatpush2.msra.mxu0 0.0
  %1127 = vmatprep.subr.mxu0 0.0
  %1128 = vmatpush2.msra.mxu0 0.0
  %1129 = vmatprep.subr.mxu0 0.0
  %1130 = vmatpush2.msra.mxu0 0.0
  %1131 = vmatprep.subr.mxu0 0.0
  %1132 = vmatpush2.msra.mxu0 0.0
  %1133 = vmatprep.subr.mxu0 0.0
  %1134 = vmatpush2.msra.mxu0 0.0
  %1135 = vmatprep.subr.mxu0 0.0
  %1136 = vmatpush2.msra.mxu0 0.0
  %1137 = vmatprep.subr.mxu0 0.0
  %1138 = vmatpush2.msra.mxu0 0.0
  %1139 = vmatprep.subr.mxu0 0.0
  %1140 = vmatpush2.msra.mxu0 0.0
  %1141 = vmatprep.subr.mxu0 0.0
  %1142 = vmatpush2.msra.mxu0 0.0
  %1143 = vmatprep.subr.mxu0 0.0
  %1144 = vmatpush2.msra.mxu0 0.0
  %1145 = vmatprep.subr.mxu0 0.0
  %1146 = vmatpush2.msra.mxu0 0.0
  %1147 = vmatprep.subr.mxu0 0.0
  %1148 = vmatpush2.msra.mxu0 0.0
  %1149 = vmatprep.subr.mxu0 0.0
  %1150 = vmatpush2.msra.mxu0 0.0
  %1151 = vmatprep.mubr.f32.mxu0 0.0
  %1152 = vmatmul.mubr.f32.gmra.mxu0 %v1012
  %v1153 = vpop.f32.mrf.mxu0
  %v1154 = vadd.f32 0.0, %v1153
  %v1155 = vpop.f32.mrf.mxu0
  %1156 = vdwg.mxu0
  %v1157 = vadd.f32 %v1086, %v1154
  %v1158 = vxor.u32 %v1157, 2147483648
  %v1159 = vmul.f32 %v1158, 1.442695
  %v1160 = vpow.pop %v1159
  %v1161 = vadd.f32 %v1160, 1.0
  %v1162 = vrcp.pop %v1161
  %v1163 = vmul.f32 1.0, %v1162
  %v1164 = vtanh.pop %v1157
  %v1165 = vmul.f32 %v1163, %v1002
  %1167 = vrot.lane.b32.xlu0 %v1164, 64
  %v1168 = vpop.permute.xlu0 %1167
  %v1170 = vmul.f32 %v1163, %v1168
  %1172 = vrot.lane.b32.xlu0 %v1170, 32
  %v1173 = vpop.permute.xlu0 %1172
  %v1175 = vadd.f32 %v1165, %v1173
  %v1176 = vtanh.pop %v1175
  %1178 = vrot.lane.b32.xlu0 %v1176, 64
  %v1179 = vpop.permute.xlu0 %1178
  %v1181 = vmul.f32 %v1163, %v1179
  %1183 = vrot.lane.b32.xlu0 %v1181, 32
  %v1184 = vpop.permute.xlu0 %1183
  %v1185 = vsel %vm208, %v1184, 0
  %1187 = vmatprep.subr.mxu0 0.0
  %1188 = vmatpush1.msra.mxu0 0.0
  %1189 = vmatprep.subr.mxu0 0.0
  %1190 = vmatpush1.msra.mxu0 0.0
  %1191 = vmatprep.subr.mxu0 0.0
  %1192 = vmatpush1.msra.mxu0 0.0
  %1193 = vmatprep.subr.mxu0 0.0
  %1194 = vmatpush1.msra.mxu0 0.0
  %1195 = vmatprep.subr.mxu0 0.0
  %1196 = vmatpush1.msra.mxu0 0.0
  %1197 = vmatprep.subr.mxu0 0.0
  %1198 = vmatpush1.msra.mxu0 0.0
  %1199 = vmatprep.subr.mxu0 0.0
  %1200 = vmatpush1.msra.mxu0 0.0
  %1201 = vmatprep.subr.mxu0 0.0
  %1202 = vmatpush1.msra.mxu0 0.0
  %1203 = vmatprep.subr.mxu0 0.0
  %1204 = vmatpush1.msra.mxu0 0.0
  %1205 = vmatprep.subr.mxu0 0.0
  %1206 = vmatpush1.msra.mxu0 0.0
  %1207 = vmatprep.subr.mxu0 0.0
  %1208 = vmatpush1.msra.mxu0 0.0
  %1209 = vmatprep.subr.mxu0 0.0
  %1210 = vmatpush1.msra.mxu0 0.0
  %1211 = vmatprep.subr.mxu0 0.0
  %1212 = vmatpush1.msra.mxu0 %v203
  %1213 = vmatprep.subr.mxu0 0.0
  %1214 = vmatpush1.msra.mxu0 %v202
  %1215 = vmatprep.subr.mxu0 0.0
  %1216 = vmatpush1.msra.mxu0 %v201
  %1217 = vmatprep.subr.mxu0 0.0
  %1218 = vmatpush1.msra.mxu0 %v200
  %1219 = vmatprep.subr.mxu0 0.0
  %1220 = vmatpush2.msra.mxu0 0.0
  %1221 = vmatprep.subr.mxu0 0.0
  %1222 = vmatpush2.msra.mxu0 0.0
  %1223 = vmatprep.subr.mxu0 0.0
  %1224 = vmatpush2.msra.mxu0 0.0
  %1225 = vmatprep.subr.mxu0 0.0
  %1226 = vmatpush2.msra.mxu0 0.0
  %1227 = vmatprep.subr.mxu0 0.0
  %1228 = vmatpush2.msra.mxu0 0.0
  %1229 = vmatprep.subr.mxu0 0.0
  %1230 = vmatpush2.msra.mxu0 0.0
  %1231 = vmatprep.subr.mxu0 0.0
  %1232 = vmatpush2.msra.mxu0 0.0
  %1233 = vmatprep.subr.mxu0 0.0
  %1234 = vmatpush2.msra.mxu0 0.0
  %1235 = vmatprep.subr.mxu0 0.0
  %1236 = vmatpush2.msra.mxu0 0.0
  %1237 = vmatprep.subr.mxu0 0.0
  %1238 = vmatpush2.msra.mxu0 0.0
  %1239 = vmatprep.subr.mxu0 0.0
  %1240 = vmatpush2.msra.mxu0 0.0
  %1241 = vmatprep.subr.mxu0 0.0
  %1242 = vmatpush2.msra.mxu0 0.0
  %1243 = vmatprep.subr.mxu0 0.0
  %1244 = vmatpush2.msra.mxu0 0.0
  %1245 = vmatprep.subr.mxu0 0.0
  %1246 = vmatpush2.msra.mxu0 0.0
  %1247 = vmatprep.subr.mxu0 0.0
  %1248 = vmatpush2.msra.mxu0 0.0
  %1249 = vmatprep.subr.mxu0 0.0
  %1250 = vmatpush2.msra.mxu0 0.0
  %1251 = vmatprep.mubr.f32.mxu0 0.0
  %1252 = vmatmul.mubr.f32.gmra.mxu0 %v1185
  %v1253 = vpop.f32.mrf.mxu0
  %v1254 = vadd.f32 %v315, %v1253
  %v1255 = vpop.f32.mrf.mxu0
  %1256 = vdwg.mxu0
  %1257 = vst [vmem:[%s1085] sm:$0xff] %v1254
  %s1258 = scalar_lea.vmem [#allocation2], 48
  %v1259 = vld [vmem:[%s1258] sm:$0xff]
  %1260 = vmatprep.subr.mxu0 0.0
  %1261 = vmatpush1.msra.mxu0 0.0
  %1262 = vmatprep.subr.mxu0 0.0
  %1263 = vmatpush1.msra.mxu0 0.0
  %1264 = vmatprep.subr.mxu0 0.0
  %1265 = vmatpush1.msra.mxu0 0.0
  %1266 = vmatprep.subr.mxu0 0.0
  %1267 = vmatpush1.msra.mxu0 0.0
  %1268 = vmatprep.subr.mxu0 0.0
  %1269 = vmatpush1.msra.mxu0 0.0
  %1270 = vmatprep.subr.mxu0 0.0
  %1271 = vmatpush1.msra.mxu0 0.0
  %1272 = vmatprep.subr.mxu0 0.0
  %1273 = vmatpush1.msra.mxu0 0.0
  %1274 = vmatprep.subr.mxu0 0.0
  %1275 = vmatpush1.msra.mxu0 0.0
  %1276 = vmatprep.subr.mxu0 0.0
  %1277 = vmatpush1.msra.mxu0 0.0
  %1278 = vmatprep.subr.mxu0 0.0
  %1279 = vmatpush1.msra.mxu0 0.0
  %1280 = vmatprep.subr.mxu0 0.0
  %1281 = vmatpush1.msra.mxu0 0.0
  %1282 = vmatprep.subr.mxu0 0.0
  %1283 = vmatpush1.msra.mxu0 0.0
  %1284 = vmatprep.subr.mxu0 0.0
  %1285 = vmatpush1.msra.mxu0 %v199
  %1286 = vmatprep.subr.mxu0 0.0
  %1287 = vmatpush1.msra.mxu0 %v198
  %1288 = vmatprep.subr.mxu0 0.0
  %1289 = vmatpush1.msra.mxu0 %v197
  %1290 = vmatprep.subr.mxu0 0.0
  %1291 = vmatpush1.msra.mxu0 %v196
  %1292 = vmatprep.subr.mxu0 0.0
  %1293 = vmatpush2.msra.mxu0 0.0
  %1294 = vmatprep.subr.mxu0 0.0
  %1295 = vmatpush2.msra.mxu0 0.0
  %1296 = vmatprep.subr.mxu0 0.0
  %1297 = vmatpush2.msra.mxu0 0.0
  %1298 = vmatprep.subr.mxu0 0.0
  %1299 = vmatpush2.msra.mxu0 0.0
  %1300 = vmatprep.subr.mxu0 0.0
  %1301 = vmatpush2.msra.mxu0 0.0
  %1302 = vmatprep.subr.mxu0 0.0
  %1303 = vmatpush2.msra.mxu0 0.0
  %1304 = vmatprep.subr.mxu0 0.0
  %1305 = vmatpush2.msra.mxu0 0.0
  %1306 = vmatprep.subr.mxu0 0.0
  %1307 = vmatpush2.msra.mxu0 0.0
  %1308 = vmatprep.subr.mxu0 0.0
  %1309 = vmatpush2.msra.mxu0 0.0
  %1310 = vmatprep.subr.mxu0 0.0
  %1311 = vmatpush2.msra.mxu0 0.0
  %1312 = vmatprep.subr.mxu0 0.0
  %1313 = vmatpush2.msra.mxu0 0.0
  %1314 = vmatprep.subr.mxu0 0.0
  %1315 = vmatpush2.msra.mxu0 0.0
  %1316 = vmatprep.subr.mxu0 0.0
  %1317 = vmatpush2.msra.mxu0 0.0
  %1318 = vmatprep.subr.mxu0 0.0
  %1319 = vmatpush2.msra.mxu0 0.0
  %1320 = vmatprep.subr.mxu0 0.0
  %1321 = vmatpush2.msra.mxu0 0.0
  %1322 = vmatprep.subr.mxu0 0.0
  %1323 = vmatpush2.msra.mxu0 0.0
  %1324 = vmatprep.mubr.f32.mxu0 0.0
  %1325 = vmatmul.mubr.f32.gmra.mxu0 %v1185
  %v1326 = vpop.f32.mrf.mxu0
  %v1327 = vadd.f32 0.0, %v1326
  %v1328 = vpop.f32.mrf.mxu0
  %1329 = vdwg.mxu0
  %v1330 = vadd.f32 %v1259, %v1327
  %v1331 = vxor.u32 %v1330, 2147483648
  %v1332 = vmul.f32 %v1331, 1.442695
  %v1333 = vpow.pop %v1332
  %v1334 = vadd.f32 %v1333, 1.0
  %v1335 = vrcp.pop %v1334
  %v1336 = vmul.f32 1.0, %v1335
  %v1337 = vtanh.pop %v1330
  %v1338 = vmul.f32 %v1336, %v1175
  %1340 = vrot.lane.b32.xlu0 %v1337, 64
  %v1341 = vpop.permute.xlu0 %1340
  %v1343 = vmul.f32 %v1336, %v1341
  %1345 = vrot.lane.b32.xlu0 %v1343, 32
  %v1346 = vpop.permute.xlu0 %1345
  %v1348 = vadd.f32 %v1338, %v1346
  %v1349 = vtanh.pop %v1348
  %1351 = vrot.lane.b32.xlu0 %v1349, 64
  %v1352 = vpop.permute.xlu0 %1351
  %v1354 = vmul.f32 %v1336, %v1352
  %1356 = vrot.lane.b32.xlu0 %v1354, 32
  %v1357 = vpop.permute.xlu0 %1356
  %v1358 = vsel %vm208, %v1357, 0
  %1360 = vmatprep.subr.mxu0 0.0
  %1361 = vmatpush1.msra.mxu0 0.0
  %1362 = vmatprep.subr.mxu0 0.0
  %1363 = vmatpush1.msra.mxu0 0.0
  %1364 = vmatprep.subr.mxu0 0.0
  %1365 = vmatpush1.msra.mxu0 0.0
  %1366 = vmatprep.subr.mxu0 0.0
  %1367 = vmatpush1.msra.mxu0 0.0
  %1368 = vmatprep.subr.mxu0 0.0
  %1369 = vmatpush1.msra.mxu0 0.0
  %1370 = vmatprep.subr.mxu0 0.0
  %1371 = vmatpush1.msra.mxu0 0.0
  %1372 = vmatprep.subr.mxu0 0.0
  %1373 = vmatpush1.msra.mxu0 0.0
  %1374 = vmatprep.subr.mxu0 0.0
  %1375 = vmatpush1.msra.mxu0 0.0
  %1376 = vmatprep.subr.mxu0 0.0
  %1377 = vmatpush1.msra.mxu0 0.0
  %1378 = vmatprep.subr.mxu0 0.0
  %1379 = vmatpush1.msra.mxu0 0.0
  %1380 = vmatprep.subr.mxu0 0.0
  %1381 = vmatpush1.msra.mxu0 0.0
  %1382 = vmatprep.subr.mxu0 0.0
  %1383 = vmatpush1.msra.mxu0 0.0
  %1384 = vmatprep.subr.mxu0 0.0
  %1385 = vmatpush1.msra.mxu0 %v203
  %1386 = vmatprep.subr.mxu0 0.0
  %1387 = vmatpush1.msra.mxu0 %v202
  %1388 = vmatprep.subr.mxu0 0.0
  %1389 = vmatpush1.msra.mxu0 %v201
  %1390 = vmatprep.subr.mxu0 0.0
  %1391 = vmatpush1.msra.mxu0 %v200
  %1392 = vmatprep.subr.mxu0 0.0
  %1393 = vmatpush2.msra.mxu0 0.0
  %1394 = vmatprep.subr.mxu0 0.0
  %1395 = vmatpush2.msra.mxu0 0.0
  %1396 = vmatprep.subr.mxu0 0.0
  %1397 = vmatpush2.msra.mxu0 0.0
  %1398 = vmatprep.subr.mxu0 0.0
  %1399 = vmatpush2.msra.mxu0 0.0
  %1400 = vmatprep.subr.mxu0 0.0
  %1401 = vmatpush2.msra.mxu0 0.0
  %1402 = vmatprep.subr.mxu0 0.0
  %1403 = vmatpush2.msra.mxu0 0.0
  %1404 = vmatprep.subr.mxu0 0.0
  %1405 = vmatpush2.msra.mxu0 0.0
  %1406 = vmatprep.subr.mxu0 0.0
  %1407 = vmatpush2.msra.mxu0 0.0
  %1408 = vmatprep.subr.mxu0 0.0
  %1409 = vmatpush2.msra.mxu0 0.0
  %1410 = vmatprep.subr.mxu0 0.0
  %1411 = vmatpush2.msra.mxu0 0.0
  %1412 = vmatprep.subr.mxu0 0.0
  %1413 = vmatpush2.msra.mxu0 0.0
  %1414 = vmatprep.subr.mxu0 0.0
  %1415 = vmatpush2.msra.mxu0 0.0
  %1416 = vmatprep.subr.mxu0 0.0
  %1417 = vmatpush2.msra.mxu0 0.0
  %1418 = vmatprep.subr.mxu0 0.0
  %1419 = vmatpush2.msra.mxu0 0.0
  %1420 = vmatprep.subr.mxu0 0.0
  %1421 = vmatpush2.msra.mxu0 0.0
  %1422 = vmatprep.subr.mxu0 0.0
  %1423 = vmatpush2.msra.mxu0 0.0
  %1424 = vmatprep.mubr.f32.mxu0 0.0
  %1425 = vmatmul.mubr.f32.gmra.mxu0 %v1358
  %v1426 = vpop.f32.mrf.mxu0
  %v1427 = vadd.f32 %v315, %v1426
  %v1428 = vpop.f32.mrf.mxu0
  %1429 = vdwg.mxu0
  %1430 = vst [vmem:[%s1258] sm:$0xff] %v1427
  %s1431 = scalar_lea.vmem [#allocation2], 56
  %v1432 = vld [vmem:[%s1431] sm:$0xff]
  %1433 = vmatprep.subr.mxu0 0.0
  %1434 = vmatpush1.msra.mxu0 0.0
  %1435 = vmatprep.subr.mxu0 0.0
  %1436 = vmatpush1.msra.mxu0 0.0
  %1437 = vmatprep.subr.mxu0 0.0
  %1438 = vmatpush1.msra.mxu0 0.0
  %1439 = vmatprep.subr.mxu0 0.0
  %1440 = vmatpush1.msra.mxu0 0.0
  %1441 = vmatprep.subr.mxu0 0.0
  %1442 = vmatpush1.msra.mxu0 0.0
  %1443 = vmatprep.subr.mxu0 0.0
  %1444 = vmatpush1.msra.mxu0 0.0
  %1445 = vmatprep.subr.mxu0 0.0
  %1446 = vmatpush1.msra.mxu0 0.0
  %1447 = vmatprep.subr.mxu0 0.0
  %1448 = vmatpush1.msra.mxu0 0.0
  %1449 = vmatprep.subr.mxu0 0.0
  %1450 = vmatpush1.msra.mxu0 0.0
  %1451 = vmatprep.subr.mxu0 0.0
  %1452 = vmatpush1.msra.mxu0 0.0
  %1453 = vmatprep.subr.mxu0 0.0
  %1454 = vmatpush1.msra.mxu0 0.0
  %1455 = vmatprep.subr.mxu0 0.0
  %1456 = vmatpush1.msra.mxu0 0.0
  %1457 = vmatprep.subr.mxu0 0.0
  %1458 = vmatpush1.msra.mxu0 %v199
  %1459 = vmatprep.subr.mxu0 0.0
  %1460 = vmatpush1.msra.mxu0 %v198
  %1461 = vmatprep.subr.mxu0 0.0
  %1462 = vmatpush1.msra.mxu0 %v197
  %1463 = vmatprep.subr.mxu0 0.0
  %1464 = vmatpush1.msra.mxu0 %v196
  %1465 = vmatprep.subr.mxu0 0.0
  %1466 = vmatpush2.msra.mxu0 0.0
  %1467 = vmatprep.subr.mxu0 0.0
  %1468 = vmatpush2.msra.mxu0 0.0
  %1469 = vmatprep.subr.mxu0 0.0
  %1470 = vmatpush2.msra.mxu0 0.0
  %1471 = vmatprep.subr.mxu0 0.0
  %1472 = vmatpush2.msra.mxu0 0.0
  %1473 = vmatprep.subr.mxu0 0.0
  %1474 = vmatpush2.msra.mxu0 0.0
  %1475 = vmatprep.subr.mxu0 0.0
  %1476 = vmatpush2.msra.mxu0 0.0
  %1477 = vmatprep.subr.mxu0 0.0
  %1478 = vmatpush2.msra.mxu0 0.0
  %1479 = vmatprep.subr.mxu0 0.0
  %1480 = vmatpush2.msra.mxu0 0.0
  %1481 = vmatprep.subr.mxu0 0.0
  %1482 = vmatpush2.msra.mxu0 0.0
  %1483 = vmatprep.subr.mxu0 0.0
  %1484 = vmatpush2.msra.mxu0 0.0
  %1485 = vmatprep.subr.mxu0 0.0
  %1486 = vmatpush2.msra.mxu0 0.0
  %1487 = vmatprep.subr.mxu0 0.0
  %1488 = vmatpush2.msra.mxu0 0.0
  %1489 = vmatprep.subr.mxu0 0.0
  %1490 = vmatpush2.msra.mxu0 0.0
  %1491 = vmatprep.subr.mxu0 0.0
  %1492 = vmatpush2.msra.mxu0 0.0
  %1493 = vmatprep.subr.mxu0 0.0
  %1494 = vmatpush2.msra.mxu0 0.0
  %1495 = vmatprep.subr.mxu0 0.0
  %1496 = vmatpush2.msra.mxu0 0.0
  %1497 = vmatprep.mubr.f32.mxu0 0.0
  %1498 = vmatmul.mubr.f32.gmra.mxu0 %v1358
  %v1499 = vpop.f32.mrf.mxu0
  %v1500 = vadd.f32 0.0, %v1499
  %v1501 = vpop.f32.mrf.mxu0
  %1502 = vdwg.mxu0
  %v1503 = vadd.f32 %v1432, %v1500
  %v1504 = vxor.u32 %v1503, 2147483648
  %v1505 = vmul.f32 %v1504, 1.442695
  %v1506 = vpow.pop %v1505
  %v1507 = vadd.f32 %v1506, 1.0
  %v1508 = vrcp.pop %v1507
  %v1509 = vmul.f32 1.0, %v1508
  %v1510 = vtanh.pop %v1503
  %v1511 = vmul.f32 %v1509, %v1348
  %1513 = vrot.lane.b32.xlu0 %v1510, 64
  %v1514 = vpop.permute.xlu0 %1513
  %v1516 = vmul.f32 %v1509, %v1514
  %1518 = vrot.lane.b32.xlu0 %v1516, 32
  %v1519 = vpop.permute.xlu0 %1518
  %v1521 = vadd.f32 %v1511, %v1519
  %v1522 = vtanh.pop %v1521
  %1524 = vrot.lane.b32.xlu0 %v1522, 64
  %v1525 = vpop.permute.xlu0 %1524
  %v1527 = vmul.f32 %v1509, %v1525
  %1529 = vrot.lane.b32.xlu0 %v1527, 32
  %v1530 = vpop.permute.xlu0 %1529
  %v1531 = vsel %vm208, %v1530, 0
  %1533 = vmatprep.subr.mxu0 0.0
  %1534 = vmatpush1.msra.mxu0 0.0
  %1535 = vmatprep.subr.mxu0 0.0
  %1536 = vmatpush1.msra.mxu0 0.0
  %1537 = vmatprep.subr.mxu0 0.0
  %1538 = vmatpush1.msra.mxu0 0.0
  %1539 = vmatprep.subr.mxu0 0.0
  %1540 = vmatpush1.msra.mxu0 0.0
  %1541 = vmatprep.subr.mxu0 0.0
  %1542 = vmatpush1.msra.mxu0 0.0
  %1543 = vmatprep.subr.mxu0 0.0
  %1544 = vmatpush1.msra.mxu0 0.0
  %1545 = vmatprep.subr.mxu0 0.0
  %1546 = vmatpush1.msra.mxu0 0.0
  %1547 = vmatprep.subr.mxu0 0.0
  %1548 = vmatpush1.msra.mxu0 0.0
  %1549 = vmatprep.subr.mxu0 0.0
  %1550 = vmatpush1.msra.mxu0 0.0
  %1551 = vmatprep.subr.mxu0 0.0
  %1552 = vmatpush1.msra.mxu0 0.0
  %1553 = vmatprep.subr.mxu0 0.0
  %1554 = vmatpush1.msra.mxu0 0.0
  %1555 = vmatprep.subr.mxu0 0.0
  %1556 = vmatpush1.msra.mxu0 0.0
  %1557 = vmatprep.subr.mxu0 0.0
  %1558 = vmatpush1.msra.mxu0 %v203
  %1559 = vmatprep.subr.mxu0 0.0
  %1560 = vmatpush1.msra.mxu0 %v202
  %1561 = vmatprep.subr.mxu0 0.0
  %1562 = vmatpush1.msra.mxu0 %v201
  %1563 = vmatprep.subr.mxu0 0.0
  %1564 = vmatpush1.msra.mxu0 %v200
  %1565 = vmatprep.subr.mxu0 0.0
  %1566 = vmatpush2.msra.mxu0 0.0
  %1567 = vmatprep.subr.mxu0 0.0
  %1568 = vmatpush2.msra.mxu0 0.0
  %1569 = vmatprep.subr.mxu0 0.0
  %1570 = vmatpush2.msra.mxu0 0.0
  %1571 = vmatprep.subr.mxu0 0.0
  %1572 = vmatpush2.msra.mxu0 0.0
  %1573 = vmatprep.subr.mxu0 0.0
  %1574 = vmatpush2.msra.mxu0 0.0
  %1575 = vmatprep.subr.mxu0 0.0
  %1576 = vmatpush2.msra.mxu0 0.0
  %1577 = vmatprep.subr.mxu0 0.0
  %1578 = vmatpush2.msra.mxu0 0.0
  %1579 = vmatprep.subr.mxu0 0.0
  %1580 = vmatpush2.msra.mxu0 0.0
  %1581 = vmatprep.subr.mxu0 0.0
  %1582 = vmatpush2.msra.mxu0 0.0
  %1583 = vmatprep.subr.mxu0 0.0
  %1584 = vmatpush2.msra.mxu0 0.0
  %1585 = vmatprep.subr.mxu0 0.0
  %1586 = vmatpush2.msra.mxu0 0.0
  %1587 = vmatprep.subr.mxu0 0.0
  %1588 = vmatpush2.msra.mxu0 0.0
  %1589 = vmatprep.subr.mxu0 0.0
  %1590 = vmatpush2.msra.mxu0 0.0
  %1591 = vmatprep.subr.mxu0 0.0
  %1592 = vmatpush2.msra.mxu0 0.0
  %1593 = vmatprep.subr.mxu0 0.0
  %1594 = vmatpush2.msra.mxu0 0.0
  %1595 = vmatprep.subr.mxu0 0.0
  %1596 = vmatpush2.msra.mxu0 0.0
  %1597 = vmatprep.mubr.f32.mxu0 0.0
  %1598 = vmatmul.mubr.f32.gmra.mxu0 %v1531
  %v1599 = vpop.f32.mrf.mxu0
  %v1600 = vadd.f32 %v315, %v1599
  %v1601 = vpop.f32.mrf.mxu0
  %1602 = vdwg.mxu0
  %1603 = vst [vmem:[%s1431] sm:$0xff] %v1600
  %1605 = vst.msk [vmem:[%s12] sm:$0xff] %vm208, %v1530
  %1607 = vrot.lane.b32.xlu0 %v1521, 96
  %v1608 = vpop.permute.xlu0 %1607
  %1610 = vst.msk [vmem:[%s13] sm:$0xff] %vm208, %v1608
  %v1611 = vld [vmem:[%s5] sm:$0xff]
  %v1612 = vld [vmem:[%s5 + $0x8] sm:$0xff]
  %v1613 = vld [vmem:[%s5 + $0x10] sm:$0xff]
  %v1614 = vld [vmem:[%s5 + $0x18] sm:$0xff]
  %s1615 = scalar_lea.vmem %s7, 8
  %v1616 = vld [vmem:[%s1615] sm:$0xff]
  %s1617 = scalar_lea.vmem %s8, 8
  %v1618 = vld [vmem:[%s1617] sm:$0xff]
  %v1619 = vld [vmem:[#allocation2] sm:$0xff]
  %v1621 = vsel %vm208, %v1616, 0
  %1623 = vmatprep.subr.mxu0 0.0
  %1624 = vmatpush1.msra.mxu0 0.0
  %1625 = vmatprep.subr.mxu0 0.0
  %1626 = vmatpush1.msra.mxu0 0.0
  %1627 = vmatprep.subr.mxu0 0.0
  %1628 = vmatpush1.msra.mxu0 0.0
  %1629 = vmatprep.subr.mxu0 0.0
  %1630 = vmatpush1.msra.mxu0 0.0
  %1631 = vmatprep.subr.mxu0 0.0
  %1632 = vmatpush1.msra.mxu0 0.0
  %1633 = vmatprep.subr.mxu0 0.0
  %1634 = vmatpush1.msra.mxu0 0.0
  %1635 = vmatprep.subr.mxu0 0.0
  %1636 = vmatpush1.msra.mxu0 0.0
  %1637 = vmatprep.subr.mxu0 0.0
  %1638 = vmatpush1.msra.mxu0 0.0
  %1639 = vmatprep.subr.mxu0 0.0
  %1640 = vmatpush1.msra.mxu0 0.0
  %1641 = vmatprep.subr.mxu0 0.0
  %1642 = vmatpush1.msra.mxu0 0.0
  %1643 = vmatprep.subr.mxu0 0.0
  %1644 = vmatpush1.msra.mxu0 0.0
  %1645 = vmatprep.subr.mxu0 0.0
  %1646 = vmatpush1.msra.mxu0 0.0
  %1647 = vmatprep.subr.mxu0 0.0
  %1648 = vmatpush1.msra.mxu0 %v1614
  %1649 = vmatprep.subr.mxu0 0.0
  %1650 = vmatpush1.msra.mxu0 %v1613
  %1651 = vmatprep.subr.mxu0 0.0
  %1652 = vmatpush1.msra.mxu0 %v1612
  %1653 = vmatprep.subr.mxu0 0.0
  %1654 = vmatpush1.msra.mxu0 %v1611
  %1655 = vmatprep.subr.mxu0 0.0
  %1656 = vmatpush2.msra.mxu0 0.0
  %1657 = vmatprep.subr.mxu0 0.0
  %1658 = vmatpush2.msra.mxu0 0.0
  %1659 = vmatprep.subr.mxu0 0.0
  %1660 = vmatpush2.msra.mxu0 0.0
  %1661 = vmatprep.subr.mxu0 0.0
  %1662 = vmatpush2.msra.mxu0 0.0
  %1663 = vmatprep.subr.mxu0 0.0
  %1664 = vmatpush2.msra.mxu0 0.0
  %1665 = vmatprep.subr.mxu0 0.0
  %1666 = vmatpush2.msra.mxu0 0.0
  %1667 = vmatprep.subr.mxu0 0.0
  %1668 = vmatpush2.msra.mxu0 0.0
  %1669 = vmatprep.subr.mxu0 0.0
  %1670 = vmatpush2.msra.mxu0 0.0
  %1671 = vmatprep.subr.mxu0 0.0
  %1672 = vmatpush2.msra.mxu0 0.0
  %1673 = vmatprep.subr.mxu0 0.0
  %1674 = vmatpush2.msra.mxu0 0.0
  %1675 = vmatprep.subr.mxu0 0.0
  %1676 = vmatpush2.msra.mxu0 0.0
  %1677 = vmatprep.subr.mxu0 0.0
  %1678 = vmatpush2.msra.mxu0 0.0
  %1679 = vmatprep.subr.mxu0 0.0
  %1680 = vmatpush2.msra.mxu0 0.0
  %1681 = vmatprep.subr.mxu0 0.0
  %1682 = vmatpush2.msra.mxu0 0.0
  %1683 = vmatprep.subr.mxu0 0.0
  %1684 = vmatpush2.msra.mxu0 0.0
  %1685 = vmatprep.subr.mxu0 0.0
  %1686 = vmatpush2.msra.mxu0 0.0
  %1687 = vmatprep.mubr.f32.mxu0 0.0
  %1688 = vmatmul.mubr.f32.gmra.mxu0 %v1621
  %v1689 = vpop.f32.mrf.mxu0
  %v1690 = vadd.f32 0.0, %v1689
  %v1691 = vpop.f32.mrf.mxu0
  %1692 = vdwg.mxu0
  %v1693 = vadd.f32 %v1619, %v1690
  %v1694 = vxor.u32 %v1693, 2147483648
  %v1695 = vmul.f32 %v1694, 1.442695
  %v1696 = vpow.pop %v1695
  %v1697 = vadd.f32 %v1696, 1.0
  %v1698 = vrcp.pop %v1697
  %v1699 = vmul.f32 1.0, %v1698
  %v1700 = vtanh.pop %v1693
  %1702 = vrot.lane.b32.xlu0 %v1618, 32
  %v1703 = vpop.permute.xlu0 %1702
  %v1705 = vmul.f32 %v1699, %v1703
  %1707 = vrot.lane.b32.xlu0 %v1700, 64
  %v1708 = vpop.permute.xlu0 %1707
  %v1710 = vmul.f32 %v1699, %v1708
  %1712 = vrot.lane.b32.xlu0 %v1710, 32
  %v1713 = vpop.permute.xlu0 %1712
  %v1715 = vadd.f32 %v1705, %v1713
  %v1716 = vtanh.pop %v1715
  %1718 = vrot.lane.b32.xlu0 %v1716, 64
  %v1719 = vpop.permute.xlu0 %1718
  %v1721 = vmul.f32 %v1699, %v1719
  %v1722 = vld [vmem:[%s393] sm:$0xff]
  %1724 = vrot.lane.b32.xlu0 %v1721, 32
  %v1725 = vpop.permute.xlu0 %1724
  %v1726 = vsel %vm208, %v1725, 0
  %1728 = vmatprep.subr.mxu0 0.0
  %1729 = vmatpush1.msra.mxu0 0.0
  %1730 = vmatprep.subr.mxu0 0.0
  %1731 = vmatpush1.msra.mxu0 0.0
  %1732 = vmatprep.subr.mxu0 0.0
  %1733 = vmatpush1.msra.mxu0 0.0
  %1734 = vmatprep.subr.mxu0 0.0
  %1735 = vmatpush1.msra.mxu0 0.0
  %1736 = vmatprep.subr.mxu0 0.0
  %1737 = vmatpush1.msra.mxu0 0.0
  %1738 = vmatprep.subr.mxu0 0.0
  %1739 = vmatpush1.msra.mxu0 0.0
  %1740 = vmatprep.subr.mxu0 0.0
  %1741 = vmatpush1.msra.mxu0 0.0
  %1742 = vmatprep.subr.mxu0 0.0
  %1743 = vmatpush1.msra.mxu0 0.0
  %1744 = vmatprep.subr.mxu0 0.0
  %1745 = vmatpush1.msra.mxu0 0.0
  %1746 = vmatprep.subr.mxu0 0.0
  %1747 = vmatpush1.msra.mxu0 0.0
  %1748 = vmatprep.subr.mxu0 0.0
  %1749 = vmatpush1.msra.mxu0 0.0
  %1750 = vmatprep.subr.mxu0 0.0
  %1751 = vmatpush1.msra.mxu0 0.0
  %1752 = vmatprep.subr.mxu0 0.0
  %1753 = vmatpush1.msra.mxu0 %v1614
  %1754 = vmatprep.subr.mxu0 0.0
  %1755 = vmatpush1.msra.mxu0 %v1613
  %1756 = vmatprep.subr.mxu0 0.0
  %1757 = vmatpush1.msra.mxu0 %v1612
  %1758 = vmatprep.subr.mxu0 0.0
  %1759 = vmatpush1.msra.mxu0 %v1611
  %1760 = vmatprep.subr.mxu0 0.0
  %1761 = vmatpush2.msra.mxu0 0.0
  %1762 = vmatprep.subr.mxu0 0.0
  %1763 = vmatpush2.msra.mxu0 0.0
  %1764 = vmatprep.subr.mxu0 0.0
  %1765 = vmatpush2.msra.mxu0 0.0
  %1766 = vmatprep.subr.mxu0 0.0
  %1767 = vmatpush2.msra.mxu0 0.0
  %1768 = vmatprep.subr.mxu0 0.0
  %1769 = vmatpush2.msra.mxu0 0.0
  %1770 = vmatprep.subr.mxu0 0.0
  %1771 = vmatpush2.msra.mxu0 0.0
  %1772 = vmatprep.subr.mxu0 0.0
  %1773 = vmatpush2.msra.mxu0 0.0
  %1774 = vmatprep.subr.mxu0 0.0
  %1775 = vmatpush2.msra.mxu0 0.0
  %1776 = vmatprep.subr.mxu0 0.0
  %1777 = vmatpush2.msra.mxu0 0.0
  %1778 = vmatprep.subr.mxu0 0.0
  %1779 = vmatpush2.msra.mxu0 0.0
  %1780 = vmatprep.subr.mxu0 0.0
  %1781 = vmatpush2.msra.mxu0 0.0
  %1782 = vmatprep.subr.mxu0 0.0
  %1783 = vmatpush2.msra.mxu0 0.0
  %1784 = vmatprep.subr.mxu0 0.0
  %1785 = vmatpush2.msra.mxu0 0.0
  %1786 = vmatprep.subr.mxu0 0.0
  %1787 = vmatpush2.msra.mxu0 0.0
  %1788 = vmatprep.subr.mxu0 0.0
  %1789 = vmatpush2.msra.mxu0 0.0
  %1790 = vmatprep.subr.mxu0 0.0
  %1791 = vmatpush2.msra.mxu0 0.0
  %1792 = vmatprep.mubr.f32.mxu0 0.0
  %1793 = vmatmul.mubr.f32.gmra.mxu0 %v1726
  %v1794 = vpop.f32.mrf.mxu0
  %v1795 = vadd.f32 0.0, %v1794
  %v1796 = vpop.f32.mrf.mxu0
  %1797 = vdwg.mxu0
  %v1798 = vadd.f32 %v1722, %v1795
  %v1799 = vxor.u32 %v1798, 2147483648
  %v1800 = vmul.f32 %v1799, 1.442695
  %v1801 = vpow.pop %v1800
  %v1802 = vadd.f32 %v1801, 1.0
  %v1803 = vrcp.pop %v1802
  %v1804 = vmul.f32 1.0, %v1803
  %v1805 = vtanh.pop %v1798
  %v1806 = vmul.f32 %v1804, %v1715
  %1808 = vrot.lane.b32.xlu0 %v1805, 64
  %v1809 = vpop.permute.xlu0 %1808
  %v1811 = vmul.f32 %v1804, %v1809
  %1813 = vrot.lane.b32.xlu0 %v1811, 32
  %v1814 = vpop.permute.xlu0 %1813
  %v1816 = vadd.f32 %v1806, %v1814
  %v1817 = vtanh.pop %v1816
  %1819 = vrot.lane.b32.xlu0 %v1817, 64
  %v1820 = vpop.permute.xlu0 %1819
  %v1822 = vmul.f32 %v1804, %v1820
  %v1823 = vld [vmem:[%s566] sm:$0xff]
  %1825 = vrot.lane.b32.xlu0 %v1822, 32
  %v1826 = vpop.permute.xlu0 %1825
  %v1827 = vsel %vm208, %v1826, 0
  %1829 = vmatprep.subr.mxu0 0.0
  %1830 = vmatpush1.msra.mxu0 0.0
  %1831 = vmatprep.subr.mxu0 0.0
  %1832 = vmatpush1.msra.mxu0 0.0
  %1833 = vmatprep.subr.mxu0 0.0
  %1834 = vmatpush1.msra.mxu0 0.0
  %1835 = vmatprep.subr.mxu0 0.0
  %1836 = vmatpush1.msra.mxu0 0.0
  %1837 = vmatprep.subr.mxu0 0.0
  %1838 = vmatpush1.msra.mxu0 0.0
  %1839 = vmatprep.subr.mxu0 0.0
  %1840 = vmatpush1.msra.mxu0 0.0
  %1841 = vmatprep.subr.mxu0 0.0
  %1842 = vmatpush1.msra.mxu0 0.0
  %1843 = vmatprep.subr.mxu0 0.0
  %1844 = vmatpush1.msra.mxu0 0.0
  %1845 = vmatprep.subr.mxu0 0.0
  %1846 = vmatpush1.msra.mxu0 0.0
  %1847 = vmatprep.subr.mxu0 0.0
  %1848 = vmatpush1.msra.mxu0 0.0
  %1849 = vmatprep.subr.mxu0 0.0
  %1850 = vmatpush1.msra.mxu0 0.0
  %1851 = vmatprep.subr.mxu0 0.0
  %1852 = vmatpush1.msra.mxu0 0.0
  %1853 = vmatprep.subr.mxu0 0.0
  %1854 = vmatpush1.msra.mxu0 %v1614
  %1855 = vmatprep.subr.mxu0 0.0
  %1856 = vmatpush1.msra.mxu0 %v1613
  %1857 = vmatprep.subr.mxu0 0.0
  %1858 = vmatpush1.msra.mxu0 %v1612
  %1859 = vmatprep.subr.mxu0 0.0
  %1860 = vmatpush1.msra.mxu0 %v1611
  %1861 = vmatprep.subr.mxu0 0.0
  %1862 = vmatpush2.msra.mxu0 0.0
  %1863 = vmatprep.subr.mxu0 0.0
  %1864 = vmatpush2.msra.mxu0 0.0
  %1865 = vmatprep.subr.mxu0 0.0
  %1866 = vmatpush2.msra.mxu0 0.0
  %1867 = vmatprep.subr.mxu0 0.0
  %1868 = vmatpush2.msra.mxu0 0.0
  %1869 = vmatprep.subr.mxu0 0.0
  %1870 = vmatpush2.msra.mxu0 0.0
  %1871 = vmatprep.subr.mxu0 0.0
  %1872 = vmatpush2.msra.mxu0 0.0
  %1873 = vmatprep.subr.mxu0 0.0
  %1874 = vmatpush2.msra.mxu0 0.0
  %1875 = vmatprep.subr.mxu0 0.0
  %1876 = vmatpush2.msra.mxu0 0.0
  %1877 = vmatprep.subr.mxu0 0.0
  %1878 = vmatpush2.msra.mxu0 0.0
  %1879 = vmatprep.subr.mxu0 0.0
  %1880 = vmatpush2.msra.mxu0 0.0
  %1881 = vmatprep.subr.mxu0 0.0
  %1882 = vmatpush2.msra.mxu0 0.0
  %1883 = vmatprep.subr.mxu0 0.0
  %1884 = vmatpush2.msra.mxu0 0.0
  %1885 = vmatprep.subr.mxu0 0.0
  %1886 = vmatpush2.msra.mxu0 0.0
  %1887 = vmatprep.subr.mxu0 0.0
  %1888 = vmatpush2.msra.mxu0 0.0
  %1889 = vmatprep.subr.mxu0 0.0
  %1890 = vmatpush2.msra.mxu0 0.0
  %1891 = vmatprep.subr.mxu0 0.0
  %1892 = vmatpush2.msra.mxu0 0.0
  %1893 = vmatprep.mubr.f32.mxu0 0.0
  %1894 = vmatmul.mubr.f32.gmra.mxu0 %v1827
  %v1895 = vpop.f32.mrf.mxu0
  %v1896 = vadd.f32 0.0, %v1895
  %v1897 = vpop.f32.mrf.mxu0
  %1898 = vdwg.mxu0
  %v1899 = vadd.f32 %v1823, %v1896
  %v1900 = vxor.u32 %v1899, 2147483648
  %v1901 = vmul.f32 %v1900, 1.442695
  %v1902 = vpow.pop %v1901
  %v1903 = vadd.f32 %v1902, 1.0
  %v1904 = vrcp.pop %v1903
  %v1905 = vmul.f32 1.0, %v1904
  %v1906 = vtanh.pop %v1899
  %v1907 = vmul.f32 %v1905, %v1816
  %1909 = vrot.lane.b32.xlu0 %v1906, 64
  %v1910 = vpop.permute.xlu0 %1909
  %v1912 = vmul.f32 %v1905, %v1910
  %1914 = vrot.lane.b32.xlu0 %v1912, 32
  %v1915 = vpop.permute.xlu0 %1914
  %v1917 = vadd.f32 %v1907, %v1915
  %v1918 = vtanh.pop %v1917
  %1920 = vrot.lane.b32.xlu0 %v1918, 64
  %v1921 = vpop.permute.xlu0 %1920
  %v1923 = vmul.f32 %v1905, %v1921
  %v1924 = vld [vmem:[%s739] sm:$0xff]
  %1926 = vrot.lane.b32.xlu0 %v1923, 32
  %v1927 = vpop.permute.xlu0 %1926
  %v1928 = vsel %vm208, %v1927, 0
  %1930 = vmatprep.subr.mxu0 0.0
  %1931 = vmatpush1.msra.mxu0 0.0
  %1932 = vmatprep.subr.mxu0 0.0
  %1933 = vmatpush1.msra.mxu0 0.0
  %1934 = vmatprep.subr.mxu0 0.0
  %1935 = vmatpush1.msra.mxu0 0.0
  %1936 = vmatprep.subr.mxu0 0.0
  %1937 = vmatpush1.msra.mxu0 0.0
  %1938 = vmatprep.subr.mxu0 0.0
  %1939 = vmatpush1.msra.mxu0 0.0
  %1940 = vmatprep.subr.mxu0 0.0
  %1941 = vmatpush1.msra.mxu0 0.0
  %1942 = vmatprep.subr.mxu0 0.0
  %1943 = vmatpush1.msra.mxu0 0.0
  %1944 = vmatprep.subr.mxu0 0.0
  %1945 = vmatpush1.msra.mxu0 0.0
  %1946 = vmatprep.subr.mxu0 0.0
  %1947 = vmatpush1.msra.mxu0 0.0
  %1948 = vmatprep.subr.mxu0 0.0
  %1949 = vmatpush1.msra.mxu0 0.0
  %1950 = vmatprep.subr.mxu0 0.0
  %1951 = vmatpush1.msra.mxu0 0.0
  %1952 = vmatprep.subr.mxu0 0.0
  %1953 = vmatpush1.msra.mxu0 0.0
  %1954 = vmatprep.subr.mxu0 0.0
  %1955 = vmatpush1.msra.mxu0 %v1614
  %1956 = vmatprep.subr.mxu0 0.0
  %1957 = vmatpush1.msra.mxu0 %v1613
  %1958 = vmatprep.subr.mxu0 0.0
  %1959 = vmatpush1.msra.mxu0 %v1612
  %1960 = vmatprep.subr.mxu0 0.0
  %1961 = vmatpush1.msra.mxu0 %v1611
  %1962 = vmatprep.subr.mxu0 0.0
  %1963 = vmatpush2.msra.mxu0 0.0
  %1964 = vmatprep.subr.mxu0 0.0
  %1965 = vmatpush2.msra.mxu0 0.0
  %1966 = vmatprep.subr.mxu0 0.0
  %1967 = vmatpush2.msra.mxu0 0.0
  %1968 = vmatprep.subr.mxu0 0.0
  %1969 = vmatpush2.msra.mxu0 0.0
  %1970 = vmatprep.subr.mxu0 0.0
  %1971 = vmatpush2.msra.mxu0 0.0
  %1972 = vmatprep.subr.mxu0 0.0
  %1973 = vmatpush2.msra.mxu0 0.0
  %1974 = vmatprep.subr.mxu0 0.0
  %1975 = vmatpush2.msra.mxu0 0.0
  %1976 = vmatprep.subr.mxu0 0.0
  %1977 = vmatpush2.msra.mxu0 0.0
  %1978 = vmatprep.subr.mxu0 0.0
  %1979 = vmatpush2.msra.mxu0 0.0
  %1980 = vmatprep.subr.mxu0 0.0
  %1981 = vmatpush2.msra.mxu0 0.0
  %1982 = vmatprep.subr.mxu0 0.0
  %1983 = vmatpush2.msra.mxu0 0.0
  %1984 = vmatprep.subr.mxu0 0.0
  %1985 = vmatpush2.msra.mxu0 0.0
  %1986 = vmatprep.subr.mxu0 0.0
  %1987 = vmatpush2.msra.mxu0 0.0
  %1988 = vmatprep.subr.mxu0 0.0
  %1989 = vmatpush2.msra.mxu0 0.0
  %1990 = vmatprep.subr.mxu0 0.0
  %1991 = vmatpush2.msra.mxu0 0.0
  %1992 = vmatprep.subr.mxu0 0.0
  %1993 = vmatpush2.msra.mxu0 0.0
  %1994 = vmatprep.mubr.f32.mxu0 0.0
  %1995 = vmatmul.mubr.f32.gmra.mxu0 %v1928
  %v1996 = vpop.f32.mrf.mxu0
  %v1997 = vadd.f32 0.0, %v1996
  %v1998 = vpop.f32.mrf.mxu0
  %1999 = vdwg.mxu0
  %v2000 = vadd.f32 %v1924, %v1997
  %v2001 = vxor.u32 %v2000, 2147483648
  %v2002 = vmul.f32 %v2001, 1.442695
  %v2003 = vpow.pop %v2002
  %v2004 = vadd.f32 %v2003, 1.0
  %v2005 = vrcp.pop %v2004
  %v2006 = vmul.f32 1.0, %v2005
  %v2007 = vtanh.pop %v2000
  %v2008 = vmul.f32 %v2006, %v1917
  %2010 = vrot.lane.b32.xlu0 %v2007, 64
  %v2011 = vpop.permute.xlu0 %2010
  %v2013 = vmul.f32 %v2006, %v2011
  %2015 = vrot.lane.b32.xlu0 %v2013, 32
  %v2016 = vpop.permute.xlu0 %2015
  %v2018 = vadd.f32 %v2008, %v2016
  %v2019 = vtanh.pop %v2018
  %2021 = vrot.lane.b32.xlu0 %v2019, 64
  %v2022 = vpop.permute.xlu0 %2021
  %v2024 = vmul.f32 %v2006, %v2022
  %v2025 = vld [vmem:[%s912] sm:$0xff]
  %2027 = vrot.lane.b32.xlu0 %v2024, 32
  %v2028 = vpop.permute.xlu0 %2027
  %v2029 = vsel %vm208, %v2028, 0
  %2031 = vmatprep.subr.mxu0 0.0
  %2032 = vmatpush1.msra.mxu0 0.0
  %2033 = vmatprep.subr.mxu0 0.0
  %2034 = vmatpush1.msra.mxu0 0.0
  %2035 = vmatprep.subr.mxu0 0.0
  %2036 = vmatpush1.msra.mxu0 0.0
  %2037 = vmatprep.subr.mxu0 0.0
  %2038 = vmatpush1.msra.mxu0 0.0
  %2039 = vmatprep.subr.mxu0 0.0
  %2040 = vmatpush1.msra.mxu0 0.0
  %2041 = vmatprep.subr.mxu0 0.0
  %2042 = vmatpush1.msra.mxu0 0.0
  %2043 = vmatprep.subr.mxu0 0.0
  %2044 = vmatpush1.msra.mxu0 0.0
  %2045 = vmatprep.subr.mxu0 0.0
  %2046 = vmatpush1.msra.mxu0 0.0
  %2047 = vmatprep.subr.mxu0 0.0
  %2048 = vmatpush1.msra.mxu0 0.0
  %2049 = vmatprep.subr.mxu0 0.0
  %2050 = vmatpush1.msra.mxu0 0.0
  %2051 = vmatprep.subr.mxu0 0.0
  %2052 = vmatpush1.msra.mxu0 0.0
  %2053 = vmatprep.subr.mxu0 0.0
  %2054 = vmatpush1.msra.mxu0 0.0
  %2055 = vmatprep.subr.mxu0 0.0
  %2056 = vmatpush1.msra.mxu0 %v1614
  %2057 = vmatprep.subr.mxu0 0.0
  %2058 = vmatpush1.msra.mxu0 %v1613
  %2059 = vmatprep.subr.mxu0 0.0
  %2060 = vmatpush1.msra.mxu0 %v1612
  %2061 = vmatprep.subr.mxu0 0.0
  %2062 = vmatpush1.msra.mxu0 %v1611
  %2063 = vmatprep.subr.mxu0 0.0
  %2064 = vmatpush2.msra.mxu0 0.0
  %2065 = vmatprep.subr.mxu0 0.0
  %2066 = vmatpush2.msra.mxu0 0.0
  %2067 = vmatprep.subr.mxu0 0.0
  %2068 = vmatpush2.msra.mxu0 0.0
  %2069 = vmatprep.subr.mxu0 0.0
  %2070 = vmatpush2.msra.mxu0 0.0
  %2071 = vmatprep.subr.mxu0 0.0
  %2072 = vmatpush2.msra.mxu0 0.0
  %2073 = vmatprep.subr.mxu0 0.0
  %2074 = vmatpush2.msra.mxu0 0.0
  %2075 = vmatprep.subr.mxu0 0.0
  %2076 = vmatpush2.msra.mxu0 0.0
  %2077 = vmatprep.subr.mxu0 0.0
  %2078 = vmatpush2.msra.mxu0 0.0
  %2079 = vmatprep.subr.mxu0 0.0
  %2080 = vmatpush2.msra.mxu0 0.0
  %2081 = vmatprep.subr.mxu0 0.0
  %2082 = vmatpush2.msra.mxu0 0.0
  %2083 = vmatprep.subr.mxu0 0.0
  %2084 = vmatpush2.msra.mxu0 0.0
  %2085 = vmatprep.subr.mxu0 0.0
  %2086 = vmatpush2.msra.mxu0 0.0
  %2087 = vmatprep.subr.mxu0 0.0
  %2088 = vmatpush2.msra.mxu0 0.0
  %2089 = vmatprep.subr.mxu0 0.0
  %2090 = vmatpush2.msra.mxu0 0.0
  %2091 = vmatprep.subr.mxu0 0.0
  %2092 = vmatpush2.msra.mxu0 0.0
  %2093 = vmatprep.subr.mxu0 0.0
  %2094 = vmatpush2.msra.mxu0 0.0
  %2095 = vmatprep.mubr.f32.mxu0 0.0
  %2096 = vmatmul.mubr.f32.gmra.mxu0 %v2029
  %v2097 = vpop.f32.mrf.mxu0
  %v2098 = vadd.f32 0.0, %v2097
  %v2099 = vpop.f32.mrf.mxu0
  %2100 = vdwg.mxu0
  %v2101 = vadd.f32 %v2025, %v2098
  %v2102 = vxor.u32 %v2101, 2147483648
  %v2103 = vmul.f32 %v2102, 1.442695
  %v2104 = vpow.pop %v2103
  %v2105 = vadd.f32 %v2104, 1.0
  %v2106 = vrcp.pop %v2105
  %v2107 = vmul.f32 1.0, %v2106
  %v2108 = vtanh.pop %v2101
  %v2109 = vmul.f32 %v2107, %v2018
  %2111 = vrot.lane.b32.xlu0 %v2108, 64
  %v2112 = vpop.permute.xlu0 %2111
  %v2114 = vmul.f32 %v2107, %v2112
  %2116 = vrot.lane.b32.xlu0 %v2114, 32
  %v2117 = vpop.permute.xlu0 %2116
  %v2119 = vadd.f32 %v2109, %v2117
  %v2120 = vtanh.pop %v2119
  %2122 = vrot.lane.b32.xlu0 %v2120, 64
  %v2123 = vpop.permute.xlu0 %2122
  %v2125 = vmul.f32 %v2107, %v2123
  %v2126 = vld [vmem:[%s1085] sm:$0xff]
  %2128 = vrot.lane.b32.xlu0 %v2125, 32
  %v2129 = vpop.permute.xlu0 %2128
  %v2130 = vsel %vm208, %v2129, 0
  %2132 = vmatprep.subr.mxu0 0.0
  %2133 = vmatpush1.msra.mxu0 0.0
  %2134 = vmatprep.subr.mxu0 0.0
  %2135 = vmatpush1.msra.mxu0 0.0
  %2136 = vmatprep.subr.mxu0 0.0
  %2137 = vmatpush1.msra.mxu0 0.0
  %2138 = vmatprep.subr.mxu0 0.0
  %2139 = vmatpush1.msra.mxu0 0.0
  %2140 = vmatprep.subr.mxu0 0.0
  %2141 = vmatpush1.msra.mxu0 0.0
  %2142 = vmatprep.subr.mxu0 0.0
  %2143 = vmatpush1.msra.mxu0 0.0
  %2144 = vmatprep.subr.mxu0 0.0
  %2145 = vmatpush1.msra.mxu0 0.0
  %2146 = vmatprep.subr.mxu0 0.0
  %2147 = vmatpush1.msra.mxu0 0.0
  %2148 = vmatprep.subr.mxu0 0.0
  %2149 = vmatpush1.msra.mxu0 0.0
  %2150 = vmatprep.subr.mxu0 0.0
  %2151 = vmatpush1.msra.mxu0 0.0
  %2152 = vmatprep.subr.mxu0 0.0
  %2153 = vmatpush1.msra.mxu0 0.0
  %2154 = vmatprep.subr.mxu0 0.0
  %2155 = vmatpush1.msra.mxu0 0.0
  %2156 = vmatprep.subr.mxu0 0.0
  %2157 = vmatpush1.msra.mxu0 %v1614
  %2158 = vmatprep.subr.mxu0 0.0
  %2159 = vmatpush1.msra.mxu0 %v1613
  %2160 = vmatprep.subr.mxu0 0.0
  %2161 = vmatpush1.msra.mxu0 %v1612
  %2162 = vmatprep.subr.mxu0 0.0
  %2163 = vmatpush1.msra.mxu0 %v1611
  %2164 = vmatprep.subr.mxu0 0.0
  %2165 = vmatpush2.msra.mxu0 0.0
  %2166 = vmatprep.subr.mxu0 0.0
  %2167 = vmatpush2.msra.mxu0 0.0
  %2168 = vmatprep.subr.mxu0 0.0
  %2169 = vmatpush2.msra.mxu0 0.0
  %2170 = vmatprep.subr.mxu0 0.0
  %2171 = vmatpush2.msra.mxu0 0.0
  %2172 = vmatprep.subr.mxu0 0.0
  %2173 = vmatpush2.msra.mxu0 0.0
  %2174 = vmatprep.subr.mxu0 0.0
  %2175 = vmatpush2.msra.mxu0 0.0
  %2176 = vmatprep.subr.mxu0 0.0
  %2177 = vmatpush2.msra.mxu0 0.0
  %2178 = vmatprep.subr.mxu0 0.0
  %2179 = vmatpush2.msra.mxu0 0.0
  %2180 = vmatprep.subr.mxu0 0.0
  %2181 = vmatpush2.msra.mxu0 0.0
  %2182 = vmatprep.subr.mxu0 0.0
  %2183 = vmatpush2.msra.mxu0 0.0
  %2184 = vmatprep.subr.mxu0 0.0
  %2185 = vmatpush2.msra.mxu0 0.0
  %2186 = vmatprep.subr.mxu0 0.0
  %2187 = vmatpush2.msra.mxu0 0.0
  %2188 = vmatprep.subr.mxu0 0.0
  %2189 = vmatpush2.msra.mxu0 0.0
  %2190 = vmatprep.subr.mxu0 0.0
  %2191 = vmatpush2.msra.mxu0 0.0
  %2192 = vmatprep.subr.mxu0 0.0
  %2193 = vmatpush2.msra.mxu0 0.0
  %2194 = vmatprep.subr.mxu0 0.0
  %2195 = vmatpush2.msra.mxu0 0.0
  %2196 = vmatprep.mubr.f32.mxu0 0.0
  %2197 = vmatmul.mubr.f32.gmra.mxu0 %v2130
  %v2198 = vpop.f32.mrf.mxu0
  %v2199 = vadd.f32 0.0, %v2198
  %v2200 = vpop.f32.mrf.mxu0
  %2201 = vdwg.mxu0
  %v2202 = vadd.f32 %v2126, %v2199
  %v2203 = vxor.u32 %v2202, 2147483648
  %v2204 = vmul.f32 %v2203, 1.442695
  %v2205 = vpow.pop %v2204
  %v2206 = vadd.f32 %v2205, 1.0
  %v2207 = vrcp.pop %v2206
  %v2208 = vmul.f32 1.0, %v2207
  %v2209 = vtanh.pop %v2202
  %v2210 = vmul.f32 %v2208, %v2119
  %2212 = vrot.lane.b32.xlu0 %v2209, 64
  %v2213 = vpop.permute.xlu0 %2212
  %v2215 = vmul.f32 %v2208, %v2213
  %2217 = vrot.lane.b32.xlu0 %v2215, 32
  %v2218 = vpop.permute.xlu0 %2217
  %v2220 = vadd.f32 %v2210, %v2218
  %v2221 = vtanh.pop %v2220
  %2223 = vrot.lane.b32.xlu0 %v2221, 64
  %v2224 = vpop.permute.xlu0 %2223
  %v2226 = vmul.f32 %v2208, %v2224
  %v2227 = vld [vmem:[%s1258] sm:$0xff]
  %2229 = vrot.lane.b32.xlu0 %v2226, 32
  %v2230 = vpop.permute.xlu0 %2229
  %v2231 = vsel %vm208, %v2230, 0
  %2233 = vmatprep.subr.mxu0 0.0
  %2234 = vmatpush1.msra.mxu0 0.0
  %2235 = vmatprep.subr.mxu0 0.0
  %2236 = vmatpush1.msra.mxu0 0.0
  %2237 = vmatprep.subr.mxu0 0.0
  %2238 = vmatpush1.msra.mxu0 0.0
  %2239 = vmatprep.subr.mxu0 0.0
  %2240 = vmatpush1.msra.mxu0 0.0
  %2241 = vmatprep.subr.mxu0 0.0
  %2242 = vmatpush1.msra.mxu0 0.0
  %2243 = vmatprep.subr.mxu0 0.0
  %2244 = vmatpush1.msra.mxu0 0.0
  %2245 = vmatprep.subr.mxu0 0.0
  %2246 = vmatpush1.msra.mxu0 0.0
  %2247 = vmatprep.subr.mxu0 0.0
  %2248 = vmatpush1.msra.mxu0 0.0
  %2249 = vmatprep.subr.mxu0 0.0
  %2250 = vmatpush1.msra.mxu0 0.0
  %2251 = vmatprep.subr.mxu0 0.0
  %2252 = vmatpush1.msra.mxu0 0.0
  %2253 = vmatprep.subr.mxu0 0.0
  %2254 = vmatpush1.msra.mxu0 0.0
  %2255 = vmatprep.subr.mxu0 0.0
  %2256 = vmatpush1.msra.mxu0 0.0
  %2257 = vmatprep.subr.mxu0 0.0
  %2258 = vmatpush1.msra.mxu0 %v1614
  %2259 = vmatprep.subr.mxu0 0.0
  %2260 = vmatpush1.msra.mxu0 %v1613
  %2261 = vmatprep.subr.mxu0 0.0
  %2262 = vmatpush1.msra.mxu0 %v1612
  %2263 = vmatprep.subr.mxu0 0.0
  %2264 = vmatpush1.msra.mxu0 %v1611
  %2265 = vmatprep.subr.mxu0 0.0
  %2266 = vmatpush2.msra.mxu0 0.0
  %2267 = vmatprep.subr.mxu0 0.0
  %2268 = vmatpush2.msra.mxu0 0.0
  %2269 = vmatprep.subr.mxu0 0.0
  %2270 = vmatpush2.msra.mxu0 0.0
  %2271 = vmatprep.subr.mxu0 0.0
  %2272 = vmatpush2.msra.mxu0 0.0
  %2273 = vmatprep.subr.mxu0 0.0
  %2274 = vmatpush2.msra.mxu0 0.0
  %2275 = vmatprep.subr.mxu0 0.0
  %2276 = vmatpush2.msra.mxu0 0.0
  %2277 = vmatprep.subr.mxu0 0.0
  %2278 = vmatpush2.msra.mxu0 0.0
  %2279 = vmatprep.subr.mxu0 0.0
  %2280 = vmatpush2.msra.mxu0 0.0
  %2281 = vmatprep.subr.mxu0 0.0
  %2282 = vmatpush2.msra.mxu0 0.0
  %2283 = vmatprep.subr.mxu0 0.0
  %2284 = vmatpush2.msra.mxu0 0.0
  %2285 = vmatprep.subr.mxu0 0.0
  %2286 = vmatpush2.msra.mxu0 0.0
  %2287 = vmatprep.subr.mxu0 0.0
  %2288 = vmatpush2.msra.mxu0 0.0
  %2289 = vmatprep.subr.mxu0 0.0
  %2290 = vmatpush2.msra.mxu0 0.0
  %2291 = vmatprep.subr.mxu0 0.0
  %2292 = vmatpush2.msra.mxu0 0.0
  %2293 = vmatprep.subr.mxu0 0.0
  %2294 = vmatpush2.msra.mxu0 0.0
  %2295 = vmatprep.subr.mxu0 0.0
  %2296 = vmatpush2.msra.mxu0 0.0
  %2297 = vmatprep.mubr.f32.mxu0 0.0
  %2298 = vmatmul.mubr.f32.gmra.mxu0 %v2231
  %v2299 = vpop.f32.mrf.mxu0
  %v2300 = vadd.f32 0.0, %v2299
  %v2301 = vpop.f32.mrf.mxu0
  %2302 = vdwg.mxu0
  %v2303 = vadd.f32 %v2227, %v2300
  %v2304 = vxor.u32 %v2303, 2147483648
  %v2305 = vmul.f32 %v2304, 1.442695
  %v2306 = vpow.pop %v2305
  %v2307 = vadd.f32 %v2306, 1.0
  %v2308 = vrcp.pop %v2307
  %v2309 = vmul.f32 1.0, %v2308
  %v2310 = vtanh.pop %v2303
  %v2311 = vmul.f32 %v2309, %v2220
  %2313 = vrot.lane.b32.xlu0 %v2310, 64
  %v2314 = vpop.permute.xlu0 %2313
  %v2316 = vmul.f32 %v2309, %v2314
  %2318 = vrot.lane.b32.xlu0 %v2316, 32
  %v2319 = vpop.permute.xlu0 %2318
  %v2321 = vadd.f32 %v2311, %v2319
  %v2322 = vtanh.pop %v2321
  %2324 = vrot.lane.b32.xlu0 %v2322, 64
  %v2325 = vpop.permute.xlu0 %2324
  %v2327 = vmul.f32 %v2309, %v2325
  %v2328 = vld [vmem:[%s1431] sm:$0xff]
  %2330 = vrot.lane.b32.xlu0 %v2327, 32
  %v2331 = vpop.permute.xlu0 %2330
  %v2332 = vsel %vm208, %v2331, 0
  %2334 = vmatprep.subr.mxu0 0.0
  %2335 = vmatpush1.msra.mxu0 0.0
  %2336 = vmatprep.subr.mxu0 0.0
  %2337 = vmatpush1.msra.mxu0 0.0
  %2338 = vmatprep.subr.mxu0 0.0
  %2339 = vmatpush1.msra.mxu0 0.0
  %2340 = vmatprep.subr.mxu0 0.0
  %2341 = vmatpush1.msra.mxu0 0.0
  %2342 = vmatprep.subr.mxu0 0.0
  %2343 = vmatpush1.msra.mxu0 0.0
  %2344 = vmatprep.subr.mxu0 0.0
  %2345 = vmatpush1.msra.mxu0 0.0
  %2346 = vmatprep.subr.mxu0 0.0
  %2347 = vmatpush1.msra.mxu0 0.0
  %2348 = vmatprep.subr.mxu0 0.0
  %2349 = vmatpush1.msra.mxu0 0.0
  %2350 = vmatprep.subr.mxu0 0.0
  %2351 = vmatpush1.msra.mxu0 0.0
  %2352 = vmatprep.subr.mxu0 0.0
  %2353 = vmatpush1.msra.mxu0 0.0
  %2354 = vmatprep.subr.mxu0 0.0
  %2355 = vmatpush1.msra.mxu0 0.0
  %2356 = vmatprep.subr.mxu0 0.0
  %2357 = vmatpush1.msra.mxu0 0.0
  %2358 = vmatprep.subr.mxu0 0.0
  %2359 = vmatpush1.msra.mxu0 %v1614
  %2360 = vmatprep.subr.mxu0 0.0
  %2361 = vmatpush1.msra.mxu0 %v1613
  %2362 = vmatprep.subr.mxu0 0.0
  %2363 = vmatpush1.msra.mxu0 %v1612
  %2364 = vmatprep.subr.mxu0 0.0
  %2365 = vmatpush1.msra.mxu0 %v1611
  %2366 = vmatprep.subr.mxu0 0.0
  %2367 = vmatpush2.msra.mxu0 0.0
  %2368 = vmatprep.subr.mxu0 0.0
  %2369 = vmatpush2.msra.mxu0 0.0
  %2370 = vmatprep.subr.mxu0 0.0
  %2371 = vmatpush2.msra.mxu0 0.0
  %2372 = vmatprep.subr.mxu0 0.0
  %2373 = vmatpush2.msra.mxu0 0.0
  %2374 = vmatprep.subr.mxu0 0.0
  %2375 = vmatpush2.msra.mxu0 0.0
  %2376 = vmatprep.subr.mxu0 0.0
  %2377 = vmatpush2.msra.mxu0 0.0
  %2378 = vmatprep.subr.mxu0 0.0
  %2379 = vmatpush2.msra.mxu0 0.0
  %2380 = vmatprep.subr.mxu0 0.0
  %2381 = vmatpush2.msra.mxu0 0.0
  %2382 = vmatprep.subr.mxu0 0.0
  %2383 = vmatpush2.msra.mxu0 0.0
  %2384 = vmatprep.subr.mxu0 0.0
  %2385 = vmatpush2.msra.mxu0 0.0
  %2386 = vmatprep.subr.mxu0 0.0
  %2387 = vmatpush2.msra.mxu0 0.0
  %2388 = vmatprep.subr.mxu0 0.0
  %2389 = vmatpush2.msra.mxu0 0.0
  %2390 = vmatprep.subr.mxu0 0.0
  %2391 = vmatpush2.msra.mxu0 0.0
  %2392 = vmatprep.subr.mxu0 0.0
  %2393 = vmatpush2.msra.mxu0 0.0
  %2394 = vmatprep.subr.mxu0 0.0
  %2395 = vmatpush2.msra.mxu0 0.0
  %2396 = vmatprep.subr.mxu0 0.0
  %2397 = vmatpush2.msra.mxu0 0.0
  %2398 = vmatprep.mubr.f32.mxu0 0.0
  %2399 = vmatmul.mubr.f32.gmra.mxu0 %v2332
  %v2400 = vpop.f32.mrf.mxu0
  %v2401 = vadd.f32 0.0, %v2400
  %v2402 = vpop.f32.mrf.mxu0
  %2403 = vdwg.mxu0
  %v2404 = vadd.f32 %v2328, %v2401
  %v2405 = vxor.u32 %v2404, 2147483648
  %v2406 = vmul.f32 %v2405, 1.442695
  %v2407 = vpow.pop %v2406
  %v2408 = vadd.f32 %v2407, 1.0
  %v2409 = vrcp.pop %v2408
  %v2410 = vmul.f32 1.0, %v2409
  %v2411 = vtanh.pop %v2404
  %v2412 = vmul.f32 %v2410, %v2321
  %2414 = vrot.lane.b32.xlu0 %v2411, 64
  %v2415 = vpop.permute.xlu0 %2414
  %v2417 = vmul.f32 %v2410, %v2415
  %2419 = vrot.lane.b32.xlu0 %v2417, 32
  %v2420 = vpop.permute.xlu0 %2419
  %v2422 = vadd.f32 %v2412, %v2420
  %v2423 = vtanh.pop %v2422
  %2425 = vrot.lane.b32.xlu0 %v2423, 64
  %v2426 = vpop.permute.xlu0 %2425
  %v2428 = vmul.f32 %v2410, %v2426
  %2430 = vrot.lane.b32.xlu0 %v2428, 32
  %v2431 = vpop.permute.xlu0 %2430
  %s2433 = scalar_lea.vmem %s12, 8
  %2434 = vst.msk [vmem:[%s2433] sm:$0xff] %vm208, %v2431
  %2436 = vrot.lane.b32.xlu0 %v2422, 96
  %v2437 = vpop.permute.xlu0 %2436
  %s2439 = scalar_lea.vmem %s13, 8
  %2440 = vst.msk [vmem:[%s2439] sm:$0xff] %vm208, %v2437
  %v2441 = vmax.f32 %v2428, 0.0
  %v2442 = vld [vmem:[%s9] sm:$0xff]
  %v2443 = vld [vmem:[%s9 + $0x8] sm:$0xff]
  %v2444 = vld [vmem:[%s9 + $0x10] sm:$0xff]
  %v2445 = vld [vmem:[%s9 + $0x18] sm:$0xff]
  %v2446 = vld [vmem:[%s10] sm:$0x1]
  %v2448 = vlaneseq
  %v2449 = vshrl.u32 %v2448, 7
  %v2450 = vsub.s32 0, %v2449
  %v2451 = vrot.slane %v2446, %v2450
  %2454 = vrot.lane.b32.xlu0 %v2441, 32
  %v2455 = vpop.permute.xlu0 %2454
  %v2456 = vsel %vm208, %v2455, 0
  %2458 = vmatprep.subr.mxu0 0.0
  %2459 = vmatpush1.msra.mxu0 0.0
  %2460 = vmatprep.subr.mxu0 0.0
  %2461 = vmatpush1.msra.mxu0 0.0
  %2462 = vmatprep.subr.mxu0 0.0
  %2463 = vmatpush1.msra.mxu0 0.0
  %2464 = vmatprep.subr.mxu0 0.0
  %2465 = vmatpush1.msra.mxu0 0.0
  %2466 = vmatprep.subr.mxu0 0.0
  %2467 = vmatpush1.msra.mxu0 0.0
  %2468 = vmatprep.subr.mxu0 0.0
  %2469 = vmatpush1.msra.mxu0 0.0
  %2470 = vmatprep.subr.mxu0 0.0
  %2471 = vmatpush1.msra.mxu0 0.0
  %2472 = vmatprep.subr.mxu0 0.0
  %2473 = vmatpush1.msra.mxu0 0.0
  %2474 = vmatprep.subr.mxu0 0.0
  %2475 = vmatpush1.msra.mxu0 0.0
  %2476 = vmatprep.subr.mxu0 0.0
  %2477 = vmatpush1.msra.mxu0 0.0
  %2478 = vmatprep.subr.mxu0 0.0
  %2479 = vmatpush1.msra.mxu0 0.0
  %2480 = vmatprep.subr.mxu0 0.0
  %2481 = vmatpush1.msra.mxu0 0.0
  %2482 = vmatprep.subr.mxu0 0.0
  %2483 = vmatpush1.msra.mxu0 %v2445
  %2484 = vmatprep.subr.mxu0 0.0
  %2485 = vmatpush1.msra.mxu0 %v2444
  %2486 = vmatprep.subr.mxu0 0.0
  %2487 = vmatpush1.msra.mxu0 %v2443
  %2488 = vmatprep.subr.mxu0 0.0
  %2489 = vmatpush1.msra.mxu0 %v2442
  %2490 = vmatprep.subr.mxu0 0.0
  %2491 = vmatpush2.msra.mxu0 0.0
  %2492 = vmatprep.subr.mxu0 0.0
  %2493 = vmatpush2.msra.mxu0 0.0
  %2494 = vmatprep.subr.mxu0 0.0
  %2495 = vmatpush2.msra.mxu0 0.0
  %2496 = vmatprep.subr.mxu0 0.0
  %2497 = vmatpush2.msra.mxu0 0.0
  %2498 = vmatprep.subr.mxu0 0.0
  %2499 = vmatpush2.msra.mxu0 0.0
  %2500 = vmatprep.subr.mxu0 0.0
  %2501 = vmatpush2.msra.mxu0 0.0
  %2502 = vmatprep.subr.mxu0 0.0
  %2503 = vmatpush2.msra.mxu0 0.0
  %2504 = vmatprep.subr.mxu0 0.0
  %2505 = vmatpush2.msra.mxu0 0.0
  %2506 = vmatprep.subr.mxu0 0.0
  %2507 = vmatpush2.msra.mxu0 0.0
  %2508 = vmatprep.subr.mxu0 0.0
  %2509 = vmatpush2.msra.mxu0 0.0
  %2510 = vmatprep.subr.mxu0 0.0
  %2511 = vmatpush2.msra.mxu0 0.0
  %2512 = vmatprep.subr.mxu0 0.0
  %2513 = vmatpush2.msra.mxu0 0.0
  %2514 = vmatprep.subr.mxu0 0.0
  %2515 = vmatpush2.msra.mxu0 0.0
  %2516 = vmatprep.subr.mxu0 0.0
  %2517 = vmatpush2.msra.mxu0 0.0
  %2518 = vmatprep.subr.mxu0 0.0
  %2519 = vmatpush2.msra.mxu0 0.0
  %2520 = vmatprep.subr.mxu0 0.0
  %2521 = vmatpush2.msra.mxu0 0.0
  %2522 = vmatprep.mubr.f32.mxu0 0.0
  %2523 = vmatmul.mubr.f32.gmra.mxu0 %v2456
  %v2524 = vpop.f32.mrf.mxu0
  %v2525 = vadd.f32 %v2451, %v2524
  %v2526 = vpop.f32.mrf.mxu0
  %2527 = vdwg.mxu0
  %2528 = vst [vmem:[%s11] sm:$0xff] %v2525
  // Predicated region
  $region46: #{lstm_net_forward.1} parent=0 // pred_check
    _
  $region47: #{lstm_net_forward.1} parent=0 // pred_check_branch
    %2530 = sbr.rel (0) target = $region49
  $region48: #{lstm_net_forward.1} parent=0 // pred_region
    _
  $region49: #{lstm_net_forward.1} parent=0 // pred_fallthru
    _
  // Predicated region
  $region50: #{lstm_net_forward.1} parent=0 // pred_check
    _
  $region51: #{lstm_net_forward.1} parent=0 // pred_check_branch
    %2532 = sbr.rel (0) target = $region53
  $region52: #{lstm_net_forward.1} parent=0 // pred_region
    _
  $region53: #{lstm_net_forward.1} parent=0 // pred_fallthru
    _
  // Predicated region
  $region54: #{lstm_net_forward.1} parent=0 // pred_check
    _
  $region55: #{lstm_net_forward.1} parent=0 // pred_check_branch
    %2534 = sbr.rel (0) target = $region57
  $region56: #{lstm_net_forward.1} parent=0 // pred_region
    _
  $region57: #{lstm_net_forward.1} parent=0 // pred_fallthru
    _
  // Predicated region
  $region58: #{lstm_net_forward.1} parent=0 // pred_check
    _
  $region59: #{lstm_net_forward.1} parent=0 // pred_check_branch
    %2536 = sbr.rel (0) target = $region61
  $region60: #{lstm_net_forward.1} parent=0 // pred_region
    _
  $region61: #{lstm_net_forward.1} parent=0 // pred_fallthru
    _
  // Predicated region
  $region62: #{lstm_net_forward.1} parent=0 // pred_check
    _
  $region63: #{lstm_net_forward.1} parent=0 // pred_check_branch
    %2538 = sbr.rel (0) target = $region65
  $region64: #{lstm_net_forward.1} parent=0 // pred_region
    _
  $region65: #{lstm_net_forward.1} parent=0 // pred_fallthru
    _
  // Predicated region
  $region66: #{lstm_net_forward.1} parent=0 // pred_check
    _
  $region67: #{lstm_net_forward.1} parent=0 // pred_check_branch
    %2540 = sbr.rel (0) target = $region69
  $region68: #{lstm_net_forward.1} parent=0 // pred_region
    _
  $region69: #{lstm_net_forward.1} parent=0 // pred_fallthru
    _

</llo_original>
